<compile_context>
chip_gen: v5e
topology: v5e:2x2
jax: 0.10.0
libtpu: 0.0.40
codegen_flags: <defaults>
</compile_context>

<pallas_src>
import functools
import math

import numpy as np
import jax
import jax.numpy as jnp
from jax.experimental import pallas as pl
from jax.experimental.pallas import tpu as pltpu


# ---------------------------------------------------------------- config ----
class Config:
    pad_id = 0
    hidden_dim = 32          # H
    pff_dim = 64             # P
    n_heads = 4
    n_layers = 4             # -> n_layers // 2 = 2 encoder cells
    dropout_ratio = 0.0      # inference: dropout == identity
    vocab_size = 50


CFG = Config()
LN_EPS = 1e-5
NEG_INF = -1e9
MAX_PAD = 4                  # largest conv half-width (separable conv k=9)


# -------------------------------------------------------------- shared -------
def _layer_norm(v, g, b):
    mu = jnp.mean(v, axis=-1, keepdims=True)
    var = jnp.mean(jnp.square(v - mu), axis=-1, keepdims=True)
    return (v - mu) * jax.lax.rsqrt(var + LN_EPS) * g + b


# ------------------------------------------------ plain-JAX reference --------
# Faithful per-batch-element math (concatenate-padding convs, per-head
# attention with exact division) used to validate the restructured kernel.
def _conv1d_same_ref(v, w_kio, b, K, P):
    S, Cin = v.shape
    zp = jnp.zeros((P, Cin), jnp.float32)
    vp = jnp.concatenate([zp, v, zp], axis=0)
    out = jnp.zeros((S, w_kio.shape[-1]), jnp.float32) + b
    for k in range(K):
        out = out + jnp.dot(vp[k:k + S, :], w_kio[k],
                            preferred_element_type=jnp.float32)
    return out


def _depthwise_conv1d_same_ref(v, w_k1c, b, K, P):
    S, C = v.shape
    zp = jnp.zeros((P, C), jnp.float32)
    vp = jnp.concatenate([zp, v, zp], axis=0)
    out = jnp.zeros((S, C), jnp.float32) + b
    for k in range(K):
        out = out + vp[k:k + S, :] * w_k1c[k]
    return out


def _cell_compute_ref(x, key_mask,
                      ln0_g, ln0_b, ln1_g, ln1_b, ln2_g, ln2_b, ln3_g, ln3_b,
                      glu_w, glu_b, left_w, left_b, right_w, right_b,
                      mid_g, mid_b, sepd_w, sepd_b, sepp_w, sepp_b,
                      in_w, in_b, out_w, out_b,
                      pff_w1, pff_b1, pff_w2, pff_b2):
    H, P = CFG.hidden_dim, CFG.pff_dim
    NH = CFG.n_heads
    HD = H // NH
    S = x.shape[0]
    pad_val = float(CFG.pad_id)

    h0 = _layer_norm(x, ln0_g, ln0_b)
    glu = _conv1d_same_ref(h0, glu_w, glu_b, 3, 1)
    b01 = glu[:, :H] * jax.nn.sigmoid(glu[:, H:])

    h1 = _layer_norm(b01, ln1_g, ln1_b)
    left = jax.nn.relu(jnp.dot(h1, left_w,
                               preferred_element_type=jnp.float32) + left_b)
    right = jax.nn.relu(_conv1d_same_ref(h1, right_w, right_b, 3, 1))
    right = jnp.concatenate(
        [right, jnp.full((S, P - H // 2), pad_val, jnp.float32)], axis=-1)
    b02 = left + right

    h2 = _layer_norm(b02, mid_g, mid_b)
    dw = _depthwise_conv1d_same_ref(h2, sepd_w, sepd_b, 9, 4)
    pw = jnp.dot(dw, sepp_w, preferred_element_type=jnp.float32) + sepp_b
    b03 = jnp.concatenate(
        [pw, jnp.full((S, H - H // 2), pad_val, jnp.float32)], axis=-1) + b01

    h3 = _layer_norm(b03, ln2_g, ln2_b)
    qkv = jnp.dot(h3, in_w, preferred_element_type=jnp.float32) + in_b
    q, k, v = qkv[:, :H], qkv[:, H:2 * H], qkv[:, 2 * H:]
    scale = 1.0 / math.sqrt(HD)
    attn = jnp.zeros((S, H), jnp.float32)
    for h in range(NH):
        sl = slice(h * HD, (h + 1) * HD)
        scores = jax.lax.dot_general(
            q[:, sl] * scale, k[:, sl], (((1,), (1,)), ((), ())),
            preferred_element_type=jnp.float32)
        scores = scores + key_mask * NEG_INF
        scores = scores - jnp.max(scores, axis=-1, keepdims=True)
        p = jnp.exp(scores)
        p = p / jnp.sum(p, axis=-1, keepdims=True)
        ctx = jnp.dot(p, v[:, sl], preferred_element_type=jnp.float32)
        attn = attn + jnp.dot(ctx, out_w[sl, :],
                              preferred_element_type=jnp.float32)
    # Matches the PyTorch module: the attention residual is the *normed*
    # tensor (B04_out = LN2(B03_out); B04_out += attention_out).
    b04 = h3 + attn + out_b

    h4 = _layer_norm(b04, ln3_g, ln3_b)
    f1 = jnp.dot(h4, pff_w1, preferred_element_type=jnp.float32) + pff_b1
    f1 = f1 * jax.nn.sigmoid(f1)
    f2 = jnp.dot(f1, pff_w2, preferred_element_type=jnp.float32) + pff_b2
    return f2 + b04


# ------------------------------------------------ kernel-side building blocks
def _shifted(v, d, mode, smask_ref, smat_ref, BS):
    """src[r] = v[r + d] within each length-S sequence, 0 across boundaries."""
    if d == 0:
        return v
    if mode != 0:
        # mode = +1: pltpu.roll follows jnp.roll (out[i] = x[i - shift]);
        # mode = -1: opposite convention.  Determined once by a probe kernel.
        shift = (-d * mode) % BS
        return pltpu.roll(v, shift, 0) * smask_ref[d + MAX_PAD]
    # Fallback: constant (BS, BS) shift-with-boundary-zero matrix on the MXU.
    return jnp.dot(smat_ref[d + MAX_PAD], v, preferred_element_type=jnp.float32)


def _conv_same_kernel(v, wa_ref, base, K, P, mode, smask_ref, smat_ref, BS):
    acc = None
    for k in range(K):
        src = _shifted(v, k - P, mode, smask_ref, smat_ref, BS)
        term = jnp.dot(src, wa_ref[base + k], preferred_element_type=jnp.float32)
        acc = term if acc is None else acc + term
    return acc


def _depthwise_same_kernel(v, dw_w, K, P, mode, smask_ref, smat_ref, BS):
    acc = None
    for k in range(K):
        src = _shifted(v, k - P, mode, smask_ref, smat_ref, BS)
        term = src * dw_w[k:k + 1, :]
        acc = term if acc is None else acc + term
    return acc


def _cell_forward_kernel(c, x, B, S, mode,
                         kmask_ref, smask_ref, smat_ref,
                         wa_ref, wb_ref, win_ref, wout_ref, wdw_ref,
                         v32_ref, v64_ref, v96_ref):
    """One EncoderCell on the whole folded batch x: (B*S, H)."""
    H, P, NH = CFG.hidden_dim, CFG.pff_dim, CFG.n_heads
    HD = H // NH
    BS = B * S
    v32 = v32_ref[c]                      # (11, H) LN params + narrow biases
    v64 = v64_ref[c]                      # (7, P)  wide biases + mid-LN
    wa_base = 8 * c

    def ln(j, v):
        return _layer_norm(v, v32[2 * j:2 * j + 1, :], v32[2 * j + 1:2 * j + 2, :])

    # Block 1: GLU(LN0(x))  (Conv1d H -> 2H, k=3, pad=1; gated)
    h0 = ln(0, x)
    glu = _conv_same_kernel(h0, wa_ref, wa_base + 0, 3, 1, mode,
                            smask_ref, smat_ref, BS) + v64[0:1, :]
    b01 = glu[:, :H] * jax.nn.sigmoid(glu[:, H:])

    # Block 2: left linear branch + right conv branch (F.pad folded into w/b).
    h1 = ln(1, b01)
    left = jax.nn.relu(
        jnp.dot(h1, wa_ref[wa_base + 6], preferred_element_type=jnp.float32)
        + v64[1:2, :])
    right = jax.nn.relu(
        _conv_same_kernel(h1, wa_ref, wa_base + 3, 3, 1, mode,
                          smask_ref, smat_ref, BS) + v64[2:3, :])
    b02 = left + right

    # Block 3: separable conv (depthwise k=9 + pointwise; F.pad folded).
    h2 = _layer_norm(b02, v64[3:4, :], v64[4:5, :])
    dw = _depthwise_same_kernel(h2, wdw_ref[c], 9, 4, mode,
                                smask_ref, smat_ref, BS) + v64[5:6, :]
    pw = jnp.dot(dw, wb_ref[2 * c + 0],
                 preferred_element_type=jnp.float32) + v32[9:10, :]
    b03 = pw + b01

    # Block 4: multi-head self-attention (q-scale folded into in_proj).
    h3 = ln(2, b03)
    qkv = jnp.dot(h3, win_ref[c], preferred_element_type=jnp.float32) + v96_ref[c]
    ctx_rows = []
    for b in range(B):                                   # B=2, unrolled
        rows = slice(b * S, (b + 1) * S)
        neg = kmask_ref[b] * NEG_INF                     # (1, S)
        q_b = qkv[rows, 0:H]
        k_b = qkv[rows, H:2 * H]
        v_b = qkv[rows, 2 * H:3 * H]
        heads = []
        for h in range(NH):                              # NH=4, unrolled
            sl = slice(h * HD, (h + 1) * HD)
            s = jax.lax.dot_general(q_b[:, sl], k_b[:, sl],
                                    (((1,), (1,)), ((), ())),
                                    preferred_element_type=jnp.float32)
            s = s + neg
            s = s - jnp.max(s, axis=-1, keepdims=True)
            p = jnp.exp(s)
            p = p * pl.reciprocal(jnp.sum(p, axis=-1, keepdims=True),
                                  approx=True)
            heads.append(jnp.dot(p, v_b[:, sl],
                                 preferred_element_type=jnp.float32))
        ctx_rows.append(jnp.concatenate(heads, axis=-1))  # (S, H)
    ctx = jnp.concatenate(ctx_rows, axis=0)               # (B*S, H)
    attn = jnp.dot(ctx, wout_ref[c], preferred_element_type=jnp.float32)
    # Residual is the *normed* tensor, matching the PyTorch module.
    b04 = h3 + attn + v32[8:9, :]

    # Block 5: position-wise FF (SiLU) + residual.
    h4 = ln(3, b04)
    f1 = jnp.dot(h4, wa_ref[wa_base + 7],
                 preferred_element_type=jnp.float32) + v64[6:7, :]
    f1 = f1 * jax.nn.sigmoid(f1)
    f2 = jnp.dot(f1, wb_ref[2 * c + 1],
                 preferred_element_type=jnp.float32) + v32[10:11, :]
    return f2 + b04


def _build_kernel(B, S, n_cells, mode):
    def kernel(x_ref, kmask_ref, smask_ref, smat_ref,
               wa_ref, wb_ref, win_ref, wout_ref, wdw_ref,
               v32_ref, v64_ref, v96_ref, o_ref):
        x = x_ref[...]
        for c in range(n_cells):                         # both cells fused
            x = _cell_forward_kernel(c, x, B, S, mode,
                                     kmask_ref, smask_ref, smat_ref,
                                     wa_ref, wb_ref, win_ref, wout_ref,
                                     wdw_ref, v32_ref, v64_ref, v96_ref)
        o_ref[...] = x
    return kernel


# ------------------------------------------------ host-side packing ----------
def _pack_cell_params(cell_params_list):
    """Pack both cells' 28 params into 8 stacked buffers; fold padding/scale."""
    H, P = CFG.hidden_dim, CFG.pff_dim
    Hh = H // 2
    scale = 1.0 / math.sqrt(H // CFG.n_heads)
    pad_val = float(CFG.pad_id)
    wa, wb, win, wout, wdw, v32, v64, v96 = [], [], [], [], [], [], [], []
    for prm in cell_params_list:
        (ln0_g, ln0_b, ln1_g, ln1_b, ln2_g, ln2_b, ln3_g, ln3_b,
         glu_w, glu_b, left_w, left_b, right_w, right_b,
         mid_g, mid_b, sepd_w, sepd_b, sepp_w, sepp_b,
         in_w, in_b, out_w, out_b, pff_w1, pff_b1, pff_w2, pff_b2) = prm

        # F.pad(value=pad_id) folded into zero weight cols + pad_id bias cols
        # (exact; the right branch additionally relies on relu(pad_id)==pad_id,
        #  which holds for pad_id >= 0).
        right_w_p = jnp.pad(right_w, ((0, 0), (0, 0), (0, P - Hh)))
        right_b_p = jnp.pad(right_b, ((0, 0), (0, P - Hh)),
                            constant_values=pad_val)
        sepp_w_p = jnp.pad(sepp_w, ((0, 0), (0, H - Hh)))
        sepp_b_p = jnp.pad(sepp_b, ((0, 0), (0, H - Hh)),
                           constant_values=pad_val)
        # Attention 1/sqrt(head_dim) folded into the q projection.
        in_w_s = in_w.at[:, :H].multiply(scale)
        in_b_s = in_b.at[:, :H].multiply(scale)

        wa.append(jnp.stack([glu_w[0], glu_w[1], glu_w[2],
                             right_w_p[0], right_w_p[1], right_w_p[2],
                             left_w, pff_w1], axis=0))            # (8, H, P)
        wb.append(jnp.stack([sepp_w_p, pff_w2], axis=0))          # (2, P, H)
        win.append(in_w_s)                                        # (H, 3H)
        wout.append(out_w)                                        # (H, H)
        wdw.append(sepd_w[:, 0, :])                               # (9, P)
        v32.append(jnp.concatenate(
            [ln0_g, ln0_b, ln1_g, ln1_b, ln2_g, ln2_b, ln3_g, ln3_b,
             out_b, sepp_b_p, pff_b2], axis=0))                   # (11, H)
        v64.append(jnp.concatenate(
            [glu_b, left_b, right_b_p, mid_g, mid_b, sepd_b, pff_b1],
            axis=0))                                              # (7, P)
        v96.append(in_b_s)                                        # (1, 3H)
    return (jnp.concatenate(wa, axis=0), jnp.concatenate(wb, axis=0),
            jnp.stack(win, axis=0), jnp.stack(wout, axis=0),
            jnp.stack(wdw, axis=0), jnp.stack(v32, axis=0),
            jnp.stack(v64, axis=0), jnp.stack(v96, axis=0))


def _make_shift_masks(B, S):
    """(9, B*S, 1) validity masks for tap offsets d in [-4, 4]."""
    BS = B * S
    pos = np.arange(BS) % S
    m = np.zeros((2 * MAX_PAD + 1, BS, 1), np.float32)
    for d in range(-MAX_PAD, MAX_PAD + 1):
        m[d + MAX_PAD, :, 0] = ((pos + d >= 0) & (pos + d < S)).astype(np.float32)
    return jnp.asarray(m)


def _make_shift_mats(B, S):
    """(9, B*S, B*S) shift-with-boundary-zero matrices (fallback path)."""
    BS = B * S
    m = np.zeros((2 * MAX_PAD + 1, BS, BS), np.float32)
    for d in range(-MAX_PAD, MAX_PAD + 1):
        for r in range(BS):
            if 0 <= (r % S) + d < S:
                m[d + MAX_PAD, r, r + d] = 1.0
    return jnp.asarray(m)


_SHIFT_MODE = None


def _conv_shift_mode():
    """Probe pltpu.roll once: +1 (jnp.roll convention), -1 (reversed),
    0 (use shift-matrix matmul fallback)."""
    global _SHIFT_MODE
    if _SHIFT_MODE is not None:
        return _SHIFT_MODE
    try:
        def probe(x_ref, o_ref):
            o_ref[...] = pltpu.roll(x_ref[...], 1, 0)
        col = np.arange(16, dtype=np.float32)
        x = jnp.asarray(np.tile(col[:, None], (1, 32)))
        out = np.asarray(pl.pallas_call(
            probe, out_shape=jax.ShapeDtypeStruct((16, 32), jnp.float32))(x))[:, 0]
        if np.array_equal(out, np.roll(col, 1)):
            _SHIFT_MODE = 1
        elif np.array_equal(out, np.roll(col, -1)):
            _SHIFT_MODE = -1
        else:
            _SHIFT_MODE = 0
    except Exception:
        _SHIFT_MODE = 0
    return _SHIFT_MODE


# ------------------------------------------------ public wrapper -------------
def evolved_encoder_forward(x, e_mask, cell_params_list):
    """x: (B, S, H) f32 embeddings, e_mask: (B, S) bool (True == padded key)."""
    B, S, H = x.shape
    BS = B * S
    packed = _pack_cell_params(cell_params_list)
    smask = _make_shift_masks(B, S)
    smat = _make_shift_mats(B, S)
    kmask = e_mask.astype(jnp.float32).reshape(B, 1, S)

    kernel = _build_kernel(B, S, len(cell_params_list), _conv_shift_mode())
    # Single grid step: all operands (activations + packed weights, ~220 KB)
    # are whole-array VMEM resident; no per-step pipeline / DMA bookkeeping.
    out = pl.pallas_call(
        kernel,
        out_shape=jax.ShapeDtypeStruct((BS, H), jnp.float32),
    )(x.reshape(BS, H), kmask, smask, smat, *packed)
    return out.reshape(B, S, H)


# -------------------------------------------------------- parameter set-up ---
def init_cell_params(key):
    H, P = CFG.hidden_dim, CFG.pff_dim
    ks = iter(jax.random.split(key, 32))

    def w(shape, fan_in):
        return jax.random.normal(next(ks), shape, jnp.float32) / math.sqrt(fan_in)

    def b(n):
        return 0.1 * jax.random.normal(next(ks), (1, n), jnp.float32)

    def g(n):
        return 1.0 + 0.1 * jax.random.normal(next(ks), (1, n), jnp.float32)

    return (
        g(H), b(H), g(H), b(H), g(H), b(H), g(H), b(H),      # layer_norms 0..3
        w((3, H, 2 * H), 3 * H), b(2 * H),                   # GLU conv (K,Cin,Cout)
        w((H, P), H), b(P),                                  # left_net linear
        w((3, H, H // 2), 3 * H), b(H // 2),                 # right_net conv
        g(P), b(P),                                          # mid_layer_norm
        w((9, 1, P), 9), b(P),                               # sep_conv depthwise
        w((P, H // 2), P), b(H // 2),                        # sep_conv pointwise
        w((H, 3 * H), H), b(3 * H),                          # attn in_proj (pre-T)
        w((H, H), H), b(H),                                  # attn out_proj (pre-T)
        w((H, P), H), b(P),                                  # pff linear 1
        w((P, H), P), b(H),                                  # pff linear 2
    )


def sinusoidal_pe(S, H):
    pos = np.arange(S, dtype=np.float32)[:, None]
    i = np.arange(0, H, 2, dtype=np.float32)[None, :]
    angle = pos / np.power(10000.0, i / H)
    pe = np.zeros((S, H), np.float32)
    pe[:, 0::2] = np.sin(angle)
    pe[:, 1::2] = np.cos(angle)
    return jnp.asarray(pe)


# --------------------------------------------------------------------- main --
if __name__ == "__main__":
    B, S = 2, 8
    H = CFG.hidden_dim

    key = jax.random.PRNGKey(0)
    k_ids, k_emb, k_cells = jax.random.split(key, 3)

    ids = jax.random.randint(k_ids, (B, S), 1, CFG.vocab_size, dtype=jnp.int32)
    ids = ids.at[1, -3:].set(CFG.pad_id)
    e_mask = (ids == CFG.pad_id)                       # True == padded key

    # Embeddings (plain-JAX glue): scaled token embedding + sinusoidal PE.
    emb_table = 0.02 * jax.random.normal(k_emb, (CFG.vocab_size, H), jnp.float32)
    x = emb_table[ids] * math.sqrt(H) + sinusoidal_pe(S, H)[None]

    cell_keys = jax.random.split(k_cells, CFG.n_layers // 2)
    cell_params = [init_cell_params(ck) for ck in cell_keys]

    # Fused Pallas kernel: both encoder cells in a single pallas_call.
    out_kernel = jax.block_until_ready(
        evolved_encoder_forward(x, e_mask, cell_params))

    # Plain-JAX reference (faithful per-batch-element math, vmapped).
    mask3 = e_mask.astype(jnp.float32).reshape(B, 1, S)
    x_ref = x
    for prm in cell_params:
        x_ref = jax.vmap(
            lambda xb, mb, ps=prm: _cell_compute_ref(xb, mb, *ps))(x_ref, mask3)
    x_ref = jax.block_until_ready(x_ref)

    # Tolerance covers the EUP approximate reciprocal used for the softmax
    # denominator (pl.reciprocal(approx=True)); any structural bug (roll
    # direction, packing offsets, padding folds) would show as O(0.1+) errors.
    np.testing.assert_allclose(np.asarray(out_kernel), np.asarray(x_ref),
                               rtol=2e-2, atol=2e-2)
    print("KERNEL_OK")
</pallas_src>

<mosaic_0001>
module attributes {stable_mosaic.version = 11 : i64} {
  func.func @probe(%arg0: memref<16x32xf32, #tpu.memory_space<vmem>>, %arg1: memref<16x32xf32, #tpu.memory_space<vmem>>) attributes {dimension_semantics = [], scalar_prefetch = 0 : i64, scratch_operands = 0 : i64, tpu.core_type = #tpu.core_type<tc>} {
    %c0 = arith.constant 0 : index
    %c0_0 = arith.constant 0 : index
    %0 = vector.load %arg0[%c0, %c0_0] : memref<16x32xf32, #tpu.memory_space<vmem>>, vector<16x32xf32>
    %c1_i32 = arith.constant 1 : i32
    %1 = tpu.dynamic_rotate %0 by %c1_i32 dim 0 : vector<16x32xf32>, i32 -> vector<16x32xf32>
    %c0_1 = arith.constant 0 : index
    %c0_2 = arith.constant 0 : index
    %2 = vector.load %arg1[%c0_1, %c0_2] : memref<16x32xf32, #tpu.memory_space<vmem>>, vector<16x32xf32>
    tpu.vector_store %arg1[%c0_1, %c0_2], %1 {strides = array<i32>} : memref<16x32xf32, #tpu.memory_space<vmem>>, vector<16x32xf32>,
    return
  }
}

module attributes {stable_mosaic.version = 11 : i64} {
  func.func @kernel(%arg0: memref<16x32xf32, #tpu.memory_space<vmem>>, %arg1: memref<2x1x8xf32, #tpu.memory_space<vmem>>, %arg2: memref<9x16x1xf32, #tpu.memory_space<vmem>>, %arg3: memref<9x16x16xf32, #tpu.memory_space<vmem>>, %arg4: memref<16x32x64xf32, #tpu.memory_space<vmem>>, %arg5: memref<4x64x32xf32, #tpu.memory_space<vmem>>, %arg6: memref<2x32x96xf32, #tpu.memory_space<vmem>>, %arg7: memref<2x32x32xf32, #tpu.memory_space<vmem>>, %arg8: memref<2x9x64xf32, #tpu.memory_space<vmem>>, %arg9: memref<2x11x32xf32, #tpu.memory_space<vmem>>, %arg10: memref<2x7x64xf32, #tpu.memory_space<vmem>>, %arg11: memref<2x1x96xf32, #tpu.memory_space<vmem>>, %arg12: memref<16x32xf32, #tpu.memory_space<vmem>>) attributes {dimension_semantics = [], scalar_prefetch = 0 : i64, scratch_operands = 0 : i64, tpu.core_type = #tpu.core_type<tc>} {
    %c0 = arith.constant 0 : index
    %c0_0 = arith.constant 0 : index
    %0 = vector.load %arg0[%c0, %c0_0] : memref<16x32xf32, #tpu.memory_space<vmem>>, vector<16x32xf32>
    %c0_1 = arith.constant 0 : index
    %c0_2 = arith.constant 0 : index
    %c0_3 = arith.constant 0 : index
    %1 = vector.load %arg9[%c0_1, %c0_2, %c0_3] : memref<2x11x32xf32, #tpu.memory_space<vmem>>, vector<1x11x32xf32>
    %2 = vector.shape_cast %1 : vector<1x11x32xf32> to vector<11x32xf32>
    %c0_4 = arith.constant 0 : index
    %c0_5 = arith.constant 0 : index
    %c0_6 = arith.constant 0 : index
    %3 = vector.load %arg10[%c0_4, %c0_5, %c0_6] : memref<2x7x64xf32, #tpu.memory_space<vmem>>, vector<1x7x64xf32>
    %4 = vector.shape_cast %3 : vector<1x7x64xf32> to vector<7x64xf32>
    %5 = vector.extract_strided_slice %2 {offsets = [0, 0], sizes = [1, 32], strides = [1, 1]} : vector<11x32xf32> to vector<1x32xf32>
    %6 = vector.extract_strided_slice %2 {offsets = [1, 0], sizes = [1, 32], strides = [1, 1]} : vector<11x32xf32> to vector<1x32xf32>
    %cst = arith.constant dense<0.000000e+00> : vector<16xf32>
    %7 = vector.multi_reduction <add>, %0, %cst [1] : vector<16x32xf32> to vector<16xf32>
    %8 = vector.shape_cast %7 : vector<16xf32> to vector<16x1xf32>
    %cst_7 = arith.constant 3.200000e+01 : f32
    %9 = vector.broadcast %cst_7 : f32 to vector<16x1xf32>
    %10 = arith.divf %8, %9 : vector<16x1xf32>
    %11 = vector.broadcast %10 : vector<16x1xf32> to vector<16x32xf32>
    %12 = arith.subf %0, %11 : vector<16x32xf32>
    %13 = arith.mulf %12, %12 : vector<16x32xf32>
    %cst_8 = arith.constant dense<0.000000e+00> : vector<16xf32>
    %14 = vector.multi_reduction <add>, %13, %cst_8 [1] : vector<16x32xf32> to vector<16xf32>
    %15 = vector.shape_cast %14 : vector<16xf32> to vector<16x1xf32>
    %cst_9 = arith.constant 3.200000e+01 : f32
    %16 = vector.broadcast %cst_9 : f32 to vector<16x1xf32>
    %17 = arith.divf %15, %16 : vector<16x1xf32>
    %18 = vector.broadcast %10 : vector<16x1xf32> to vector<16x32xf32>
    %19 = arith.subf %0, %18 : vector<16x32xf32>
    %cst_10 = arith.constant 9.99999974E-6 : f32
    %20 = vector.broadcast %cst_10 : f32 to vector<16x1xf32>
    %21 = arith.addf %17, %20 : vector<16x1xf32>
    %22 = math.rsqrt %21 : vector<16x1xf32>
    %23 = vector.broadcast %22 : vector<16x1xf32> to vector<16x32xf32>
    %24 = arith.mulf %19, %23 : vector<16x32xf32>
    %25 = vector.broadcast %5 : vector<1x32xf32> to vector<16x32xf32>
    %26 = arith.mulf %24, %25 : vector<16x32xf32>
    %27 = vector.broadcast %6 : vector<1x32xf32> to vector<16x32xf32>
    %28 = arith.addf %26, %27 : vector<16x32xf32>
    %c3 = arith.constant 3 : index
    %c0_11 = arith.constant 0 : index
    %c0_12 = arith.constant 0 : index
    %29 = vector.load %arg3[%c3, %c0_11, %c0_12] : memref<9x16x16xf32, #tpu.memory_space<vmem>>, vector<1x16x16xf32>
    %30 = vector.shape_cast %29 : vector<1x16x16xf32> to vector<16x16xf32>
    %cst_13 = arith.constant dense<0.000000e+00> : vector<16x32xf32>
    %31 = tpu.matmul %30, %28, %cst_13 {dimension_numbers = #tpu.dot_dimension_numbers<[1], [0], [0], [1], [0, 0, 1, 1], [], []>} : vector<16x16xf32>, vector<16x32xf32>, vector<16x32xf32> -> vector<16x32xf32>
    %c0_14 = arith.constant 0 : index
    %c0_15 = arith.constant 0 : index
    %c0_16 = arith.constant 0 : index
    %32 = vector.load %arg4[%c0_14, %c0_15, %c0_16] : memref<16x32x64xf32, #tpu.memory_space<vmem>>, vector<1x32x64xf32>
    %33 = vector.shape_cast %32 : vector<1x32x64xf32> to vector<32x64xf32>
    %cst_17 = arith.constant dense<0.000000e+00> : vector<16x64xf32>
    %34 = tpu.matmul %31, %33, %cst_17 {dimension_numbers = #tpu.dot_dimension_numbers<[1], [0], [0], [1], [0, 0, 1, 1], [], []>} : vector<16x32xf32>, vector<32x64xf32>, vector<16x64xf32> -> vector<16x64xf32>
    %c1 = arith.constant 1 : index
    %c0_18 = arith.constant 0 : index
    %c0_19 = arith.constant 0 : index
    %35 = vector.load %arg4[%c1, %c0_18, %c0_19] : memref<16x32x64xf32, #tpu.memory_space<vmem>>, vector<1x32x64xf32>
    %36 = vector.shape_cast %35 : vector<1x32x64xf32> to vector<32x64xf32>
    %cst_20 = arith.constant dense<0.000000e+00> : vector<16x64xf32>
    %37 = tpu.matmul %28, %36, %cst_20 {dimension_numbers = #tpu.dot_dimension_numbers<[1], [0], [0], [1], [0, 0, 1, 1], [], []>} : vector<16x32xf32>, vector<32x64xf32>, vector<16x64xf32> -> vector<16x64xf32>
    %38 = arith.addf %34, %37 : vector<16x64xf32>
    %c5 = arith.constant 5 : index
    %c0_21 = arith.constant 0 : index
    %c0_22 = arith.constant 0 : index
    %39 = vector.load %arg3[%c5, %c0_21, %c0_22] : memref<9x16x16xf32, #tpu.memory_space<vmem>>, vector<1x16x16xf32>
    %40 = vector.shape_cast %39 : vector<1x16x16xf32> to vector<16x16xf32>
    %cst_23 = arith.constant dense<0.000000e+00> : vector<16x32xf32>
    %41 = tpu.matmul %40, %28, %cst_23 {dimension_numbers = #tpu.dot_dimension_numbers<[1], [0], [0], [1], [0, 0, 1, 1], [], []>} : vector<16x16xf32>, vector<16x32xf32>, vector<16x32xf32> -> vector<16x32xf32>
    %c2 = arith.constant 2 : index
    %c0_24 = arith.constant 0 : index
    %c0_25 = arith.constant 0 : index
    %42 = vector.load %arg4[%c2, %c0_24, %c0_25] : memref<16x32x64xf32, #tpu.memory_space<vmem>>, vector<1x32x64xf32>
    %43 = vector.shape_cast %42 : vector<1x32x64xf32> to vector<32x64xf32>
    %cst_26 = arith.constant dense<0.000000e+00> : vector<16x64xf32>
    %44 = tpu.matmul %41, %43, %cst_26 {dimension_numbers = #tpu.dot_dimension_numbers<[1], [0], [0], [1], [0, 0, 1, 1], [], []>} : vector<16x32xf32>, vector<32x64xf32>, vector<16x64xf32> -> vector<16x64xf32>
    %45 = arith.addf %38, %44 : vector<16x64xf32>
    %46 = vector.extract_strided_slice %4 {offsets = [0, 0], sizes = [1, 64], strides = [1, 1]} : vector<7x64xf32> to vector<1x64xf32>
    %47 = vector.broadcast %46 : vector<1x64xf32> to vector<16x64xf32>
    %48 = arith.addf %45, %47 : vector<16x64xf32>
    %49 = vector.extract_strided_slice %48 {offsets = [0, 0], sizes = [16, 32], strides = [1, 1]} : vector<16x64xf32> to vector<16x32xf32>
    %50 = vector.extract_strided_slice %48 {offsets = [0, 32], sizes = [16, 32], strides = [1, 1]} : vector<16x64xf32> to vector<16x32xf32>
    %51 = arith.negf %50 : vector<16x32xf32>
    %52 = math.exp %51 : vector<16x32xf32>
    %cst_27 = arith.constant 1.000000e+00 : f32
    %53 = vector.broadcast %cst_27 : f32 to vector<16x32xf32>
    %54 = arith.addf %53, %52 : vector<16x32xf32>
    %55 = arith.divf %53, %54 : vector<16x32xf32>
    %56 = arith.mulf %49, %55 : vector<16x32xf32>
    %57 = vector.extract_strided_slice %2 {offsets = [2, 0], sizes = [1, 32], strides = [1, 1]} : vector<11x32xf32> to vector<1x32xf32>
    %58 = vector.extract_strided_slice %2 {offsets = [3, 0], sizes = [1, 32], strides = [1, 1]} : vector<11x32xf32> to vector<1x32xf32>
    %cst_28 = arith.constant dense<0.000000e+00> : vector<16xf32>
    %59 = vector.multi_reduction <add>, %56, %cst_28 [1] : vector<16x32xf32> to vector<16xf32>
    %60 = vector.shape_cast %59 : vector<16xf32> to vector<16x1xf32>
    %cst_29 = arith.constant 3.200000e+01 : f32
    %61 = vector.broadcast %cst_29 : f32 to vector<16x1xf32>
    %62 = arith.divf %60, %61 : vector<16x1xf32>
    %63 = vector.broadcast %62 : vector<16x1xf32> to vector<16x32xf32>
    %64 = arith.subf %56, %63 : vector<16x32xf32>
    %65 = arith.mulf %64, %64 : vector<16x32xf32>
    %cst_30 = arith.constant dense<0.000000e+00> : vector<16xf32>
    %66 = vector.multi_reduction <add>, %65, %cst_30 [1] : vector<16x32xf32> to vector<16xf32>
    %67 = vector.shape_cast %66 : vector<16xf32> to vector<16x1xf32>
    %cst_31 = arith.constant 3.200000e+01 : f32
    %68 = vector.broadcast %cst_31 : f32 to vector<16x1xf32>
    %69 = arith.divf %67, %68 : vector<16x1xf32>
    %70 = vector.broadcast %62 : vector<16x1xf32> to vector<16x32xf32>
    %71 = arith.subf %56, %70 : vector<16x32xf32>
    %cst_32 = arith.constant 9.99999974E-6 : f32
    %72 = vector.broadcast %cst_32 : f32 to vector<16x1xf32>
    %73 = arith.addf %69, %72 : vector<16x1xf32>
    %74 = math.rsqrt %73 : vector<16x1xf32>
    %75 = vector.broadcast %74 : vector<16x1xf32> to vector<16x32xf32>
    %76 = arith.mulf %71, %75 : vector<16x32xf32>
    %77 = vector.broadcast %57 : vector<1x32xf32> to vector<16x32xf32>
    %78 = arith.mulf %76, %77 : vector<16x32xf32>
    %79 = vector.broadcast %58 : vector<1x32xf32> to vector<16x32xf32>
    %80 = arith.addf %78, %79 : vector<16x32xf32>
    %c6 = arith.constant 6 : index
    %c0_33 = arith.constant 0 : index
    %c0_34 = arith.constant 0 : index
    %81 = vector.load %arg4[%c6, %c0_33, %c0_34] : memref<16x32x64xf32, #tpu.memory_space<vmem>>, vector<1x32x64xf32>
    %82 = vector.shape_cast %81 : vector<1x32x64xf32> to vector<32x64xf32>
    %cst_35 = arith.constant dense<0.000000e+00> : vector<16x64xf32>
    %83 = tpu.matmul %80, %82, %cst_35 {dimension_numbers = #tpu.dot_dimension_numbers<[1], [0], [0], [1], [0, 0, 1, 1], [], []>} : vector<16x32xf32>, vector<32x64xf32>, vector<16x64xf32> -> vector<16x64xf32>
    %84 = vector.extract_strided_slice %4 {offsets = [1, 0], sizes = [1, 64], strides = [1, 1]} : vector<7x64xf32> to vector<1x64xf32>
    %85 = vector.broadcast %84 : vector<1x64xf32> to vector<16x64xf32>
    %86 = arith.addf %83, %85 : vector<16x64xf32>
    %cst_36 = arith.constant 0.000000e+00 : f32
    %87 = vector.broadcast %cst_36 : f32 to vector<16x64xf32>
    %88 = arith.maximumf %86, %87 : vector<16x64xf32>
    %c3_37 = arith.constant 3 : index
    %c0_38 = arith.constant 0 : index
    %c0_39 = arith.constant 0 : index
    %89 = vector.load %arg3[%c3_37, %c0_38, %c0_39] : memref<9x16x16xf32, #tpu.memory_space<vmem>>, vector<1x16x16xf32>
    %90 = vector.shape_cast %89 : vector<1x16x16xf32> to vector<16x16xf32>
    %cst_40 = arith.constant dense<0.000000e+00> : vector<16x32xf32>
    %91 = tpu.matmul %90, %80, %cst_40 {dimension_numbers = #tpu.dot_dimension_numbers<[1], [0], [0], [1], [0, 0, 1, 1], [], []>} : vector<16x16xf32>, vector<16x32xf32>, vector<16x32xf32> -> vector<16x32xf32>
    %c3_41 = arith.constant 3 : index
    %c0_42 = arith.constant 0 : index
    %c0_43 = arith.constant 0 : index
    %92 = vector.load %arg4[%c3_41, %c0_42, %c0_43] : memref<16x32x64xf32, #tpu.memory_space<vmem>>, vector<1x32x64xf32>
    %93 = vector.shape_cast %92 : vector<1x32x64xf32> to vector<32x64xf32>
    %cst_44 = arith.constant dense<0.000000e+00> : vector<16x64xf32>
    %94 = tpu.matmul %91, %93, %cst_44 {dimension_numbers = #tpu.dot_dimension_numbers<[1], [0], [0], [1], [0, 0, 1, 1], [], []>} : vector<16x32xf32>, vector<32x64xf32>, vector<16x64xf32> -> vector<16x64xf32>
    %c4 = arith.constant 4 : index
    %c0_45 = arith.constant 0 : index
    %c0_46 = arith.constant 0 : index
    %95 = vector.load %arg4[%c4, %c0_45, %c0_46] : memref<16x32x64xf32, #tpu.memory_space<vmem>>, vector<1x32x64xf32>
    %96 = vector.shape_cast %95 : vector<1x32x64xf32> to vector<32x64xf32>
    %cst_47 = arith.constant dense<0.000000e+00> : vector<16x64xf32>
    %97 = tpu.matmul %80, %96, %cst_47 {dimension_numbers = #tpu.dot_dimension_numbers<[1], [0], [0], [1], [0, 0, 1, 1], [], []>} : vector<16x32xf32>, vector<32x64xf32>, vector<16x64xf32> -> vector<16x64xf32>
    %98 = arith.addf %94, %97 : vector<16x64xf32>
    %c5_48 = arith.constant 5 : index
    %c0_49 = arith.constant 0 : index
    %c0_50 = arith.constant 0 : index
    %99 = vector.load %arg3[%c5_48, %c0_49, %c0_50] : memref<9x16x16xf32, #tpu.memory_space<vmem>>, vector<1x16x16xf32>
    %100 = vector.shape_cast %99 : vector<1x16x16xf32> to vector<16x16xf32>
    %cst_51 = arith.constant dense<0.000000e+00> : vector<16x32xf32>
    %101 = tpu.matmul %100, %80, %cst_51 {dimension_numbers = #tpu.dot_dimension_numbers<[1], [0], [0], [1], [0, 0, 1, 1], [], []>} : vector<16x16xf32>, vector<16x32xf32>, vector<16x32xf32> -> vector<16x32xf32>
    %c5_52 = arith.constant 5 : index
    %c0_53 = arith.constant 0 : index
    %c0_54 = arith.constant 0 : index
    %102 = vector.load %arg4[%c5_52, %c0_53, %c0_54] : memref<16x32x64xf32, #tpu.memory_space<vmem>>, vector<1x32x64xf32>
    %103 = vector.shape_cast %102 : vector<1x32x64xf32> to vector<32x64xf32>
    %cst_55 = arith.constant dense<0.000000e+00> : vector<16x64xf32>
    %104 = tpu.matmul %101, %103, %cst_55 {dimension_numbers = #tpu.dot_dimension_numbers<[1], [0], [0], [1], [0, 0, 1, 1], [], []>} : vector<16x32xf32>, vector<32x64xf32>, vector<16x64xf32> -> vector<16x64xf32>
    %105 = arith.addf %98, %104 : vector<16x64xf32>
    %106 = vector.extract_strided_slice %4 {offsets = [2, 0], sizes = [1, 64], strides = [1, 1]} : vector<7x64xf32> to vector<1x64xf32>
    %107 = vector.broadcast %106 : vector<1x64xf32> to vector<16x64xf32>
    %108 = arith.addf %105, %107 : vector<16x64xf32>
    %cst_56 = arith.constant 0.000000e+00 : f32
    %109 = vector.broadcast %cst_56 : f32 to vector<16x64xf32>
    %110 = arith.maximumf %108, %109 : vector<16x64xf32>
    %111 = arith.addf %88, %110 : vector<16x64xf32>
    %112 = vector.extract_strided_slice %4 {offsets = [3, 0], sizes = [1, 64], strides = [1, 1]} : vector<7x64xf32> to vector<1x64xf32>
    %113 = vector.extract_strided_slice %4 {offsets = [4, 0], sizes = [1, 64], strides = [1, 1]} : vector<7x64xf32> to vector<1x64xf32>
    %cst_57 = arith.constant dense<0.000000e+00> : vector<16xf32>
    %114 = vector.multi_reduction <add>, %111, %cst_57 [1] : vector<16x64xf32> to vector<16xf32>
    %115 = vector.shape_cast %114 : vector<16xf32> to vector<16x1xf32>
    %cst_58 = arith.constant 6.400000e+01 : f32
    %116 = vector.broadcast %cst_58 : f32 to vector<16x1xf32>
    %117 = arith.divf %115, %116 : vector<16x1xf32>
    %118 = vector.broadcast %117 : vector<16x1xf32> to vector<16x64xf32>
    %119 = arith.subf %111, %118 : vector<16x64xf32>
    %120 = arith.mulf %119, %119 : vector<16x64xf32>
    %cst_59 = arith.constant dense<0.000000e+00> : vector<16xf32>
    %121 = vector.multi_reduction <add>, %120, %cst_59 [1] : vector<16x64xf32> to vector<16xf32>
    %122 = vector.shape_cast %121 : vector<16xf32> to vector<16x1xf32>
    %cst_60 = arith.constant 6.400000e+01 : f32
    %123 = vector.broadcast %cst_60 : f32 to vector<16x1xf32>
    %124 = arith.divf %122, %123 : vector<16x1xf32>
    %125 = vector.broadcast %117 : vector<16x1xf32> to vector<16x64xf32>
    %126 = arith.subf %111, %125 : vector<16x64xf32>
    %cst_61 = arith.constant 9.99999974E-6 : f32
    %127 = vector.broadcast %cst_61 : f32 to vector<16x1xf32>
    %128 = arith.addf %124, %127 : vector<16x1xf32>
    %129 = math.rsqrt %128 : vector<16x1xf32>
    %130 = vector.broadcast %129 : vector<16x1xf32> to vector<16x64xf32>
    %131 = arith.mulf %126, %130 : vector<16x64xf32>
    %132 = vector.broadcast %112 : vector<1x64xf32> to vector<16x64xf32>
    %133 = arith.mulf %131, %132 : vector<16x64xf32>
    %134 = vector.broadcast %113 : vector<1x64xf32> to vector<16x64xf32>
    %135 = arith.addf %133, %134 : vector<16x64xf32>
    %c0_62 = arith.constant 0 : index
    %c0_63 = arith.constant 0 : index
    %c0_64 = arith.constant 0 : index
    %136 = vector.load %arg8[%c0_62, %c0_63, %c0_64] : memref<2x9x64xf32, #tpu.memory_space<vmem>>, vector<1x9x64xf32>
    %137 = vector.shape_cast %136 : vector<1x9x64xf32> to vector<9x64xf32>
    %c0_65 = arith.constant 0 : index
    %c0_66 = arith.constant 0 : index
    %c0_67 = arith.constant 0 : index
    %138 = vector.load %arg3[%c0_65, %c0_66, %c0_67] : memref<9x16x16xf32, #tpu.memory_space<vmem>>, vector<1x16x16xf32>
    %139 = vector.shape_cast %138 : vector<1x16x16xf32> to vector<16x16xf32>
    %cst_68 = arith.constant dense<0.000000e+00> : vector<16x64xf32>
    %140 = tpu.matmul %139, %135, %cst_68 {dimension_numbers = #tpu.dot_dimension_numbers<[1], [0], [0], [1], [0, 0, 1, 1], [], []>} : vector<16x16xf32>, vector<16x64xf32>, vector<16x64xf32> -> vector<16x64xf32>
    %141 = vector.extract_strided_slice %137 {offsets = [0, 0], sizes = [1, 64], strides = [1, 1]} : vector<9x64xf32> to vector<1x64xf32>
    %142 = vector.broadcast %141 : vector<1x64xf32> to vector<16x64xf32>
    %143 = arith.mulf %140, %142 : vector<16x64xf32>
    %c1_69 = arith.constant 1 : index
    %c0_70 = arith.constant 0 : index
    %c0_71 = arith.constant 0 : index
    %144 = vector.load %arg3[%c1_69, %c0_70, %c0_71] : memref<9x16x16xf32, #tpu.memory_space<vmem>>, vector<1x16x16xf32>
    %145 = vector.shape_cast %144 : vector<1x16x16xf32> to vector<16x16xf32>
    %cst_72 = arith.constant dense<0.000000e+00> : vector<16x64xf32>
    %146 = tpu.matmul %145, %135, %cst_72 {dimension_numbers = #tpu.dot_dimension_numbers<[1], [0], [0], [1], [0, 0, 1, 1], [], []>} : vector<16x16xf32>, vector<16x64xf32>, vector<16x64xf32> -> vector<16x64xf32>
    %147 = vector.extract_strided_slice %137 {offsets = [1, 0], sizes = [1, 64], strides = [1, 1]} : vector<9x64xf32> to vector<1x64xf32>
    %148 = vector.broadcast %147 : vector<1x64xf32> to vector<16x64xf32>
    %149 = arith.mulf %146, %148 : vector<16x64xf32>
    %150 = arith.addf %143, %149 : vector<16x64xf32>
    %c2_73 = arith.constant 2 : index
    %c0_74 = arith.constant 0 : index
    %c0_75 = arith.constant 0 : index
    %151 = vector.load %arg3[%c2_73, %c0_74, %c0_75] : memref<9x16x16xf32, #tpu.memory_space<vmem>>, vector<1x16x16xf32>
    %152 = vector.shape_cast %151 : vector<1x16x16xf32> to vector<16x16xf32>
    %cst_76 = arith.constant dense<0.000000e+00> : vector<16x64xf32>
    %153 = tpu.matmul %152, %135, %cst_76 {dimension_numbers = #tpu.dot_dimension_numbers<[1], [0], [0], [1], [0, 0, 1, 1], [], []>} : vector<16x16xf32>, vector<16x64xf32>, vector<16x64xf32> -> vector<16x64xf32>
    %154 = vector.extract_strided_slice %137 {offsets = [2, 0], sizes = [1, 64], strides = [1, 1]} : vector<9x64xf32> to vector<1x64xf32>
    %155 = vector.broadcast %154 : vector<1x64xf32> to vector<16x64xf32>
    %156 = arith.mulf %153, %155 : vector<16x64xf32>
    %157 = arith.addf %150, %156 : vector<16x64xf32>
    %c3_77 = arith.constant 3 : index
    %c0_78 = arith.constant 0 : index
    %c0_79 = arith.constant 0 : index
    %158 = vector.load %arg3[%c3_77, %c0_78, %c0_79] : memref<9x16x16xf32, #tpu.memory_space<vmem>>, vector<1x16x16xf32>
    %159 = vector.shape_cast %158 : vector<1x16x16xf32> to vector<16x16xf32>
    %cst_80 = arith.constant dense<0.000000e+00> : vector<16x64xf32>
    %160 = tpu.matmul %159, %135, %cst_80 {dimension_numbers = #tpu.dot_dimension_numbers<[1], [0], [0], [1], [0, 0, 1, 1], [], []>} : vector<16x16xf32>, vector<16x64xf32>, vector<16x64xf32> -> vector<16x64xf32>
    %161 = vector.extract_strided_slice %137 {offsets = [3, 0], sizes = [1, 64], strides = [1, 1]} : vector<9x64xf32> to vector<1x64xf32>
    %162 = vector.broadcast %161 : vector<1x64xf32> to vector<16x64xf32>
    %163 = arith.mulf %160, %162 : vector<16x64xf32>
    %164 = arith.addf %157, %163 : vector<16x64xf32>
    %165 = vector.extract_strided_slice %137 {offsets = [4, 0], sizes = [1, 64], strides = [1, 1]} : vector<9x64xf32> to vector<1x64xf32>
    %166 = vector.broadcast %165 : vector<1x64xf32> to vector<16x64xf32>
    %167 = arith.mulf %135, %166 : vector<16x64xf32>
    %168 = arith.addf %164, %167 : vector<16x64xf32>
    %c5_81 = arith.constant 5 : index
    %c0_82 = arith.constant 0 : index
    %c0_83 = arith.constant 0 : index
    %169 = vector.load %arg3[%c5_81, %c0_82, %c0_83] : memref<9x16x16xf32, #tpu.memory_space<vmem>>, vector<1x16x16xf32>
    %170 = vector.shape_cast %169 : vector<1x16x16xf32> to vector<16x16xf32>
    %cst_84 = arith.constant dense<0.000000e+00> : vector<16x64xf32>
    %171 = tpu.matmul %170, %135, %cst_84 {dimension_numbers = #tpu.dot_dimension_numbers<[1], [0], [0], [1], [0, 0, 1, 1], [], []>} : vector<16x16xf32>, vector<16x64xf32>, vector<16x64xf32> -> vector<16x64xf32>
    %172 = vector.extract_strided_slice %137 {offsets = [5, 0], sizes = [1, 64], strides = [1, 1]} : vector<9x64xf32> to vector<1x64xf32>
    %173 = vector.broadcast %172 : vector<1x64xf32> to vector<16x64xf32>
    %174 = arith.mulf %171, %173 : vector<16x64xf32>
    %175 = arith.addf %168, %174 : vector<16x64xf32>
    %c6_85 = arith.constant 6 : index
    %c0_86 = arith.constant 0 : index
    %c0_87 = arith.constant 0 : index
    %176 = vector.load %arg3[%c6_85, %c0_86, %c0_87] : memref<9x16x16xf32, #tpu.memory_space<vmem>>, vector<1x16x16xf32>
    %177 = vector.shape_cast %176 : vector<1x16x16xf32> to vector<16x16xf32>
    %cst_88 = arith.constant dense<0.000000e+00> : vector<16x64xf32>
    %178 = tpu.matmul %177, %135, %cst_88 {dimension_numbers = #tpu.dot_dimension_numbers<[1], [0], [0], [1], [0, 0, 1, 1], [], []>} : vector<16x16xf32>, vector<16x64xf32>, vector<16x64xf32> -> vector<16x64xf32>
    %179 = vector.extract_strided_slice %137 {offsets = [6, 0], sizes = [1, 64], strides = [1, 1]} : vector<9x64xf32> to vector<1x64xf32>
    %180 = vector.broadcast %179 : vector<1x64xf32> to vector<16x64xf32>
    %181 = arith.mulf %178, %180 : vector<16x64xf32>
    %182 = arith.addf %175, %181 : vector<16x64xf32>
    %c7 = arith.constant 7 : index
    %c0_89 = arith.constant 0 : index
    %c0_90 = arith.constant 0 : index
    %183 = vector.load %arg3[%c7, %c0_89, %c0_90] : memref<9x16x16xf32, #tpu.memory_space<vmem>>, vector<1x16x16xf32>
    %184 = vector.shape_cast %183 : vector<1x16x16xf32> to vector<16x16xf32>
    %cst_91 = arith.constant dense<0.000000e+00> : vector<16x64xf32>
    %185 = tpu.matmul %184, %135, %cst_91 {dimension_numbers = #tpu.dot_dimension_numbers<[1], [0], [0], [1], [0, 0, 1, 1], [], []>} : vector<16x16xf32>, vector<16x64xf32>, vector<16x64xf32> -> vector<16x64xf32>
    %186 = vector.extract_strided_slice %137 {offsets = [7, 0], sizes = [1, 64], strides = [1, 1]} : vector<9x64xf32> to vector<1x64xf32>
    %187 = vector.broadcast %186 : vector<1x64xf32> to vector<16x64xf32>
    %188 = arith.mulf %185, %187 : vector<16x64xf32>
    %189 = arith.addf %182, %188 : vector<16x64xf32>
    %c8 = arith.constant 8 : index
    %c0_92 = arith.constant 0 : index
    %c0_93 = arith.constant 0 : index
    %190 = vector.load %arg3[%c8, %c0_92, %c0_93] : memref<9x16x16xf32, #tpu.memory_space<vmem>>, vector<1x16x16xf32>
    %191 = vector.shape_cast %190 : vector<1x16x16xf32> to vector<16x16xf32>
    %cst_94 = arith.constant dense<0.000000e+00> : vector<16x64xf32>
    %192 = tpu.matmul %191, %135, %cst_94 {dimension_numbers = #tpu.dot_dimension_numbers<[1], [0], [0], [1], [0, 0, 1, 1], [], []>} : vector<16x16xf32>, vector<16x64xf32>, vector<16x64xf32> -> vector<16x64xf32>
    %193 = vector.extract_strided_slice %137 {offsets = [8, 0], sizes = [1, 64], strides = [1, 1]} : vector<9x64xf32> to vector<1x64xf32>
    %194 = vector.broadcast %193 : vector<1x64xf32> to vector<16x64xf32>
    %195 = arith.mulf %192, %194 : vector<16x64xf32>
    %196 = arith.addf %189, %195 : vector<16x64xf32>
    %197 = vector.extract_strided_slice %4 {offsets = [5, 0], sizes = [1, 64], strides = [1, 1]} : vector<7x64xf32> to vector<1x64xf32>
    %198 = vector.broadcast %197 : vector<1x64xf32> to vector<16x64xf32>
    %199 = arith.addf %196, %198 : vector<16x64xf32>
    %c0_95 = arith.constant 0 : index
    %c0_96 = arith.constant 0 : index
    %c0_97 = arith.constant 0 : index
    %200 = vector.load %arg5[%c0_95, %c0_96, %c0_97] : memref<4x64x32xf32, #tpu.memory_space<vmem>>, vector<1x64x32xf32>
    %201 = vector.shape_cast %200 : vector<1x64x32xf32> to vector<64x32xf32>
    %cst_98 = arith.constant dense<0.000000e+00> : vector<16x32xf32>
    %202 = tpu.matmul %199, %201, %cst_98 {dimension_numbers = #tpu.dot_dimension_numbers<[1], [0], [0], [1], [0, 0, 1, 1], [], []>} : vector<16x64xf32>, vector<64x32xf32>, vector<16x32xf32> -> vector<16x32xf32>
    %203 = vector.extract_strided_slice %2 {offsets = [9, 0], sizes = [1, 32], strides = [1, 1]} : vector<11x32xf32> to vector<1x32xf32>
    %204 = vector.broadcast %203 : vector<1x32xf32> to vector<16x32xf32>
    %205 = arith.addf %202, %204 : vector<16x32xf32>
    %206 = arith.addf %205, %56 : vector<16x32xf32>
    %207 = vector.extract_strided_slice %2 {offsets = [4, 0], sizes = [1, 32], strides = [1, 1]} : vector<11x32xf32> to vector<1x32xf32>
    %208 = vector.extract_strided_slice %2 {offsets = [5, 0], sizes = [1, 32], strides = [1, 1]} : vector<11x32xf32> to vector<1x32xf32>
    %cst_99 = arith.constant dense<0.000000e+00> : vector<16xf32>
    %209 = vector.multi_reduction <add>, %206, %cst_99 [1] : vector<16x32xf32> to vector<16xf32>
    %210 = vector.shape_cast %209 : vector<16xf32> to vector<16x1xf32>
    %cst_100 = arith.constant 3.200000e+01 : f32
    %211 = vector.broadcast %cst_100 : f32 to vector<16x1xf32>
    %212 = arith.divf %210, %211 : vector<16x1xf32>
    %213 = vector.broadcast %212 : vector<16x1xf32> to vector<16x32xf32>
    %214 = arith.subf %206, %213 : vector<16x32xf32>
    %215 = arith.mulf %214, %214 : vector<16x32xf32>
    %cst_101 = arith.constant dense<0.000000e+00> : vector<16xf32>
    %216 = vector.multi_reduction <add>, %215, %cst_101 [1] : vector<16x32xf32> to vector<16xf32>
    %217 = vector.shape_cast %216 : vector<16xf32> to vector<16x1xf32>
    %cst_102 = arith.constant 3.200000e+01 : f32
    %218 = vector.broadcast %cst_102 : f32 to vector<16x1xf32>
    %219 = arith.divf %217, %218 : vector<16x1xf32>
    %220 = vector.broadcast %212 : vector<16x1xf32> to vector<16x32xf32>
    %221 = arith.subf %206, %220 : vector<16x32xf32>
    %cst_103 = arith.constant 9.99999974E-6 : f32
    %222 = vector.broadcast %cst_103 : f32 to vector<16x1xf32>
    %223 = arith.addf %219, %222 : vector<16x1xf32>
    %224 = math.rsqrt %223 : vector<16x1xf32>
    %225 = vector.broadcast %224 : vector<16x1xf32> to vector<16x32xf32>
    %226 = arith.mulf %221, %225 : vector<16x32xf32>
    %227 = vector.broadcast %207 : vector<1x32xf32> to vector<16x32xf32>
    %228 = arith.mulf %226, %227 : vector<16x32xf32>
    %229 = vector.broadcast %208 : vector<1x32xf32> to vector<16x32xf32>
    %230 = arith.addf %228, %229 : vector<16x32xf32>
    %c0_104 = arith.constant 0 : index
    %c0_105 = arith.constant 0 : index
    %c0_106 = arith.constant 0 : index
    %231 = vector.load %arg6[%c0_104, %c0_105, %c0_106] : memref<2x32x96xf32, #tpu.memory_space<vmem>>, vector<1x32x96xf32>
    %232 = vector.shape_cast %231 : vector<1x32x96xf32> to vector<32x96xf32>
    %cst_107 = arith.constant dense<0.000000e+00> : vector<16x96xf32>
    %233 = tpu.matmul %230, %232, %cst_107 {dimension_numbers = #tpu.dot_dimension_numbers<[1], [0], [0], [1], [0, 0, 1, 1], [], []>} : vector<16x32xf32>, vector<32x96xf32>, vector<16x96xf32> -> vector<16x96xf32>
    %c0_108 = arith.constant 0 : index
    %c0_109 = arith.constant 0 : index
    %c0_110 = arith.constant 0 : index
    %234 = vector.load %arg11[%c0_108, %c0_109, %c0_110] : memref<2x1x96xf32, #tpu.memory_space<vmem>>, vector<1x1x96xf32>
    %235 = vector.shape_cast %234 : vector<1x1x96xf32> to vector<1x96xf32>
    %236 = vector.broadcast %235 : vector<1x96xf32> to vector<16x96xf32>
    %237 = arith.addf %233, %236 : vector<16x96xf32>
    %c0_111 = arith.constant 0 : index
    %c0_112 = arith.constant 0 : index
    %c0_113 = arith.constant 0 : index
    %238 = vector.load %arg1[%c0_111, %c0_112, %c0_113] : memref<2x1x8xf32, #tpu.memory_space<vmem>>, vector<1x1x8xf32>
    %239 = vector.shape_cast %238 : vector<1x1x8xf32> to vector<1x8xf32>
    %cst_114 = arith.constant -1.000000e+09 : f32
    %240 = vector.broadcast %cst_114 : f32 to vector<1x8xf32>
    %241 = arith.mulf %239, %240 : vector<1x8xf32>
    %242 = vector.extract_strided_slice %237 {offsets = [0, 0], sizes = [8, 32], strides = [1, 1]} : vector<16x96xf32> to vector<8x32xf32>
    %243 = vector.extract_strided_slice %237 {offsets = [0, 32], sizes = [8, 32], strides = [1, 1]} : vector<16x96xf32> to vector<8x32xf32>
    %244 = vector.extract_strided_slice %237 {offsets = [0, 64], sizes = [8, 32], strides = [1, 1]} : vector<16x96xf32> to vector<8x32xf32>
    %245 = vector.extract_strided_slice %242 {offsets = [0, 0], sizes = [8, 8], strides = [1, 1]} : vector<8x32xf32> to vector<8x8xf32>
    %246 = vector.extract_strided_slice %243 {offsets = [0, 0], sizes = [8, 8], strides = [1, 1]} : vector<8x32xf32> to vector<8x8xf32>
    %cst_115 = arith.constant dense<0.000000e+00> : vector<8x8xf32>
    %247 = tpu.matmul %245, %246, %cst_115 {dimension_numbers = #tpu.dot_dimension_numbers<[1], [1], [0], [0], [0, 0, 1, 0], [], []>} : vector<8x8xf32>, vector<8x8xf32>, vector<8x8xf32> -> vector<8x8xf32>
    %248 = vector.broadcast %241 : vector<1x8xf32> to vector<8x8xf32>
    %249 = arith.addf %247, %248 : vector<8x8xf32>
    %cst_116 = arith.constant dense<0xFF800000> : vector<8xf32>
    %250 = vector.multi_reduction <maximumf>, %249, %cst_116 [1] : vector<8x8xf32> to vector<8xf32>
    %251 = vector.shape_cast %250 : vector<8xf32> to vector<8x1xf32>
    %252 = vector.broadcast %251 : vector<8x1xf32> to vector<8x8xf32>
    %253 = arith.subf %249, %252 : vector<8x8xf32>
    %254 = math.exp %253 : vector<8x8xf32>
    %cst_117 = arith.constant dense<0.000000e+00> : vector<8xf32>
    %255 = vector.multi_reduction <add>, %254, %cst_117 [1] : vector<8x8xf32> to vector<8xf32>
    %256 = vector.shape_cast %255 : vector<8xf32> to vector<8x1xf32>
    %257 = tpu.reciprocal %256 {approx = true} : vector<8x1xf32> -> vector<8x1xf32>
    %258 = vector.broadcast %257 : vector<8x1xf32> to vector<8x8xf32>
    %259 = arith.mulf %254, %258 : vector<8x8xf32>
    %260 = vector.extract_strided_slice %244 {offsets = [0, 0], sizes = [8, 8], strides = [1, 1]} : vector<8x32xf32> to vector<8x8xf32>
    %cst_118 = arith.constant dense<0.000000e+00> : vector<8x8xf32>
    %261 = tpu.matmul %259, %260, %cst_118 {dimension_numbers = #tpu.dot_dimension_numbers<[1], [0], [0], [1], [0, 0, 1, 1], [], []>} : vector<8x8xf32>, vector<8x8xf32>, vector<8x8xf32> -> vector<8x8xf32>
    %262 = vector.extract_strided_slice %242 {offsets = [0, 8], sizes = [8, 8], strides = [1, 1]} : vector<8x32xf32> to vector<8x8xf32>
    %263 = vector.extract_strided_slice %243 {offsets = [0, 8], sizes = [8, 8], strides = [1, 1]} : vector<8x32xf32> to vector<8x8xf32>
    %cst_119 = arith.constant dense<0.000000e+00> : vector<8x8xf32>
    %264 = tpu.matmul %262, %263, %cst_119 {dimension_numbers = #tpu.dot_dimension_numbers<[1], [1], [0], [0], [0, 0, 1, 0], [], []>} : vector<8x8xf32>, vector<8x8xf32>, vector<8x8xf32> -> vector<8x8xf32>
    %265 = vector.broadcast %241 : vector<1x8xf32> to vector<8x8xf32>
    %266 = arith.addf %264, %265 : vector<8x8xf32>
    %cst_120 = arith.constant dense<0xFF800000> : vector<8xf32>
    %267 = vector.multi_reduction <maximumf>, %266, %cst_120 [1] : vector<8x8xf32> to vector<8xf32>
    %268 = vector.shape_cast %267 : vector<8xf32> to vector<8x1xf32>
    %269 = vector.broadcast %268 : vector<8x1xf32> to vector<8x8xf32>
    %270 = arith.subf %266, %269 : vector<8x8xf32>
    %271 = math.exp %270 : vector<8x8xf32>
    %cst_121 = arith.constant dense<0.000000e+00> : vector<8xf32>
    %272 = vector.multi_reduction <add>, %271, %cst_121 [1] : vector<8x8xf32> to vector<8xf32>
    %273 = vector.shape_cast %272 : vector<8xf32> to vector<8x1xf32>
    %274 = tpu.reciprocal %273 {approx = true} : vector<8x1xf32> -> vector<8x1xf32>
    %275 = vector.broadcast %274 : vector<8x1xf32> to vector<8x8xf32>
    %276 = arith.mulf %271, %275 : vector<8x8xf32>
    %277 = vector.extract_strided_slice %244 {offsets = [0, 8], sizes = [8, 8], strides = [1, 1]} : vector<8x32xf32> to vector<8x8xf32>
    %cst_122 = arith.constant dense<0.000000e+00> : vector<8x8xf32>
    %278 = tpu.matmul %276, %277, %cst_122 {dimension_numbers = #tpu.dot_dimension_numbers<[1], [0], [0], [1], [0, 0, 1, 1], [], []>} : vector<8x8xf32>, vector<8x8xf32>, vector<8x8xf32> -> vector<8x8xf32>
    %279 = vector.extract_strided_slice %242 {offsets = [0, 16], sizes = [8, 8], strides = [1, 1]} : vector<8x32xf32> to vector<8x8xf32>
    %280 = vector.extract_strided_slice %243 {offsets = [0, 16], sizes = [8, 8], strides = [1, 1]} : vector<8x32xf32> to vector<8x8xf32>
    %cst_123 = arith.constant dense<0.000000e+00> : vector<8x8xf32>
    %281 = tpu.matmul %279, %280, %cst_123 {dimension_numbers = #tpu.dot_dimension_numbers<[1], [1], [0], [0], [0, 0, 1, 0], [], []>} : vector<8x8xf32>, vector<8x8xf32>, vector<8x8xf32> -> vector<8x8xf32>
    %282 = vector.broadcast %241 : vector<1x8xf32> to vector<8x8xf32>
    %283 = arith.addf %281, %282 : vector<8x8xf32>
    %cst_124 = arith.constant dense<0xFF800000> : vector<8xf32>
    %284 = vector.multi_reduction <maximumf>, %283, %cst_124 [1] : vector<8x8xf32> to vector<8xf32>
    %285 = vector.shape_cast %284 : vector<8xf32> to vector<8x1xf32>
    %286 = vector.broadcast %285 : vector<8x1xf32> to vector<8x8xf32>
    %287 = arith.subf %283, %286 : vector<8x8xf32>
    %288 = math.exp %287 : vector<8x8xf32>
    %cst_125 = arith.constant dense<0.000000e+00> : vector<8xf32>
    %289 = vector.multi_reduction <add>, %288, %cst_125 [1] : vector<8x8xf32> to vector<8xf32>
    %290 = vector.shape_cast %289 : vector<8xf32> to vector<8x1xf32>
    %291 = tpu.reciprocal %290 {approx = true} : vector<8x1xf32> -> vector<8x1xf32>
    %292 = vector.broadcast %291 : vector<8x1xf32> to vector<8x8xf32>
    %293 = arith.mulf %288, %292 : vector<8x8xf32>
    %294 = vector.extract_strided_slice %244 {offsets = [0, 16], sizes = [8, 8], strides = [1, 1]} : vector<8x32xf32> to vector<8x8xf32>
    %cst_126 = arith.constant dense<0.000000e+00> : vector<8x8xf32>
    %295 = tpu.matmul %293, %294, %cst_126 {dimension_numbers = #tpu.dot_dimension_numbers<[1], [0], [0], [1], [0, 0, 1, 1], [], []>} : vector<8x8xf32>, vector<8x8xf32>, vector<8x8xf32> -> vector<8x8xf32>
    %296 = vector.extract_strided_slice %242 {offsets = [0, 24], sizes = [8, 8], strides = [1, 1]} : vector<8x32xf32> to vector<8x8xf32>
    %297 = vector.extract_strided_slice %243 {offsets = [0, 24], sizes = [8, 8], strides = [1, 1]} : vector<8x32xf32> to vector<8x8xf32>
    %cst_127 = arith.constant dense<0.000000e+00> : vector<8x8xf32>
    %298 = tpu.matmul %296, %297, %cst_127 {dimension_numbers = #tpu.dot_dimension_numbers<[1], [1], [0], [0], [0, 0, 1, 0], [], []>} : vector<8x8xf32>, vector<8x8xf32>, vector<8x8xf32> -> vector<8x8xf32>
    %299 = vector.broadcast %241 : vector<1x8xf32> to vector<8x8xf32>
    %300 = arith.addf %298, %299 : vector<8x8xf32>
    %cst_128 = arith.constant dense<0xFF800000> : vector<8xf32>
    %301 = vector.multi_reduction <maximumf>, %300, %cst_128 [1] : vector<8x8xf32> to vector<8xf32>
    %302 = vector.shape_cast %301 : vector<8xf32> to vector<8x1xf32>
    %303 = vector.broadcast %302 : vector<8x1xf32> to vector<8x8xf32>
    %304 = arith.subf %300, %303 : vector<8x8xf32>
    %305 = math.exp %304 : vector<8x8xf32>
    %cst_129 = arith.constant dense<0.000000e+00> : vector<8xf32>
    %306 = vector.multi_reduction <add>, %305, %cst_129 [1] : vector<8x8xf32> to vector<8xf32>
    %307 = vector.shape_cast %306 : vector<8xf32> to vector<8x1xf32>
    %308 = tpu.reciprocal %307 {approx = true} : vector<8x1xf32> -> vector<8x1xf32>
    %309 = vector.broadcast %308 : vector<8x1xf32> to vector<8x8xf32>
    %310 = arith.mulf %305, %309 : vector<8x8xf32>
    %311 = vector.extract_strided_slice %244 {offsets = [0, 24], sizes = [8, 8], strides = [1, 1]} : vector<8x32xf32> to vector<8x8xf32>
    %cst_130 = arith.constant dense<0.000000e+00> : vector<8x8xf32>
    %312 = tpu.matmul %310, %311, %cst_130 {dimension_numbers = #tpu.dot_dimension_numbers<[1], [0], [0], [1], [0, 0, 1, 1], [], []>} : vector<8x8xf32>, vector<8x8xf32>, vector<8x8xf32> -> vector<8x8xf32>
    %313 = tpu.concatenate %261, %278, %295, %312 in 1 : vector<8x8xf32>, vector<8x8xf32>, vector<8x8xf32>, vector<8x8xf32> -> vector<8x32xf32>
    %c1_131 = arith.constant 1 : index
    %c0_132 = arith.constant 0 : index
    %c0_133 = arith.constant 0 : index
    %314 = vector.load %arg1[%c1_131, %c0_132, %c0_133] : memref<2x1x8xf32, #tpu.memory_space<vmem>>, vector<1x1x8xf32>
    %315 = vector.shape_cast %314 : vector<1x1x8xf32> to vector<1x8xf32>
    %cst_134 = arith.constant -1.000000e+09 : f32
    %316 = vector.broadcast %cst_134 : f32 to vector<1x8xf32>
    %317 = arith.mulf %315, %316 : vector<1x8xf32>
    %318 = vector.extract_strided_slice %237 {offsets = [8, 0], sizes = [8, 32], strides = [1, 1]} : vector<16x96xf32> to vector<8x32xf32>
    %319 = vector.extract_strided_slice %237 {offsets = [8, 32], sizes = [8, 32], strides = [1, 1]} : vector<16x96xf32> to vector<8x32xf32>
    %320 = vector.extract_strided_slice %237 {offsets = [8, 64], sizes = [8, 32], strides = [1, 1]} : vector<16x96xf32> to vector<8x32xf32>
    %321 = vector.extract_strided_slice %318 {offsets = [0, 0], sizes = [8, 8], strides = [1, 1]} : vector<8x32xf32> to vector<8x8xf32>
    %322 = vector.extract_strided_slice %319 {offsets = [0, 0], sizes = [8, 8], strides = [1, 1]} : vector<8x32xf32> to vector<8x8xf32>
    %cst_135 = arith.constant dense<0.000000e+00> : vector<8x8xf32>
    %323 = tpu.matmul %321, %322, %cst_135 {dimension_numbers = #tpu.dot_dimension_numbers<[1], [1], [0], [0], [0, 0, 1, 0], [], []>} : vector<8x8xf32>, vector<8x8xf32>, vector<8x8xf32> -> vector<8x8xf32>
    %324 = vector.broadcast %317 : vector<1x8xf32> to vector<8x8xf32>
    %325 = arith.addf %323, %324 : vector<8x8xf32>
    %cst_136 = arith.constant dense<0xFF800000> : vector<8xf32>
    %326 = vector.multi_reduction <maximumf>, %325, %cst_136 [1] : vector<8x8xf32> to vector<8xf32>
    %327 = vector.shape_cast %326 : vector<8xf32> to vector<8x1xf32>
    %328 = vector.broadcast %327 : vector<8x1xf32> to vector<8x8xf32>
    %329 = arith.subf %325, %328 : vector<8x8xf32>
    %330 = math.exp %329 : vector<8x8xf32>
    %cst_137 = arith.constant dense<0.000000e+00> : vector<8xf32>
    %331 = vector.multi_reduction <add>, %330, %cst_137 [1] : vector<8x8xf32> to vector<8xf32>
    %332 = vector.shape_cast %331 : vector<8xf32> to vector<8x1xf32>
    %333 = tpu.reciprocal %332 {approx = true} : vector<8x1xf32> -> vector<8x1xf32>
    %334 = vector.broadcast %333 : vector<8x1xf32> to vector<8x8xf32>
    %335 = arith.mulf %330, %334 : vector<8x8xf32>
    %336 = vector.extract_strided_slice %320 {offsets = [0, 0], sizes = [8, 8], strides = [1, 1]} : vector<8x32xf32> to vector<8x8xf32>
    %cst_138 = arith.constant dense<0.000000e+00> : vector<8x8xf32>
    %337 = tpu.matmul %335, %336, %cst_138 {dimension_numbers = #tpu.dot_dimension_numbers<[1], [0], [0], [1], [0, 0, 1, 1], [], []>} : vector<8x8xf32>, vector<8x8xf32>, vector<8x8xf32> -> vector<8x8xf32>
    %338 = vector.extract_strided_slice %318 {offsets = [0, 8], sizes = [8, 8], strides = [1, 1]} : vector<8x32xf32> to vector<8x8xf32>
    %339 = vector.extract_strided_slice %319 {offsets = [0, 8], sizes = [8, 8], strides = [1, 1]} : vector<8x32xf32> to vector<8x8xf32>
    %cst_139 = arith.constant dense<0.000000e+00> : vector<8x8xf32>
    %340 = tpu.matmul %338, %339, %cst_139 {dimension_numbers = #tpu.dot_dimension_numbers<[1], [1], [0], [0], [0, 0, 1, 0], [], []>} : vector<8x8xf32>, vector<8x8xf32>, vector<8x8xf32> -> vector<8x8xf32>
    %341 = vector.broadcast %317 : vector<1x8xf32> to vector<8x8xf32>
    %342 = arith.addf %340, %341 : vector<8x8xf32>
    %cst_140 = arith.constant dense<0xFF800000> : vector<8xf32>
    %343 = vector.multi_reduction <maximumf>, %342, %cst_140 [1] : vector<8x8xf32> to vector<8xf32>
    %344 = vector.shape_cast %343 : vector<8xf32> to vector<8x1xf32>
    %345 = vector.broadcast %344 : vector<8x1xf32> to vector<8x8xf32>
    %346 = arith.subf %342, %345 : vector<8x8xf32>
    %347 = math.exp %346 : vector<8x8xf32>
    %cst_141 = arith.constant dense<0.000000e+00> : vector<8xf32>
    %348 = vector.multi_reduction <add>, %347, %cst_141 [1] : vector<8x8xf32> to vector<8xf32>
    %349 = vector.shape_cast %348 : vector<8xf32> to vector<8x1xf32>
    %350 = tpu.reciprocal %349 {approx = true} : vector<8x1xf32> -> vector<8x1xf32>
    %351 = vector.broadcast %350 : vector<8x1xf32> to vector<8x8xf32>
    %352 = arith.mulf %347, %351 : vector<8x8xf32>
    %353 = vector.extract_strided_slice %320 {offsets = [0, 8], sizes = [8, 8], strides = [1, 1]} : vector<8x32xf32> to vector<8x8xf32>
    %cst_142 = arith.constant dense<0.000000e+00> : vector<8x8xf32>
    %354 = tpu.matmul %352, %353, %cst_142 {dimension_numbers = #tpu.dot_dimension_numbers<[1], [0], [0], [1], [0, 0, 1, 1], [], []>} : vector<8x8xf32>, vector<8x8xf32>, vector<8x8xf32> -> vector<8x8xf32>
    %355 = vector.extract_strided_slice %318 {offsets = [0, 16], sizes = [8, 8], strides = [1, 1]} : vector<8x32xf32> to vector<8x8xf32>
    %356 = vector.extract_strided_slice %319 {offsets = [0, 16], sizes = [8, 8], strides = [1, 1]} : vector<8x32xf32> to vector<8x8xf32>
    %cst_143 = arith.constant dense<0.000000e+00> : vector<8x8xf32>
    %357 = tpu.matmul %355, %356, %cst_143 {dimension_numbers = #tpu.dot_dimension_numbers<[1], [1], [0], [0], [0, 0, 1, 0], [], []>} : vector<8x8xf32>, vector<8x8xf32>, vector<8x8xf32> -> vector<8x8xf32>
    %358 = vector.broadcast %317 : vector<1x8xf32> to vector<8x8xf32>
    %359 = arith.addf %357, %358 : vector<8x8xf32>
    %cst_144 = arith.constant dense<0xFF800000> : vector<8xf32>
    %360 = vector.multi_reduction <maximumf>, %359, %cst_144 [1] : vector<8x8xf32> to vector<8xf32>
    %361 = vector.shape_cast %360 : vector<8xf32> to vector<8x1xf32>
    %362 = vector.broadcast %361 : vector<8x1xf32> to vector<8x8xf32>
    %363 = arith.subf %359, %362 : vector<8x8xf32>
    %364 = math.exp %363 : vector<8x8xf32>
    %cst_145 = arith.constant dense<0.000000e+00> : vector<8xf32>
    %365 = vector.multi_reduction <add>, %364, %cst_145 [1] : vector<8x8xf32> to vector<8xf32>
    %366 = vector.shape_cast %365 : vector<8xf32> to vector<8x1xf32>
    %367 = tpu.reciprocal %366 {approx = true} : vector<8x1xf32> -> vector<8x1xf32>
    %368 = vector.broadcast %367 : vector<8x1xf32> to vector<8x8xf32>
    %369 = arith.mulf %364, %368 : vector<8x8xf32>
    %370 = vector.extract_strided_slice %320 {offsets = [0, 16], sizes = [8, 8], strides = [1, 1]} : vector<8x32xf32> to vector<8x8xf32>
    %cst_146 = arith.constant dense<0.000000e+00> : vector<8x8xf32>
    %371 = tpu.matmul %369, %370, %cst_146 {dimension_numbers = #tpu.dot_dimension_numbers<[1], [0], [0], [1], [0, 0, 1, 1], [], []>} : vector<8x8xf32>, vector<8x8xf32>, vector<8x8xf32> -> vector<8x8xf32>
    %372 = vector.extract_strided_slice %318 {offsets = [0, 24], sizes = [8, 8], strides = [1, 1]} : vector<8x32xf32> to vector<8x8xf32>
    %373 = vector.extract_strided_slice %319 {offsets = [0, 24], sizes = [8, 8], strides = [1, 1]} : vector<8x32xf32> to vector<8x8xf32>
    %cst_147 = arith.constant dense<0.000000e+00> : vector<8x8xf32>
    %374 = tpu.matmul %372, %373, %cst_147 {dimension_numbers = #tpu.dot_dimension_numbers<[1], [1], [0], [0], [0, 0, 1, 0], [], []>} : vector<8x8xf32>, vector<8x8xf32>, vector<8x8xf32> -> vector<8x8xf32>
    %375 = vector.broadcast %317 : vector<1x8xf32> to vector<8x8xf32>
    %376 = arith.addf %374, %375 : vector<8x8xf32>
    %cst_148 = arith.constant dense<0xFF800000> : vector<8xf32>
    %377 = vector.multi_reduction <maximumf>, %376, %cst_148 [1] : vector<8x8xf32> to vector<8xf32>
    %378 = vector.shape_cast %377 : vector<8xf32> to vector<8x1xf32>
    %379 = vector.broadcast %378 : vector<8x1xf32> to vector<8x8xf32>
    %380 = arith.subf %376, %379 : vector<8x8xf32>
    %381 = math.exp %380 : vector<8x8xf32>
    %cst_149 = arith.constant dense<0.000000e+00> : vector<8xf32>
    %382 = vector.multi_reduction <add>, %381, %cst_149 [1] : vector<8x8xf32> to vector<8xf32>
    %383 = vector.shape_cast %382 : vector<8xf32> to vector<8x1xf32>
    %384 = tpu.reciprocal %383 {approx = true} : vector<8x1xf32> -> vector<8x1xf32>
    %385 = vector.broadcast %384 : vector<8x1xf32> to vector<8x8xf32>
    %386 = arith.mulf %381, %385 : vector<8x8xf32>
    %387 = vector.extract_strided_slice %320 {offsets = [0, 24], sizes = [8, 8], strides = [1, 1]} : vector<8x32xf32> to vector<8x8xf32>
    %cst_150 = arith.constant dense<0.000000e+00> : vector<8x8xf32>
    %388 = tpu.matmul %386, %387, %cst_150 {dimension_numbers = #tpu.dot_dimension_numbers<[1], [0], [0], [1], [0, 0, 1, 1], [], []>} : vector<8x8xf32>, vector<8x8xf32>, vector<8x8xf32> -> vector<8x8xf32>
    %389 = tpu.concatenate %337, %354, %371, %388 in 1 : vector<8x8xf32>, vector<8x8xf32>, vector<8x8xf32>, vector<8x8xf32> -> vector<8x32xf32>
    %390 = tpu.concatenate %313, %389 in 0 : vector<8x32xf32>, vector<8x32xf32> -> vector<16x32xf32>
    %c0_151 = arith.constant 0 : index
    %c0_152 = arith.constant 0 : index
    %c0_153 = arith.constant 0 : index
    %391 = vector.load %arg7[%c0_151, %c0_152, %c0_153] : memref<2x32x32xf32, #tpu.memory_space<vmem>>, vector<1x32x32xf32>
    %392 = vector.shape_cast %391 : vector<1x32x32xf32> to vector<32x32xf32>
    %cst_154 = arith.constant dense<0.000000e+00> : vector<16x32xf32>
    %393 = tpu.matmul %390, %392, %cst_154 {dimension_numbers = #tpu.dot_dimension_numbers<[1], [0], [0], [1], [0, 0, 1, 1], [], []>} : vector<16x32xf32>, vector<32x32xf32>, vector<16x32xf32> -> vector<16x32xf32>
    %394 = arith.addf %230, %393 : vector<16x32xf32>
    %395 = vector.extract_strided_slice %2 {offsets = [8, 0], sizes = [1, 32], strides = [1, 1]} : vector<11x32xf32> to vector<1x32xf32>
    %396 = vector.broadcast %395 : vector<1x32xf32> to vector<16x32xf32>
    %397 = arith.addf %394, %396 : vector<16x32xf32>
    %398 = vector.extract_strided_slice %2 {offsets = [6, 0], sizes = [1, 32], strides = [1, 1]} : vector<11x32xf32> to vector<1x32xf32>
    %399 = vector.extract_strided_slice %2 {offsets = [7, 0], sizes = [1, 32], strides = [1, 1]} : vector<11x32xf32> to vector<1x32xf32>
    %cst_155 = arith.constant dense<0.000000e+00> : vector<16xf32>
    %400 = vector.multi_reduction <add>, %397, %cst_155 [1] : vector<16x32xf32> to vector<16xf32>
    %401 = vector.shape_cast %400 : vector<16xf32> to vector<16x1xf32>
    %cst_156 = arith.constant 3.200000e+01 : f32
    %402 = vector.broadcast %cst_156 : f32 to vector<16x1xf32>
    %403 = arith.divf %401, %402 : vector<16x1xf32>
    %404 = vector.broadcast %403 : vector<16x1xf32> to vector<16x32xf32>
    %405 = arith.subf %397, %404 : vector<16x32xf32>
    %406 = arith.mulf %405, %405 : vector<16x32xf32>
    %cst_157 = arith.constant dense<0.000000e+00> : vector<16xf32>
    %407 = vector.multi_reduction <add>, %406, %cst_157 [1] : vector<16x32xf32> to vector<16xf32>
    %408 = vector.shape_cast %407 : vector<16xf32> to vector<16x1xf32>
    %cst_158 = arith.constant 3.200000e+01 : f32
    %409 = vector.broadcast %cst_158 : f32 to vector<16x1xf32>
    %410 = arith.divf %408, %409 : vector<16x1xf32>
    %411 = vector.broadcast %403 : vector<16x1xf32> to vector<16x32xf32>
    %412 = arith.subf %397, %411 : vector<16x32xf32>
    %cst_159 = arith.constant 9.99999974E-6 : f32
    %413 = vector.broadcast %cst_159 : f32 to vector<16x1xf32>
    %414 = arith.addf %410, %413 : vector<16x1xf32>
    %415 = math.rsqrt %414 : vector<16x1xf32>
    %416 = vector.broadcast %415 : vector<16x1xf32> to vector<16x32xf32>
    %417 = arith.mulf %412, %416 : vector<16x32xf32>
    %418 = vector.broadcast %398 : vector<1x32xf32> to vector<16x32xf32>
    %419 = arith.mulf %417, %418 : vector<16x32xf32>
    %420 = vector.broadcast %399 : vector<1x32xf32> to vector<16x32xf32>
    %421 = arith.addf %419, %420 : vector<16x32xf32>
    %c7_160 = arith.constant 7 : index
    %c0_161 = arith.constant 0 : index
    %c0_162 = arith.constant 0 : index
    %422 = vector.load %arg4[%c7_160, %c0_161, %c0_162] : memref<16x32x64xf32, #tpu.memory_space<vmem>>, vector<1x32x64xf32>
    %423 = vector.shape_cast %422 : vector<1x32x64xf32> to vector<32x64xf32>
    %cst_163 = arith.constant dense<0.000000e+00> : vector<16x64xf32>
    %424 = tpu.matmul %421, %423, %cst_163 {dimension_numbers = #tpu.dot_dimension_numbers<[1], [0], [0], [1], [0, 0, 1, 1], [], []>} : vector<16x32xf32>, vector<32x64xf32>, vector<16x64xf32> -> vector<16x64xf32>
    %425 = vector.extract_strided_slice %4 {offsets = [6, 0], sizes = [1, 64], strides = [1, 1]} : vector<7x64xf32> to vector<1x64xf32>
    %426 = vector.broadcast %425 : vector<1x64xf32> to vector<16x64xf32>
    %427 = arith.addf %424, %426 : vector<16x64xf32>
    %428 = arith.negf %427 : vector<16x64xf32>
    %429 = math.exp %428 : vector<16x64xf32>
    %cst_164 = arith.constant 1.000000e+00 : f32
    %430 = vector.broadcast %cst_164 : f32 to vector<16x64xf32>
    %431 = arith.addf %430, %429 : vector<16x64xf32>
    %432 = arith.divf %430, %431 : vector<16x64xf32>
    %433 = arith.mulf %427, %432 : vector<16x64xf32>
    %c1_165 = arith.constant 1 : index
    %c0_166 = arith.constant 0 : index
    %c0_167 = arith.constant 0 : index
    %434 = vector.load %arg5[%c1_165, %c0_166, %c0_167] : memref<4x64x32xf32, #tpu.memory_space<vmem>>, vector<1x64x32xf32>
    %435 = vector.shape_cast %434 : vector<1x64x32xf32> to vector<64x32xf32>
    %cst_168 = arith.constant dense<0.000000e+00> : vector<16x32xf32>
    %436 = tpu.matmul %433, %435, %cst_168 {dimension_numbers = #tpu.dot_dimension_numbers<[1], [0], [0], [1], [0, 0, 1, 1], [], []>} : vector<16x64xf32>, vector<64x32xf32>, vector<16x32xf32> -> vector<16x32xf32>
    %437 = vector.extract_strided_slice %2 {offsets = [10, 0], sizes = [1, 32], strides = [1, 1]} : vector<11x32xf32> to vector<1x32xf32>
    %438 = vector.broadcast %437 : vector<1x32xf32> to vector<16x32xf32>
    %439 = arith.addf %436, %438 : vector<16x32xf32>
    %440 = arith.addf %439, %397 : vector<16x32xf32>
    %c1_169 = arith.constant 1 : index
    %c0_170 = arith.constant 0 : index
    %c0_171 = arith.constant 0 : index
    %441 = vector.load %arg9[%c1_169, %c0_170, %c0_171] : memref<2x11x32xf32, #tpu.memory_space<vmem>>, vector<1x11x32xf32>
    %442 = vector.shape_cast %441 : vector<1x11x32xf32> to vector<11x32xf32>
    %c1_172 = arith.constant 1 : index
    %c0_173 = arith.constant 0 : index
    %c0_174 = arith.constant 0 : index
    %443 = vector.load %arg10[%c1_172, %c0_173, %c0_174] : memref<2x7x64xf32, #tpu.memory_space<vmem>>, vector<1x7x64xf32>
    %444 = vector.shape_cast %443 : vector<1x7x64xf32> to vector<7x64xf32>
    %445 = vector.extract_strided_slice %442 {offsets = [0, 0], sizes = [1, 32], strides = [1, 1]} : vector<11x32xf32> to vector<1x32xf32>
    %446 = vector.extract_strided_slice %442 {offsets = [1, 0], sizes = [1, 32], strides = [1, 1]} : vector<11x32xf32> to vector<1x32xf32>
    %cst_175 = arith.constant dense<0.000000e+00> : vector<16xf32>
    %447 = vector.multi_reduction <add>, %440, %cst_175 [1] : vector<16x32xf32> to vector<16xf32>
    %448 = vector.shape_cast %447 : vector<16xf32> to vector<16x1xf32>
    %cst_176 = arith.constant 3.200000e+01 : f32
    %449 = vector.broadcast %cst_176 : f32 to vector<16x1xf32>
    %450 = arith.divf %448, %449 : vector<16x1xf32>
    %451 = vector.broadcast %450 : vector<16x1xf32> to vector<16x32xf32>
    %452 = arith.subf %440, %451 : vector<16x32xf32>
    %453 = arith.mulf %452, %452 : vector<16x32xf32>
    %cst_177 = arith.constant dense<0.000000e+00> : vector<16xf32>
    %454 = vector.multi_reduction <add>, %453, %cst_177 [1] : vector<16x32xf32> to vector<16xf32>
    %455 = vector.shape_cast %454 : vector<16xf32> to vector<16x1xf32>
    %cst_178 = arith.constant 3.200000e+01 : f32
    %456 = vector.broadcast %cst_178 : f32 to vector<16x1xf32>
    %457 = arith.divf %455, %456 : vector<16x1xf32>
    %458 = vector.broadcast %450 : vector<16x1xf32> to vector<16x32xf32>
    %459 = arith.subf %440, %458 : vector<16x32xf32>
    %cst_179 = arith.constant 9.99999974E-6 : f32
    %460 = vector.broadcast %cst_179 : f32 to vector<16x1xf32>
    %461 = arith.addf %457, %460 : vector<16x1xf32>
    %462 = math.rsqrt %461 : vector<16x1xf32>
    %463 = vector.broadcast %462 : vector<16x1xf32> to vector<16x32xf32>
    %464 = arith.mulf %459, %463 : vector<16x32xf32>
    %465 = vector.broadcast %445 : vector<1x32xf32> to vector<16x32xf32>
    %466 = arith.mulf %464, %465 : vector<16x32xf32>
    %467 = vector.broadcast %446 : vector<1x32xf32> to vector<16x32xf32>
    %468 = arith.addf %466, %467 : vector<16x32xf32>
    %c3_180 = arith.constant 3 : index
    %c0_181 = arith.constant 0 : index
    %c0_182 = arith.constant 0 : index
    %469 = vector.load %arg3[%c3_180, %c0_181, %c0_182] : memref<9x16x16xf32, #tpu.memory_space<vmem>>, vector<1x16x16xf32>
    %470 = vector.shape_cast %469 : vector<1x16x16xf32> to vector<16x16xf32>
    %cst_183 = arith.constant dense<0.000000e+00> : vector<16x32xf32>
    %471 = tpu.matmul %470, %468, %cst_183 {dimension_numbers = #tpu.dot_dimension_numbers<[1], [0], [0], [1], [0, 0, 1, 1], [], []>} : vector<16x16xf32>, vector<16x32xf32>, vector<16x32xf32> -> vector<16x32xf32>
    %c8_184 = arith.constant 8 : index
    %c0_185 = arith.constant 0 : index
    %c0_186 = arith.constant 0 : index
    %472 = vector.load %arg4[%c8_184, %c0_185, %c0_186] : memref<16x32x64xf32, #tpu.memory_space<vmem>>, vector<1x32x64xf32>
    %473 = vector.shape_cast %472 : vector<1x32x64xf32> to vector<32x64xf32>
    %cst_187 = arith.constant dense<0.000000e+00> : vector<16x64xf32>
    %474 = tpu.matmul %471, %473, %cst_187 {dimension_numbers = #tpu.dot_dimension_numbers<[1], [0], [0], [1], [0, 0, 1, 1], [], []>} : vector<16x32xf32>, vector<32x64xf32>, vector<16x64xf32> -> vector<16x64xf32>
    %c9 = arith.constant 9 : index
    %c0_188 = arith.constant 0 : index
    %c0_189 = arith.constant 0 : index
    %475 = vector.load %arg4[%c9, %c0_188, %c0_189] : memref<16x32x64xf32, #tpu.memory_space<vmem>>, vector<1x32x64xf32>
    %476 = vector.shape_cast %475 : vector<1x32x64xf32> to vector<32x64xf32>
    %cst_190 = arith.constant dense<0.000000e+00> : vector<16x64xf32>
    %477 = tpu.matmul %468, %476, %cst_190 {dimension_numbers = #tpu.dot_dimension_numbers<[1], [0], [0], [1], [0, 0, 1, 1], [], []>} : vector<16x32xf32>, vector<32x64xf32>, vector<16x64xf32> -> vector<16x64xf32>
    %478 = arith.addf %474, %477 : vector<16x64xf32>
    %c5_191 = arith.constant 5 : index
    %c0_192 = arith.constant 0 : index
    %c0_193 = arith.constant 0 : index
    %479 = vector.load %arg3[%c5_191, %c0_192, %c0_193] : memref<9x16x16xf32, #tpu.memory_space<vmem>>, vector<1x16x16xf32>
    %480 = vector.shape_cast %479 : vector<1x16x16xf32> to vector<16x16xf32>
    %cst_194 = arith.constant dense<0.000000e+00> : vector<16x32xf32>
    %481 = tpu.matmul %480, %468, %cst_194 {dimension_numbers = #tpu.dot_dimension_numbers<[1], [0], [0], [1], [0, 0, 1, 1], [], []>} : vector<16x16xf32>, vector<16x32xf32>, vector<16x32xf32> -> vector<16x32xf32>
    %c10 = arith.constant 10 : index
    %c0_195 = arith.constant 0 : index
    %c0_196 = arith.constant 0 : index
    %482 = vector.load %arg4[%c10, %c0_195, %c0_196] : memref<16x32x64xf32, #tpu.memory_space<vmem>>, vector<1x32x64xf32>
    %483 = vector.shape_cast %482 : vector<1x32x64xf32> to vector<32x64xf32>
    %cst_197 = arith.constant dense<0.000000e+00> : vector<16x64xf32>
    %484 = tpu.matmul %481, %483, %cst_197 {dimension_numbers = #tpu.dot_dimension_numbers<[1], [0], [0], [1], [0, 0, 1, 1], [], []>} : vector<16x32xf32>, vector<32x64xf32>, vector<16x64xf32> -> vector<16x64xf32>
    %485 = arith.addf %478, %484 : vector<16x64xf32>
    %486 = vector.extract_strided_slice %444 {offsets = [0, 0], sizes = [1, 64], strides = [1, 1]} : vector<7x64xf32> to vector<1x64xf32>
    %487 = vector.broadcast %486 : vector<1x64xf32> to vector<16x64xf32>
    %488 = arith.addf %485, %487 : vector<16x64xf32>
    %489 = vector.extract_strided_slice %488 {offsets = [0, 0], sizes = [16, 32], strides = [1, 1]} : vector<16x64xf32> to vector<16x32xf32>
    %490 = vector.extract_strided_slice %488 {offsets = [0, 32], sizes = [16, 32], strides = [1, 1]} : vector<16x64xf32> to vector<16x32xf32>
    %491 = arith.negf %490 : vector<16x32xf32>
    %492 = math.exp %491 : vector<16x32xf32>
    %cst_198 = arith.constant 1.000000e+00 : f32
    %493 = vector.broadcast %cst_198 : f32 to vector<16x32xf32>
    %494 = arith.addf %493, %492 : vector<16x32xf32>
    %495 = arith.divf %493, %494 : vector<16x32xf32>
    %496 = arith.mulf %489, %495 : vector<16x32xf32>
    %497 = vector.extract_strided_slice %442 {offsets = [2, 0], sizes = [1, 32], strides = [1, 1]} : vector<11x32xf32> to vector<1x32xf32>
    %498 = vector.extract_strided_slice %442 {offsets = [3, 0], sizes = [1, 32], strides = [1, 1]} : vector<11x32xf32> to vector<1x32xf32>
    %cst_199 = arith.constant dense<0.000000e+00> : vector<16xf32>
    %499 = vector.multi_reduction <add>, %496, %cst_199 [1] : vector<16x32xf32> to vector<16xf32>
    %500 = vector.shape_cast %499 : vector<16xf32> to vector<16x1xf32>
    %cst_200 = arith.constant 3.200000e+01 : f32
    %501 = vector.broadcast %cst_200 : f32 to vector<16x1xf32>
    %502 = arith.divf %500, %501 : vector<16x1xf32>
    %503 = vector.broadcast %502 : vector<16x1xf32> to vector<16x32xf32>
    %504 = arith.subf %496, %503 : vector<16x32xf32>
    %505 = arith.mulf %504, %504 : vector<16x32xf32>
    %cst_201 = arith.constant dense<0.000000e+00> : vector<16xf32>
    %506 = vector.multi_reduction <add>, %505, %cst_201 [1] : vector<16x32xf32> to vector<16xf32>
    %507 = vector.shape_cast %506 : vector<16xf32> to vector<16x1xf32>
    %cst_202 = arith.constant 3.200000e+01 : f32
    %508 = vector.broadcast %cst_202 : f32 to vector<16x1xf32>
    %509 = arith.divf %507, %508 : vector<16x1xf32>
    %510 = vector.broadcast %502 : vector<16x1xf32> to vector<16x32xf32>
    %511 = arith.subf %496, %510 : vector<16x32xf32>
    %cst_203 = arith.constant 9.99999974E-6 : f32
    %512 = vector.broadcast %cst_203 : f32 to vector<16x1xf32>
    %513 = arith.addf %509, %512 : vector<16x1xf32>
    %514 = math.rsqrt %513 : vector<16x1xf32>
    %515 = vector.broadcast %514 : vector<16x1xf32> to vector<16x32xf32>
    %516 = arith.mulf %511, %515 : vector<16x32xf32>
    %517 = vector.broadcast %497 : vector<1x32xf32> to vector<16x32xf32>
    %518 = arith.mulf %516, %517 : vector<16x32xf32>
    %519 = vector.broadcast %498 : vector<1x32xf32> to vector<16x32xf32>
    %520 = arith.addf %518, %519 : vector<16x32xf32>
    %c14 = arith.constant 14 : index
    %c0_204 = arith.constant 0 : index
    %c0_205 = arith.constant 0 : index
    %521 = vector.load %arg4[%c14, %c0_204, %c0_205] : memref<16x32x64xf32, #tpu.memory_space<vmem>>, vector<1x32x64xf32>
    %522 = vector.shape_cast %521 : vector<1x32x64xf32> to vector<32x64xf32>
    %cst_206 = arith.constant dense<0.000000e+00> : vector<16x64xf32>
    %523 = tpu.matmul %520, %522, %cst_206 {dimension_numbers = #tpu.dot_dimension_numbers<[1], [0], [0], [1], [0, 0, 1, 1], [], []>} : vector<16x32xf32>, vector<32x64xf32>, vector<16x64xf32> -> vector<16x64xf32>
    %524 = vector.extract_strided_slice %444 {offsets = [1, 0], sizes = [1, 64], strides = [1, 1]} : vector<7x64xf32> to vector<1x64xf32>
    %525 = vector.broadcast %524 : vector<1x64xf32> to vector<16x64xf32>
    %526 = arith.addf %523, %525 : vector<16x64xf32>
    %cst_207 = arith.constant 0.000000e+00 : f32
    %527 = vector.broadcast %cst_207 : f32 to vector<16x64xf32>
    %528 = arith.maximumf %526, %527 : vector<16x64xf32>
    %c3_208 = arith.constant 3 : index
    %c0_209 = arith.constant 0 : index
    %c0_210 = arith.constant 0 : index
    %529 = vector.load %arg3[%c3_208, %c0_209, %c0_210] : memref<9x16x16xf32, #tpu.memory_space<vmem>>, vector<1x16x16xf32>
    %530 = vector.shape_cast %529 : vector<1x16x16xf32> to vector<16x16xf32>
    %cst_211 = arith.constant dense<0.000000e+00> : vector<16x32xf32>
    %531 = tpu.matmul %530, %520, %cst_211 {dimension_numbers = #tpu.dot_dimension_numbers<[1], [0], [0], [1], [0, 0, 1, 1], [], []>} : vector<16x16xf32>, vector<16x32xf32>, vector<16x32xf32> -> vector<16x32xf32>
    %c11 = arith.constant 11 : index
    %c0_212 = arith.constant 0 : index
    %c0_213 = arith.constant 0 : index
    %532 = vector.load %arg4[%c11, %c0_212, %c0_213] : memref<16x32x64xf32, #tpu.memory_space<vmem>>, vector<1x32x64xf32>
    %533 = vector.shape_cast %532 : vector<1x32x64xf32> to vector<32x64xf32>
    %cst_214 = arith.constant dense<0.000000e+00> : vector<16x64xf32>
    %534 = tpu.matmul %531, %533, %cst_214 {dimension_numbers = #tpu.dot_dimension_numbers<[1], [0], [0], [1], [0, 0, 1, 1], [], []>} : vector<16x32xf32>, vector<32x64xf32>, vector<16x64xf32> -> vector<16x64xf32>
    %c12 = arith.constant 12 : index
    %c0_215 = arith.constant 0 : index
    %c0_216 = arith.constant 0 : index
    %535 = vector.load %arg4[%c12, %c0_215, %c0_216] : memref<16x32x64xf32, #tpu.memory_space<vmem>>, vector<1x32x64xf32>
    %536 = vector.shape_cast %535 : vector<1x32x64xf32> to vector<32x64xf32>
    %cst_217 = arith.constant dense<0.000000e+00> : vector<16x64xf32>
    %537 = tpu.matmul %520, %536, %cst_217 {dimension_numbers = #tpu.dot_dimension_numbers<[1], [0], [0], [1], [0, 0, 1, 1], [], []>} : vector<16x32xf32>, vector<32x64xf32>, vector<16x64xf32> -> vector<16x64xf32>
    %538 = arith.addf %534, %537 : vector<16x64xf32>
    %c5_218 = arith.constant 5 : index
    %c0_219 = arith.constant 0 : index
    %c0_220 = arith.constant 0 : index
    %539 = vector.load %arg3[%c5_218, %c0_219, %c0_220] : memref<9x16x16xf32, #tpu.memory_space<vmem>>, vector<1x16x16xf32>
    %540 = vector.shape_cast %539 : vector<1x16x16xf32> to vector<16x16xf32>
    %cst_221 = arith.constant dense<0.000000e+00> : vector<16x32xf32>
    %541 = tpu.matmul %540, %520, %cst_221 {dimension_numbers = #tpu.dot_dimension_numbers<[1], [0], [0], [1], [0, 0, 1, 1], [], []>} : vector<16x16xf32>, vector<16x32xf32>, vector<16x32xf32> -> vector<16x32xf32>
    %c13 = arith.constant 13 : index
    %c0_222 = arith.constant 0 : index
    %c0_223 = arith.constant 0 : index
    %542 = vector.load %arg4[%c13, %c0_222, %c0_223] : memref<16x32x64xf32, #tpu.memory_space<vmem>>, vector<1x32x64xf32>
    %543 = vector.shape_cast %542 : vector<1x32x64xf32> to vector<32x64xf32>
    %cst_224 = arith.constant dense<0.000000e+00> : vector<16x64xf32>
    %544 = tpu.matmul %541, %543, %cst_224 {dimension_numbers = #tpu.dot_dimension_numbers<[1], [0], [0], [1], [0, 0, 1, 1], [], []>} : vector<16x32xf32>, vector<32x64xf32>, vector<16x64xf32> -> vector<16x64xf32>
    %545 = arith.addf %538, %544 : vector<16x64xf32>
    %546 = vector.extract_strided_slice %444 {offsets = [2, 0], sizes = [1, 64], strides = [1, 1]} : vector<7x64xf32> to vector<1x64xf32>
    %547 = vector.broadcast %546 : vector<1x64xf32> to vector<16x64xf32>
    %548 = arith.addf %545, %547 : vector<16x64xf32>
    %cst_225 = arith.constant 0.000000e+00 : f32
    %549 = vector.broadcast %cst_225 : f32 to vector<16x64xf32>
    %550 = arith.maximumf %548, %549 : vector<16x64xf32>
    %551 = arith.addf %528, %550 : vector<16x64xf32>
    %552 = vector.extract_strided_slice %444 {offsets = [3, 0], sizes = [1, 64], strides = [1, 1]} : vector<7x64xf32> to vector<1x64xf32>
    %553 = vector.extract_strided_slice %444 {offsets = [4, 0], sizes = [1, 64], strides = [1, 1]} : vector<7x64xf32> to vector<1x64xf32>
    %cst_226 = arith.constant dense<0.000000e+00> : vector<16xf32>
    %554 = vector.multi_reduction <add>, %551, %cst_226 [1] : vector<16x64xf32> to vector<16xf32>
    %555 = vector.shape_cast %554 : vector<16xf32> to vector<16x1xf32>
    %cst_227 = arith.constant 6.400000e+01 : f32
    %556 = vector.broadcast %cst_227 : f32 to vector<16x1xf32>
    %557 = arith.divf %555, %556 : vector<16x1xf32>
    %558 = vector.broadcast %557 : vector<16x1xf32> to vector<16x64xf32>
    %559 = arith.subf %551, %558 : vector<16x64xf32>
    %560 = arith.mulf %559, %559 : vector<16x64xf32>
    %cst_228 = arith.constant dense<0.000000e+00> : vector<16xf32>
    %561 = vector.multi_reduction <add>, %560, %cst_228 [1] : vector<16x64xf32> to vector<16xf32>
    %562 = vector.shape_cast %561 : vector<16xf32> to vector<16x1xf32>
    %cst_229 = arith.constant 6.400000e+01 : f32
    %563 = vector.broadcast %cst_229 : f32 to vector<16x1xf32>
    %564 = arith.divf %562, %563 : vector<16x1xf32>
    %565 = vector.broadcast %557 : vector<16x1xf32> to vector<16x64xf32>
    %566 = arith.subf %551, %565 : vector<16x64xf32>
    %cst_230 = arith.constant 9.99999974E-6 : f32
    %567 = vector.broadcast %cst_230 : f32 to vector<16x1xf32>
    %568 = arith.addf %564, %567 : vector<16x1xf32>
    %569 = math.rsqrt %568 : vector<16x1xf32>
    %570 = vector.broadcast %569 : vector<16x1xf32> to vector<16x64xf32>
    %571 = arith.mulf %566, %570 : vector<16x64xf32>
    %572 = vector.broadcast %552 : vector<1x64xf32> to vector<16x64xf32>
    %573 = arith.mulf %571, %572 : vector<16x64xf32>
    %574 = vector.broadcast %553 : vector<1x64xf32> to vector<16x64xf32>
    %575 = arith.addf %573, %574 : vector<16x64xf32>
    %c1_231 = arith.constant 1 : index
    %c0_232 = arith.constant 0 : index
    %c0_233 = arith.constant 0 : index
    %576 = vector.load %arg8[%c1_231, %c0_232, %c0_233] : memref<2x9x64xf32, #tpu.memory_space<vmem>>, vector<1x9x64xf32>
    %577 = vector.shape_cast %576 : vector<1x9x64xf32> to vector<9x64xf32>
    %c0_234 = arith.constant 0 : index
    %c0_235 = arith.constant 0 : index
    %c0_236 = arith.constant 0 : index
    %578 = vector.load %arg3[%c0_234, %c0_235, %c0_236] : memref<9x16x16xf32, #tpu.memory_space<vmem>>, vector<1x16x16xf32>
    %579 = vector.shape_cast %578 : vector<1x16x16xf32> to vector<16x16xf32>
    %cst_237 = arith.constant dense<0.000000e+00> : vector<16x64xf32>
    %580 = tpu.matmul %579, %575, %cst_237 {dimension_numbers = #tpu.dot_dimension_numbers<[1], [0], [0], [1], [0, 0, 1, 1], [], []>} : vector<16x16xf32>, vector<16x64xf32>, vector<16x64xf32> -> vector<16x64xf32>
    %581 = vector.extract_strided_slice %577 {offsets = [0, 0], sizes = [1, 64], strides = [1, 1]} : vector<9x64xf32> to vector<1x64xf32>
    %582 = vector.broadcast %581 : vector<1x64xf32> to vector<16x64xf32>
    %583 = arith.mulf %580, %582 : vector<16x64xf32>
    %c1_238 = arith.constant 1 : index
    %c0_239 = arith.constant 0 : index
    %c0_240 = arith.constant 0 : index
    %584 = vector.load %arg3[%c1_238, %c0_239, %c0_240] : memref<9x16x16xf32, #tpu.memory_space<vmem>>, vector<1x16x16xf32>
    %585 = vector.shape_cast %584 : vector<1x16x16xf32> to vector<16x16xf32>
    %cst_241 = arith.constant dense<0.000000e+00> : vector<16x64xf32>
    %586 = tpu.matmul %585, %575, %cst_241 {dimension_numbers = #tpu.dot_dimension_numbers<[1], [0], [0], [1], [0, 0, 1, 1], [], []>} : vector<16x16xf32>, vector<16x64xf32>, vector<16x64xf32> -> vector<16x64xf32>
    %587 = vector.extract_strided_slice %577 {offsets = [1, 0], sizes = [1, 64], strides = [1, 1]} : vector<9x64xf32> to vector<1x64xf32>
    %588 = vector.broadcast %587 : vector<1x64xf32> to vector<16x64xf32>
    %589 = arith.mulf %586, %588 : vector<16x64xf32>
    %590 = arith.addf %583, %589 : vector<16x64xf32>
    %c2_242 = arith.constant 2 : index
    %c0_243 = arith.constant 0 : index
    %c0_244 = arith.constant 0 : index
    %591 = vector.load %arg3[%c2_242, %c0_243, %c0_244] : memref<9x16x16xf32, #tpu.memory_space<vmem>>, vector<1x16x16xf32>
    %592 = vector.shape_cast %591 : vector<1x16x16xf32> to vector<16x16xf32>
    %cst_245 = arith.constant dense<0.000000e+00> : vector<16x64xf32>
    %593 = tpu.matmul %592, %575, %cst_245 {dimension_numbers = #tpu.dot_dimension_numbers<[1], [0], [0], [1], [0, 0, 1, 1], [], []>} : vector<16x16xf32>, vector<16x64xf32>, vector<16x64xf32> -> vector<16x64xf32>
    %594 = vector.extract_strided_slice %577 {offsets = [2, 0], sizes = [1, 64], strides = [1, 1]} : vector<9x64xf32> to vector<1x64xf32>
    %595 = vector.broadcast %594 : vector<1x64xf32> to vector<16x64xf32>
    %596 = arith.mulf %593, %595 : vector<16x64xf32>
    %597 = arith.addf %590, %596 : vector<16x64xf32>
    %c3_246 = arith.constant 3 : index
    %c0_247 = arith.constant 0 : index
    %c0_248 = arith.constant 0 : index
    %598 = vector.load %arg3[%c3_246, %c0_247, %c0_248] : memref<9x16x16xf32, #tpu.memory_space<vmem>>, vector<1x16x16xf32>
    %599 = vector.shape_cast %598 : vector<1x16x16xf32> to vector<16x16xf32>
    %cst_249 = arith.constant dense<0.000000e+00> : vector<16x64xf32>
    %600 = tpu.matmul %599, %575, %cst_249 {dimension_numbers = #tpu.dot_dimension_numbers<[1], [0], [0], [1], [0, 0, 1, 1], [], []>} : vector<16x16xf32>, vector<16x64xf32>, vector<16x64xf32> -> vector<16x64xf32>
    %601 = vector.extract_strided_slice %577 {offsets = [3, 0], sizes = [1, 64], strides = [1, 1]} : vector<9x64xf32> to vector<1x64xf32>
    %602 = vector.broadcast %601 : vector<1x64xf32> to vector<16x64xf32>
    %603 = arith.mulf %600, %602 : vector<16x64xf32>
    %604 = arith.addf %597, %603 : vector<16x64xf32>
    %605 = vector.extract_strided_slice %577 {offsets = [4, 0], sizes = [1, 64], strides = [1, 1]} : vector<9x64xf32> to vector<1x64xf32>
    %606 = vector.broadcast %605 : vector<1x64xf32> to vector<16x64xf32>
    %607 = arith.mulf %575, %606 : vector<16x64xf32>
    %608 = arith.addf %604, %607 : vector<16x64xf32>
    %c5_250 = arith.constant 5 : index
    %c0_251 = arith.constant 0 : index
    %c0_252 = arith.constant 0 : index
    %609 = vector.load %arg3[%c5_250, %c0_251, %c0_252] : memref<9x16x16xf32, #tpu.memory_space<vmem>>, vector<1x16x16xf32>
    %610 = vector.shape_cast %609 : vector<1x16x16xf32> to vector<16x16xf32>
    %cst_253 = arith.constant dense<0.000000e+00> : vector<16x64xf32>
    %611 = tpu.matmul %610, %575, %cst_253 {dimension_numbers = #tpu.dot_dimension_numbers<[1], [0], [0], [1], [0, 0, 1, 1], [], []>} : vector<16x16xf32>, vector<16x64xf32>, vector<16x64xf32> -> vector<16x64xf32>
    %612 = vector.extract_strided_slice %577 {offsets = [5, 0], sizes = [1, 64], strides = [1, 1]} : vector<9x64xf32> to vector<1x64xf32>
    %613 = vector.broadcast %612 : vector<1x64xf32> to vector<16x64xf32>
    %614 = arith.mulf %611, %613 : vector<16x64xf32>
    %615 = arith.addf %608, %614 : vector<16x64xf32>
    %c6_254 = arith.constant 6 : index
    %c0_255 = arith.constant 0 : index
    %c0_256 = arith.constant 0 : index
    %616 = vector.load %arg3[%c6_254, %c0_255, %c0_256] : memref<9x16x16xf32, #tpu.memory_space<vmem>>, vector<1x16x16xf32>
    %617 = vector.shape_cast %616 : vector<1x16x16xf32> to vector<16x16xf32>
    %cst_257 = arith.constant dense<0.000000e+00> : vector<16x64xf32>
    %618 = tpu.matmul %617, %575, %cst_257 {dimension_numbers = #tpu.dot_dimension_numbers<[1], [0], [0], [1], [0, 0, 1, 1], [], []>} : vector<16x16xf32>, vector<16x64xf32>, vector<16x64xf32> -> vector<16x64xf32>
    %619 = vector.extract_strided_slice %577 {offsets = [6, 0], sizes = [1, 64], strides = [1, 1]} : vector<9x64xf32> to vector<1x64xf32>
    %620 = vector.broadcast %619 : vector<1x64xf32> to vector<16x64xf32>
    %621 = arith.mulf %618, %620 : vector<16x64xf32>
    %622 = arith.addf %615, %621 : vector<16x64xf32>
    %c7_258 = arith.constant 7 : index
    %c0_259 = arith.constant 0 : index
    %c0_260 = arith.constant 0 : index
    %623 = vector.load %arg3[%c7_258, %c0_259, %c0_260] : memref<9x16x16xf32, #tpu.memory_space<vmem>>, vector<1x16x16xf32>
    %624 = vector.shape_cast %623 : vector<1x16x16xf32> to vector<16x16xf32>
    %cst_261 = arith.constant dense<0.000000e+00> : vector<16x64xf32>
    %625 = tpu.matmul %624, %575, %cst_261 {dimension_numbers = #tpu.dot_dimension_numbers<[1], [0], [0], [1], [0, 0, 1, 1], [], []>} : vector<16x16xf32>, vector<16x64xf32>, vector<16x64xf32> -> vector<16x64xf32>
    %626 = vector.extract_strided_slice %577 {offsets = [7, 0], sizes = [1, 64], strides = [1, 1]} : vector<9x64xf32> to vector<1x64xf32>
    %627 = vector.broadcast %626 : vector<1x64xf32> to vector<16x64xf32>
    %628 = arith.mulf %625, %627 : vector<16x64xf32>
    %629 = arith.addf %622, %628 : vector<16x64xf32>
    %c8_262 = arith.constant 8 : index
    %c0_263 = arith.constant 0 : index
    %c0_264 = arith.constant 0 : index
    %630 = vector.load %arg3[%c8_262, %c0_263, %c0_264] : memref<9x16x16xf32, #tpu.memory_space<vmem>>, vector<1x16x16xf32>
    %631 = vector.shape_cast %630 : vector<1x16x16xf32> to vector<16x16xf32>
    %cst_265 = arith.constant dense<0.000000e+00> : vector<16x64xf32>
    %632 = tpu.matmul %631, %575, %cst_265 {dimension_numbers = #tpu.dot_dimension_numbers<[1], [0], [0], [1], [0, 0, 1, 1], [], []>} : vector<16x16xf32>, vector<16x64xf32>, vector<16x64xf32> -> vector<16x64xf32>
    %633 = vector.extract_strided_slice %577 {offsets = [8, 0], sizes = [1, 64], strides = [1, 1]} : vector<9x64xf32> to vector<1x64xf32>
    %634 = vector.broadcast %633 : vector<1x64xf32> to vector<16x64xf32>
    %635 = arith.mulf %632, %634 : vector<16x64xf32>
    %636 = arith.addf %629, %635 : vector<16x64xf32>
    %637 = vector.extract_strided_slice %444 {offsets = [5, 0], sizes = [1, 64], strides = [1, 1]} : vector<7x64xf32> to vector<1x64xf32>
    %638 = vector.broadcast %637 : vector<1x64xf32> to vector<16x64xf32>
    %639 = arith.addf %636, %638 : vector<16x64xf32>
    %c2_266 = arith.constant 2 : index
    %c0_267 = arith.constant 0 : index
    %c0_268 = arith.constant 0 : index
    %640 = vector.load %arg5[%c2_266, %c0_267, %c0_268] : memref<4x64x32xf32, #tpu.memory_space<vmem>>, vector<1x64x32xf32>
    %641 = vector.shape_cast %640 : vector<1x64x32xf32> to vector<64x32xf32>
    %cst_269 = arith.constant dense<0.000000e+00> : vector<16x32xf32>
    %642 = tpu.matmul %639, %641, %cst_269 {dimension_numbers = #tpu.dot_dimension_numbers<[1], [0], [0], [1], [0, 0, 1, 1], [], []>} : vector<16x64xf32>, vector<64x32xf32>, vector<16x32xf32> -> vector<16x32xf32>
    %643 = vector.extract_strided_slice %442 {offsets = [9, 0], sizes = [1, 32], strides = [1, 1]} : vector<11x32xf32> to vector<1x32xf32>
    %644 = vector.broadcast %643 : vector<1x32xf32> to vector<16x32xf32>
    %645 = arith.addf %642, %644 : vector<16x32xf32>
    %646 = arith.addf %645, %496 : vector<16x32xf32>
    %647 = vector.extract_strided_slice %442 {offsets = [4, 0], sizes = [1, 32], strides = [1, 1]} : vector<11x32xf32> to vector<1x32xf32>
    %648 = vector.extract_strided_slice %442 {offsets = [5, 0], sizes = [1, 32], strides = [1, 1]} : vector<11x32xf32> to vector<1x32xf32>
    %cst_270 = arith.constant dense<0.000000e+00> : vector<16xf32>
    %649 = vector.multi_reduction <add>, %646, %cst_270 [1] : vector<16x32xf32> to vector<16xf32>
    %650 = vector.shape_cast %649 : vector<16xf32> to vector<16x1xf32>
    %cst_271 = arith.constant 3.200000e+01 : f32
    %651 = vector.broadcast %cst_271 : f32 to vector<16x1xf32>
    %652 = arith.divf %650, %651 : vector<16x1xf32>
    %653 = vector.broadcast %652 : vector<16x1xf32> to vector<16x32xf32>
    %654 = arith.subf %646, %653 : vector<16x32xf32>
    %655 = arith.mulf %654, %654 : vector<16x32xf32>
    %cst_272 = arith.constant dense<0.000000e+00> : vector<16xf32>
    %656 = vector.multi_reduction <add>, %655, %cst_272 [1] : vector<16x32xf32> to vector<16xf32>
    %657 = vector.shape_cast %656 : vector<16xf32> to vector<16x1xf32>
    %cst_273 = arith.constant 3.200000e+01 : f32
    %658 = vector.broadcast %cst_273 : f32 to vector<16x1xf32>
    %659 = arith.divf %657, %658 : vector<16x1xf32>
    %660 = vector.broadcast %652 : vector<16x1xf32> to vector<16x32xf32>
    %661 = arith.subf %646, %660 : vector<16x32xf32>
    %cst_274 = arith.constant 9.99999974E-6 : f32
    %662 = vector.broadcast %cst_274 : f32 to vector<16x1xf32>
    %663 = arith.addf %659, %662 : vector<16x1xf32>
    %664 = math.rsqrt %663 : vector<16x1xf32>
    %665 = vector.broadcast %664 : vector<16x1xf32> to vector<16x32xf32>
    %666 = arith.mulf %661, %665 : vector<16x32xf32>
    %667 = vector.broadcast %647 : vector<1x32xf32> to vector<16x32xf32>
    %668 = arith.mulf %666, %667 : vector<16x32xf32>
    %669 = vector.broadcast %648 : vector<1x32xf32> to vector<16x32xf32>
    %670 = arith.addf %668, %669 : vector<16x32xf32>
    %c1_275 = arith.constant 1 : index
    %c0_276 = arith.constant 0 : index
    %c0_277 = arith.constant 0 : index
    %671 = vector.load %arg6[%c1_275, %c0_276, %c0_277] : memref<2x32x96xf32, #tpu.memory_space<vmem>>, vector<1x32x96xf32>
    %672 = vector.shape_cast %671 : vector<1x32x96xf32> to vector<32x96xf32>
    %cst_278 = arith.constant dense<0.000000e+00> : vector<16x96xf32>
    %673 = tpu.matmul %670, %672, %cst_278 {dimension_numbers = #tpu.dot_dimension_numbers<[1], [0], [0], [1], [0, 0, 1, 1], [], []>} : vector<16x32xf32>, vector<32x96xf32>, vector<16x96xf32> -> vector<16x96xf32>
    %c1_279 = arith.constant 1 : index
    %c0_280 = arith.constant 0 : index
    %c0_281 = arith.constant 0 : index
    %674 = vector.load %arg11[%c1_279, %c0_280, %c0_281] : memref<2x1x96xf32, #tpu.memory_space<vmem>>, vector<1x1x96xf32>
    %675 = vector.shape_cast %674 : vector<1x1x96xf32> to vector<1x96xf32>
    %676 = vector.broadcast %675 : vector<1x96xf32> to vector<16x96xf32>
    %677 = arith.addf %673, %676 : vector<16x96xf32>
    %c0_282 = arith.constant 0 : index
    %c0_283 = arith.constant 0 : index
    %c0_284 = arith.constant 0 : index
    %678 = vector.load %arg1[%c0_282, %c0_283, %c0_284] : memref<2x1x8xf32, #tpu.memory_space<vmem>>, vector<1x1x8xf32>
    %679 = vector.shape_cast %678 : vector<1x1x8xf32> to vector<1x8xf32>
    %cst_285 = arith.constant -1.000000e+09 : f32
    %680 = vector.broadcast %cst_285 : f32 to vector<1x8xf32>
    %681 = arith.mulf %679, %680 : vector<1x8xf32>
    %682 = vector.extract_strided_slice %677 {offsets = [0, 0], sizes = [8, 32], strides = [1, 1]} : vector<16x96xf32> to vector<8x32xf32>
    %683 = vector.extract_strided_slice %677 {offsets = [0, 32], sizes = [8, 32], strides = [1, 1]} : vector<16x96xf32> to vector<8x32xf32>
    %684 = vector.extract_strided_slice %677 {offsets = [0, 64], sizes = [8, 32], strides = [1, 1]} : vector<16x96xf32> to vector<8x32xf32>
    %685 = vector.extract_strided_slice %682 {offsets = [0, 0], sizes = [8, 8], strides = [1, 1]} : vector<8x32xf32> to vector<8x8xf32>
    %686 = vector.extract_strided_slice %683 {offsets = [0, 0], sizes = [8, 8], strides = [1, 1]} : vector<8x32xf32> to vector<8x8xf32>
    %cst_286 = arith.constant dense<0.000000e+00> : vector<8x8xf32>
    %687 = tpu.matmul %685, %686, %cst_286 {dimension_numbers = #tpu.dot_dimension_numbers<[1], [1], [0], [0], [0, 0, 1, 0], [], []>} : vector<8x8xf32>, vector<8x8xf32>, vector<8x8xf32> -> vector<8x8xf32>
    %688 = vector.broadcast %681 : vector<1x8xf32> to vector<8x8xf32>
    %689 = arith.addf %687, %688 : vector<8x8xf32>
    %cst_287 = arith.constant dense<0xFF800000> : vector<8xf32>
    %690 = vector.multi_reduction <maximumf>, %689, %cst_287 [1] : vector<8x8xf32> to vector<8xf32>
    %691 = vector.shape_cast %690 : vector<8xf32> to vector<8x1xf32>
    %692 = vector.broadcast %691 : vector<8x1xf32> to vector<8x8xf32>
    %693 = arith.subf %689, %692 : vector<8x8xf32>
    %694 = math.exp %693 : vector<8x8xf32>
    %cst_288 = arith.constant dense<0.000000e+00> : vector<8xf32>
    %695 = vector.multi_reduction <add>, %694, %cst_288 [1] : vector<8x8xf32> to vector<8xf32>
    %696 = vector.shape_cast %695 : vector<8xf32> to vector<8x1xf32>
    %697 = tpu.reciprocal %696 {approx = true} : vector<8x1xf32> -> vector<8x1xf32>
    %698 = vector.broadcast %697 : vector<8x1xf32> to vector<8x8xf32>
    %699 = arith.mulf %694, %698 : vector<8x8xf32>
    %700 = vector.extract_strided_slice %684 {offsets = [0, 0], sizes = [8, 8], strides = [1, 1]} : vector<8x32xf32> to vector<8x8xf32>
    %cst_289 = arith.constant dense<0.000000e+00> : vector<8x8xf32>
    %701 = tpu.matmul %699, %700, %cst_289 {dimension_numbers = #tpu.dot_dimension_numbers<[1], [0], [0], [1], [0, 0, 1, 1], [], []>} : vector<8x8xf32>, vector<8x8xf32>, vector<8x8xf32> -> vector<8x8xf32>
    %702 = vector.extract_strided_slice %682 {offsets = [0, 8], sizes = [8, 8], strides = [1, 1]} : vector<8x32xf32> to vector<8x8xf32>
    %703 = vector.extract_strided_slice %683 {offsets = [0, 8], sizes = [8, 8], strides = [1, 1]} : vector<8x32xf32> to vector<8x8xf32>
    %cst_290 = arith.constant dense<0.000000e+00> : vector<8x8xf32>
    %704 = tpu.matmul %702, %703, %cst_290 {dimension_numbers = #tpu.dot_dimension_numbers<[1], [1], [0], [0], [0, 0, 1, 0], [], []>} : vector<8x8xf32>, vector<8x8xf32>, vector<8x8xf32> -> vector<8x8xf32>
    %705 = vector.broadcast %681 : vector<1x8xf32> to vector<8x8xf32>
    %706 = arith.addf %704, %705 : vector<8x8xf32>
    %cst_291 = arith.constant dense<0xFF800000> : vector<8xf32>
    %707 = vector.multi_reduction <maximumf>, %706, %cst_291 [1] : vector<8x8xf32> to vector<8xf32>
    %708 = vector.shape_cast %707 : vector<8xf32> to vector<8x1xf32>
    %709 = vector.broadcast %708 : vector<8x1xf32> to vector<8x8xf32>
    %710 = arith.subf %706, %709 : vector<8x8xf32>
    %711 = math.exp %710 : vector<8x8xf32>
    %cst_292 = arith.constant dense<0.000000e+00> : vector<8xf32>
    %712 = vector.multi_reduction <add>, %711, %cst_292 [1] : vector<8x8xf32> to vector<8xf32>
    %713 = vector.shape_cast %712 : vector<8xf32> to vector<8x1xf32>
    %714 = tpu.reciprocal %713 {approx = true} : vector<8x1xf32> -> vector<8x1xf32>
    %715 = vector.broadcast %714 : vector<8x1xf32> to vector<8x8xf32>
    %716 = arith.mulf %711, %715 : vector<8x8xf32>
    %717 = vector.extract_strided_slice %684 {offsets = [0, 8], sizes = [8, 8], strides = [1, 1]} : vector<8x32xf32> to vector<8x8xf32>
    %cst_293 = arith.constant dense<0.000000e+00> : vector<8x8xf32>
    %718 = tpu.matmul %716, %717, %cst_293 {dimension_numbers = #tpu.dot_dimension_numbers<[1], [0], [0], [1], [0, 0, 1, 1], [], []>} : vector<8x8xf32>, vector<8x8xf32>, vector<8x8xf32> -> vector<8x8xf32>
    %719 = vector.extract_strided_slice %682 {offsets = [0, 16], sizes = [8, 8], strides = [1, 1]} : vector<8x32xf32> to vector<8x8xf32>
    %720 = vector.extract_strided_slice %683 {offsets = [0, 16], sizes = [8, 8], strides = [1, 1]} : vector<8x32xf32> to vector<8x8xf32>
    %cst_294 = arith.constant dense<0.000000e+00> : vector<8x8xf32>
    %721 = tpu.matmul %719, %720, %cst_294 {dimension_numbers = #tpu.dot_dimension_numbers<[1], [1], [0], [0], [0, 0, 1, 0], [], []>} : vector<8x8xf32>, vector<8x8xf32>, vector<8x8xf32> -> vector<8x8xf32>
    %722 = vector.broadcast %681 : vector<1x8xf32> to vector<8x8xf32>
    %723 = arith.addf %721, %722 : vector<8x8xf32>
    %cst_295 = arith.constant dense<0xFF800000> : vector<8xf32>
    %724 = vector.multi_reduction <maximumf>, %723, %cst_295 [1] : vector<8x8xf32> to vector<8xf32>
    %725 = vector.shape_cast %724 : vector<8xf32> to vector<8x1xf32>
    %726 = vector.broadcast %725 : vector<8x1xf32> to vector<8x8xf32>
    %727 = arith.subf %723, %726 : vector<8x8xf32>
    %728 = math.exp %727 : vector<8x8xf32>
    %cst_296 = arith.constant dense<0.000000e+00> : vector<8xf32>
    %729 = vector.multi_reduction <add>, %728, %cst_296 [1] : vector<8x8xf32> to vector<8xf32>
    %730 = vector.shape_cast %729 : vector<8xf32> to vector<8x1xf32>
    %731 = tpu.reciprocal %730 {approx = true} : vector<8x1xf32> -> vector<8x1xf32>
    %732 = vector.broadcast %731 : vector<8x1xf32> to vector<8x8xf32>
    %733 = arith.mulf %728, %732 : vector<8x8xf32>
    %734 = vector.extract_strided_slice %684 {offsets = [0, 16], sizes = [8, 8], strides = [1, 1]} : vector<8x32xf32> to vector<8x8xf32>
    %cst_297 = arith.constant dense<0.000000e+00> : vector<8x8xf32>
    %735 = tpu.matmul %733, %734, %cst_297 {dimension_numbers = #tpu.dot_dimension_numbers<[1], [0], [0], [1], [0, 0, 1, 1], [], []>} : vector<8x8xf32>, vector<8x8xf32>, vector<8x8xf32> -> vector<8x8xf32>
    %736 = vector.extract_strided_slice %682 {offsets = [0, 24], sizes = [8, 8], strides = [1, 1]} : vector<8x32xf32> to vector<8x8xf32>
    %737 = vector.extract_strided_slice %683 {offsets = [0, 24], sizes = [8, 8], strides = [1, 1]} : vector<8x32xf32> to vector<8x8xf32>
    %cst_298 = arith.constant dense<0.000000e+00> : vector<8x8xf32>
    %738 = tpu.matmul %736, %737, %cst_298 {dimension_numbers = #tpu.dot_dimension_numbers<[1], [1], [0], [0], [0, 0, 1, 0], [], []>} : vector<8x8xf32>, vector<8x8xf32>, vector<8x8xf32> -> vector<8x8xf32>
    %739 = vector.broadcast %681 : vector<1x8xf32> to vector<8x8xf32>
    %740 = arith.addf %738, %739 : vector<8x8xf32>
    %cst_299 = arith.constant dense<0xFF800000> : vector<8xf32>
    %741 = vector.multi_reduction <maximumf>, %740, %cst_299 [1] : vector<8x8xf32> to vector<8xf32>
    %742 = vector.shape_cast %741 : vector<8xf32> to vector<8x1xf32>
    %743 = vector.broadcast %742 : vector<8x1xf32> to vector<8x8xf32>
    %744 = arith.subf %740, %743 : vector<8x8xf32>
    %745 = math.exp %744 : vector<8x8xf32>
    %cst_300 = arith.constant dense<0.000000e+00> : vector<8xf32>
    %746 = vector.multi_reduction <add>, %745, %cst_300 [1] : vector<8x8xf32> to vector<8xf32>
    %747 = vector.shape_cast %746 : vector<8xf32> to vector<8x1xf32>
    %748 = tpu.reciprocal %747 {approx = true} : vector<8x1xf32> -> vector<8x1xf32>
    %749 = vector.broadcast %748 : vector<8x1xf32> to vector<8x8xf32>
    %750 = arith.mulf %745, %749 : vector<8x8xf32>
    %751 = vector.extract_strided_slice %684 {offsets = [0, 24], sizes = [8, 8], strides = [1, 1]} : vector<8x32xf32> to vector<8x8xf32>
    %cst_301 = arith.constant dense<0.000000e+00> : vector<8x8xf32>
    %752 = tpu.matmul %750, %751, %cst_301 {dimension_numbers = #tpu.dot_dimension_numbers<[1], [0], [0], [1], [0, 0, 1, 1], [], []>} : vector<8x8xf32>, vector<8x8xf32>, vector<8x8xf32> -> vector<8x8xf32>
    %753 = tpu.concatenate %701, %718, %735, %752 in 1 : vector<8x8xf32>, vector<8x8xf32>, vector<8x8xf32>, vector<8x8xf32> -> vector<8x32xf32>
    %c1_302 = arith.constant 1 : index
    %c0_303 = arith.constant 0 : index
    %c0_304 = arith.constant 0 : index
    %754 = vector.load %arg1[%c1_302, %c0_303, %c0_304] : memref<2x1x8xf32, #tpu.memory_space<vmem>>, vector<1x1x8xf32>
    %755 = vector.shape_cast %754 : vector<1x1x8xf32> to vector<1x8xf32>
    %cst_305 = arith.constant -1.000000e+09 : f32
    %756 = vector.broadcast %cst_305 : f32 to vector<1x8xf32>
    %757 = arith.mulf %755, %756 : vector<1x8xf32>
    %758 = vector.extract_strided_slice %677 {offsets = [8, 0], sizes = [8, 32], strides = [1, 1]} : vector<16x96xf32> to vector<8x32xf32>
    %759 = vector.extract_strided_slice %677 {offsets = [8, 32], sizes = [8, 32], strides = [1, 1]} : vector<16x96xf32> to vector<8x32xf32>
    %760 = vector.extract_strided_slice %677 {offsets = [8, 64], sizes = [8, 32], strides = [1, 1]} : vector<16x96xf32> to vector<8x32xf32>
    %761 = vector.extract_strided_slice %758 {offsets = [0, 0], sizes = [8, 8], strides = [1, 1]} : vector<8x32xf32> to vector<8x8xf32>
    %762 = vector.extract_strided_slice %759 {offsets = [0, 0], sizes = [8, 8], strides = [1, 1]} : vector<8x32xf32> to vector<8x8xf32>
    %cst_306 = arith.constant dense<0.000000e+00> : vector<8x8xf32>
    %763 = tpu.matmul %761, %762, %cst_306 {dimension_numbers = #tpu.dot_dimension_numbers<[1], [1], [0], [0], [0, 0, 1, 0], [], []>} : vector<8x8xf32>, vector<8x8xf32>, vector<8x8xf32> -> vector<8x8xf32>
    %764 = vector.broadcast %757 : vector<1x8xf32> to vector<8x8xf32>
    %765 = arith.addf %763, %764 : vector<8x8xf32>
    %cst_307 = arith.constant dense<0xFF800000> : vector<8xf32>
    %766 = vector.multi_reduction <maximumf>, %765, %cst_307 [1] : vector<8x8xf32> to vector<8xf32>
    %767 = vector.shape_cast %766 : vector<8xf32> to vector<8x1xf32>
    %768 = vector.broadcast %767 : vector<8x1xf32> to vector<8x8xf32>
    %769 = arith.subf %765, %768 : vector<8x8xf32>
    %770 = math.exp %769 : vector<8x8xf32>
    %cst_308 = arith.constant dense<0.000000e+00> : vector<8xf32>
    %771 = vector.multi_reduction <add>, %770, %cst_308 [1] : vector<8x8xf32> to vector<8xf32>
    %772 = vector.shape_cast %771 : vector<8xf32> to vector<8x1xf32>
    %773 = tpu.reciprocal %772 {approx = true} : vector<8x1xf32> -> vector<8x1xf32>
    %774 = vector.broadcast %773 : vector<8x1xf32> to vector<8x8xf32>
    %775 = arith.mulf %770, %774 : vector<8x8xf32>
    %776 = vector.extract_strided_slice %760 {offsets = [0, 0], sizes = [8, 8], strides = [1, 1]} : vector<8x32xf32> to vector<8x8xf32>
    %cst_309 = arith.constant dense<0.000000e+00> : vector<8x8xf32>
    %777 = tpu.matmul %775, %776, %cst_309 {dimension_numbers = #tpu.dot_dimension_numbers<[1], [0], [0], [1], [0, 0, 1, 1], [], []>} : vector<8x8xf32>, vector<8x8xf32>, vector<8x8xf32> -> vector<8x8xf32>
    %778 = vector.extract_strided_slice %758 {offsets = [0, 8], sizes = [8, 8], strides = [1, 1]} : vector<8x32xf32> to vector<8x8xf32>
    %779 = vector.extract_strided_slice %759 {offsets = [0, 8], sizes = [8, 8], strides = [1, 1]} : vector<8x32xf32> to vector<8x8xf32>
    %cst_310 = arith.constant dense<0.000000e+00> : vector<8x8xf32>
    %780 = tpu.matmul %778, %779, %cst_310 {dimension_numbers = #tpu.dot_dimension_numbers<[1], [1], [0], [0], [0, 0, 1, 0], [], []>} : vector<8x8xf32>, vector<8x8xf32>, vector<8x8xf32> -> vector<8x8xf32>
    %781 = vector.broadcast %757 : vector<1x8xf32> to vector<8x8xf32>
    %782 = arith.addf %780, %781 : vector<8x8xf32>
    %cst_311 = arith.constant dense<0xFF800000> : vector<8xf32>
    %783 = vector.multi_reduction <maximumf>, %782, %cst_311 [1] : vector<8x8xf32> to vector<8xf32>
    %784 = vector.shape_cast %783 : vector<8xf32> to vector<8x1xf32>
    %785 = vector.broadcast %784 : vector<8x1xf32> to vector<8x8xf32>
    %786 = arith.subf %782, %785 : vector<8x8xf32>
    %787 = math.exp %786 : vector<8x8xf32>
    %cst_312 = arith.constant dense<0.000000e+00> : vector<8xf32>
    %788 = vector.multi_reduction <add>, %787, %cst_312 [1] : vector<8x8xf32> to vector<8xf32>
    %789 = vector.shape_cast %788 : vector<8xf32> to vector<8x1xf32>
    %790 = tpu.reciprocal %789 {approx = true} : vector<8x1xf32> -> vector<8x1xf32>
    %791 = vector.broadcast %790 : vector<8x1xf32> to vector<8x8xf32>
    %792 = arith.mulf %787, %791 : vector<8x8xf32>
    %793 = vector.extract_strided_slice %760 {offsets = [0, 8], sizes = [8, 8], strides = [1, 1]} : vector<8x32xf32> to vector<8x8xf32>
    %cst_313 = arith.constant dense<0.000000e+00> : vector<8x8xf32>
    %794 = tpu.matmul %792, %793, %cst_313 {dimension_numbers = #tpu.dot_dimension_numbers<[1], [0], [0], [1], [0, 0, 1, 1], [], []>} : vector<8x8xf32>, vector<8x8xf32>, vector<8x8xf32> -> vector<8x8xf32>
    %795 = vector.extract_strided_slice %758 {offsets = [0, 16], sizes = [8, 8], strides = [1, 1]} : vector<8x32xf32> to vector<8x8xf32>
    %796 = vector.extract_strided_slice %759 {offsets = [0, 16], sizes = [8, 8], strides = [1, 1]} : vector<8x32xf32> to vector<8x8xf32>
    %cst_314 = arith.constant dense<0.000000e+00> : vector<8x8xf32>
    %797 = tpu.matmul %795, %796, %cst_314 {dimension_numbers = #tpu.dot_dimension_numbers<[1], [1], [0], [0], [0, 0, 1, 0], [], []>} : vector<8x8xf32>, vector<8x8xf32>, vector<8x8xf32> -> vector<8x8xf32>
    %798 = vector.broadcast %757 : vector<1x8xf32> to vector<8x8xf32>
    %799 = arith.addf %797, %798 : vector<8x8xf32>
    %cst_315 = arith.constant dense<0xFF800000> : vector<8xf32>
    %800 = vector.multi_reduction <maximumf>, %799, %cst_315 [1] : vector<8x8xf32> to vector<8xf32>
    %801 = vector.shape_cast %800 : vector<8xf32> to vector<8x1xf32>
    %802 = vector.broadcast %801 : vector<8x1xf32> to vector<8x8xf32>
    %803 = arith.subf %799, %802 : vector<8x8xf32>
    %804 = math.exp %803 : vector<8x8xf32>
    %cst_316 = arith.constant dense<0.000000e+00> : vector<8xf32>
    %805 = vector.multi_reduction <add>, %804, %cst_316 [1] : vector<8x8xf32> to vector<8xf32>
    %806 = vector.shape_cast %805 : vector<8xf32> to vector<8x1xf32>
    %807 = tpu.reciprocal %806 {approx = true} : vector<8x1xf32> -> vector<8x1xf32>
    %808 = vector.broadcast %807 : vector<8x1xf32> to vector<8x8xf32>
    %809 = arith.mulf %804, %808 : vector<8x8xf32>
    %810 = vector.extract_strided_slice %760 {offsets = [0, 16], sizes = [8, 8], strides = [1, 1]} : vector<8x32xf32> to vector<8x8xf32>
    %cst_317 = arith.constant dense<0.000000e+00> : vector<8x8xf32>
    %811 = tpu.matmul %809, %810, %cst_317 {dimension_numbers = #tpu.dot_dimension_numbers<[1], [0], [0], [1], [0, 0, 1, 1], [], []>} : vector<8x8xf32>, vector<8x8xf32>, vector<8x8xf32> -> vector<8x8xf32>
    %812 = vector.extract_strided_slice %758 {offsets = [0, 24], sizes = [8, 8], strides = [1, 1]} : vector<8x32xf32> to vector<8x8xf32>
    %813 = vector.extract_strided_slice %759 {offsets = [0, 24], sizes = [8, 8], strides = [1, 1]} : vector<8x32xf32> to vector<8x8xf32>
    %cst_318 = arith.constant dense<0.000000e+00> : vector<8x8xf32>
    %814 = tpu.matmul %812, %813, %cst_318 {dimension_numbers = #tpu.dot_dimension_numbers<[1], [1], [0], [0], [0, 0, 1, 0], [], []>} : vector<8x8xf32>, vector<8x8xf32>, vector<8x8xf32> -> vector<8x8xf32>
    %815 = vector.broadcast %757 : vector<1x8xf32> to vector<8x8xf32>
    %816 = arith.addf %814, %815 : vector<8x8xf32>
    %cst_319 = arith.constant dense<0xFF800000> : vector<8xf32>
    %817 = vector.multi_reduction <maximumf>, %816, %cst_319 [1] : vector<8x8xf32> to vector<8xf32>
    %818 = vector.shape_cast %817 : vector<8xf32> to vector<8x1xf32>
    %819 = vector.broadcast %818 : vector<8x1xf32> to vector<8x8xf32>
    %820 = arith.subf %816, %819 : vector<8x8xf32>
    %821 = math.exp %820 : vector<8x8xf32>
    %cst_320 = arith.constant dense<0.000000e+00> : vector<8xf32>
    %822 = vector.multi_reduction <add>, %821, %cst_320 [1] : vector<8x8xf32> to vector<8xf32>
    %823 = vector.shape_cast %822 : vector<8xf32> to vector<8x1xf32>
    %824 = tpu.reciprocal %823 {approx = true} : vector<8x1xf32> -> vector<8x1xf32>
    %825 = vector.broadcast %824 : vector<8x1xf32> to vector<8x8xf32>
    %826 = arith.mulf %821, %825 : vector<8x8xf32>
    %827 = vector.extract_strided_slice %760 {offsets = [0, 24], sizes = [8, 8], strides = [1, 1]} : vector<8x32xf32> to vector<8x8xf32>
    %cst_321 = arith.constant dense<0.000000e+00> : vector<8x8xf32>
    %828 = tpu.matmul %826, %827, %cst_321 {dimension_numbers = #tpu.dot_dimension_numbers<[1], [0], [0], [1], [0, 0, 1, 1], [], []>} : vector<8x8xf32>, vector<8x8xf32>, vector<8x8xf32> -> vector<8x8xf32>
    %829 = tpu.concatenate %777, %794, %811, %828 in 1 : vector<8x8xf32>, vector<8x8xf32>, vector<8x8xf32>, vector<8x8xf32> -> vector<8x32xf32>
    %830 = tpu.concatenate %753, %829 in 0 : vector<8x32xf32>, vector<8x32xf32> -> vector<16x32xf32>
    %c1_322 = arith.constant 1 : index
    %c0_323 = arith.constant 0 : index
    %c0_324 = arith.constant 0 : index
    %831 = vector.load %arg7[%c1_322, %c0_323, %c0_324] : memref<2x32x32xf32, #tpu.memory_space<vmem>>, vector<1x32x32xf32>
    %832 = vector.shape_cast %831 : vector<1x32x32xf32> to vector<32x32xf32>
    %cst_325 = arith.constant dense<0.000000e+00> : vector<16x32xf32>
    %833 = tpu.matmul %830, %832, %cst_325 {dimension_numbers = #tpu.dot_dimension_numbers<[1], [0], [0], [1], [0, 0, 1, 1], [], []>} : vector<16x32xf32>, vector<32x32xf32>, vector<16x32xf32> -> vector<16x32xf32>
    %834 = arith.addf %670, %833 : vector<16x32xf32>
    %835 = vector.extract_strided_slice %442 {offsets = [8, 0], sizes = [1, 32], strides = [1, 1]} : vector<11x32xf32> to vector<1x32xf32>
    %836 = vector.broadcast %835 : vector<1x32xf32> to vector<16x32xf32>
    %837 = arith.addf %834, %836 : vector<16x32xf32>
    %838 = vector.extract_strided_slice %442 {offsets = [6, 0], sizes = [1, 32], strides = [1, 1]} : vector<11x32xf32> to vector<1x32xf32>
    %839 = vector.extract_strided_slice %442 {offsets = [7, 0], sizes = [1, 32], strides = [1, 1]} : vector<11x32xf32> to vector<1x32xf32>
    %cst_326 = arith.constant dense<0.000000e+00> : vector<16xf32>
    %840 = vector.multi_reduction <add>, %837, %cst_326 [1] : vector<16x32xf32> to vector<16xf32>
    %841 = vector.shape_cast %840 : vector<16xf32> to vector<16x1xf32>
    %cst_327 = arith.constant 3.200000e+01 : f32
    %842 = vector.broadcast %cst_327 : f32 to vector<16x1xf32>
    %843 = arith.divf %841, %842 : vector<16x1xf32>
    %844 = vector.broadcast %843 : vector<16x1xf32> to vector<16x32xf32>
    %845 = arith.subf %837, %844 : vector<16x32xf32>
    %846 = arith.mulf %845, %845 : vector<16x32xf32>
    %cst_328 = arith.constant dense<0.000000e+00> : vector<16xf32>
    %847 = vector.multi_reduction <add>, %846, %cst_328 [1] : vector<16x32xf32> to vector<16xf32>
    %848 = vector.shape_cast %847 : vector<16xf32> to vector<16x1xf32>
    %cst_329 = arith.constant 3.200000e+01 : f32
    %849 = vector.broadcast %cst_329 : f32 to vector<16x1xf32>
    %850 = arith.divf %848, %849 : vector<16x1xf32>
    %851 = vector.broadcast %843 : vector<16x1xf32> to vector<16x32xf32>
    %852 = arith.subf %837, %851 : vector<16x32xf32>
    %cst_330 = arith.constant 9.99999974E-6 : f32
    %853 = vector.broadcast %cst_330 : f32 to vector<16x1xf32>
    %854 = arith.addf %850, %853 : vector<16x1xf32>
    %855 = math.rsqrt %854 : vector<16x1xf32>
    %856 = vector.broadcast %855 : vector<16x1xf32> to vector<16x32xf32>
    %857 = arith.mulf %852, %856 : vector<16x32xf32>
    %858 = vector.broadcast %838 : vector<1x32xf32> to vector<16x32xf32>
    %859 = arith.mulf %857, %858 : vector<16x32xf32>
    %860 = vector.broadcast %839 : vector<1x32xf32> to vector<16x32xf32>
    %861 = arith.addf %859, %860 : vector<16x32xf32>
    %c15 = arith.constant 15 : index
    %c0_331 = arith.constant 0 : index
    %c0_332 = arith.constant 0 : index
    %862 = vector.load %arg4[%c15, %c0_331, %c0_332] : memref<16x32x64xf32, #tpu.memory_space<vmem>>, vector<1x32x64xf32>
    %863 = vector.shape_cast %862 : vector<1x32x64xf32> to vector<32x64xf32>
    %cst_333 = arith.constant dense<0.000000e+00> : vector<16x64xf32>
    %864 = tpu.matmul %861, %863, %cst_333 {dimension_numbers = #tpu.dot_dimension_numbers<[1], [0], [0], [1], [0, 0, 1, 1], [], []>} : vector<16x32xf32>, vector<32x64xf32>, vector<16x64xf32> -> vector<16x64xf32>
    %865 = vector.extract_strided_slice %444 {offsets = [6, 0], sizes = [1, 64], strides = [1, 1]} : vector<7x64xf32> to vector<1x64xf32>
    %866 = vector.broadcast %865 : vector<1x64xf32> to vector<16x64xf32>
    %867 = arith.addf %864, %866 : vector<16x64xf32>
    %868 = arith.negf %867 : vector<16x64xf32>
    %869 = math.exp %868 : vector<16x64xf32>
    %cst_334 = arith.constant 1.000000e+00 : f32
    %870 = vector.broadcast %cst_334 : f32 to vector<16x64xf32>
    %871 = arith.addf %870, %869 : vector<16x64xf32>
    %872 = arith.divf %870, %871 : vector<16x64xf32>
    %873 = arith.mulf %867, %872 : vector<16x64xf32>
    %c3_335 = arith.constant 3 : index
    %c0_336 = arith.constant 0 : index
    %c0_337 = arith.constant 0 : index
    %874 = vector.load %arg5[%c3_335, %c0_336, %c0_337] : memref<4x64x32xf32, #tpu.memory_space<vmem>>, vector<1x64x32xf32>
    %875 = vector.shape_cast %874 : vector<1x64x32xf32> to vector<64x32xf32>
    %cst_338 = arith.constant dense<0.000000e+00> : vector<16x32xf32>
    %876 = tpu.matmul %873, %875, %cst_338 {dimension_numbers = #tpu.dot_dimension_numbers<[1], [0], [0], [1], [0, 0, 1, 1], [], []>} : vector<16x64xf32>, vector<64x32xf32>, vector<16x32xf32> -> vector<16x32xf32>
    %877 = vector.extract_strided_slice %442 {offsets = [10, 0], sizes = [1, 32], strides = [1, 1]} : vector<11x32xf32> to vector<1x32xf32>
    %878 = vector.broadcast %877 : vector<1x32xf32> to vector<16x32xf32>
    %879 = arith.addf %876, %878 : vector<16x32xf32>
    %880 = arith.addf %879, %837 : vector<16x32xf32>
    %c0_339 = arith.constant 0 : index
    %c0_340 = arith.constant 0 : index
    %881 = vector.load %arg12[%c0_339, %c0_340] : memref<16x32xf32, #tpu.memory_space<vmem>>, vector<16x32xf32>
    tpu.vector_store %arg12[%c0_339, %c0_340], %880 {strides = array<i32>} : memref<16x32xf32, #tpu.memory_space<vmem>>, vector<16x32xf32>,
    return
  }
}

</mosaic_0001>

<llo_original>
// kernel: tpu_custom_call.1
$region0: #{tpu_custom_call.1}
  #allocation0 [shape = 'u32[]', space=smem, size = 0x4, offset = 0x4, fixed_abs, tag = 'smem constant byte address 0x4 - core index']
  #allocation1 [shape = 'u32[72,128]{1,0:T(1,128)}', space=vmem, size = 0x9000, scoped, tag = 'internal scratch']
  %s0 = inlined_call_operand.hbm [shape: f32[16,32], index: 0, kind: input, shape index: {}]
  %s1 = inlined_call_operand.hbm [shape: f32[16,32], index: 1, kind: output, shape index: {}]
  %s2 = sld [smem:[#allocation0]]
  $region18: #{tpu_custom_call.1} parent=0
    _
  %s4 = ssub.s32 1, %s2
  %s5 = scalar_select 0, %s4, %s2
  $region1: #{tpu_custom_call.1} parent=0
    #allocation2 [shape = 'u8[8192]{0}', space=vmem, size = 0x2000, scoped, tag = 'input window, operand 0, single buffered']
    #allocation3 [shape = 's32[1]{0}', space=sflag, size = 0x4, scoped, tag = 'scoped memory for tpu_custom_call.1']
    #allocation4 [shape = 's32[1]{0}', space=sflag, size = 0x4, scoped, tag = 'scoped memory for tpu_custom_call.1']
    #allocation5 [shape = 'u8[8192]{0}', space=vmem, size = 0x2000, scoped, tag = 'output window, operand 0, single buffered']
    %6 = vsyncpa [#allocation3], 0
    %7 = vsyncpa [#allocation4], 0
    // Predicated region
    $region2: #{tpu_custom_call.1} parent=1 // pred_check
      _
    $region3: #{tpu_custom_call.1} parent=1 // pred_check_branch
      %9 = sbr.rel (0) target = $region5
    $region4: #{tpu_custom_call.1} parent=1 // pred_region
      %11 = vsyncadd [#allocation3], 0
      %s12 = sshll.u32 %s0, 4
      %s13 = int_to_ptr.hbm [resolvable:$true] %s12
      %s14 = sshll.u32 [#allocation2], 4
      %s15 = int_to_ptr.vmem [resolvable:$true] %s14
      %20 = dma.hbm_to_vmem [thread:$0]  %s13, 256, %s15, [#allocation3], 128, 128, 8
    $region5: #{tpu_custom_call.1} parent=1 // pred_fallthru
      _
    // Predicated region
    $region6: #{tpu_custom_call.1} parent=1 // pred_check
      _
    $region7: #{tpu_custom_call.1} parent=1 // pred_check_branch
      %22 = sbr.rel (0) target = $region9
    $region8: #{tpu_custom_call.1} parent=1 // pred_region
      %24 = dma.done [#allocation3], 256
    $region9: #{tpu_custom_call.1} parent=1 // pred_fallthru
      _
    %v25 = vld [vmem:[#allocation2] sm:$0xff]
    %v26 = vld [vmem:[#allocation2 + $0x8] sm:$0xff]
    %v27 = vrot.slane %v25, 7
    %v28 = vrot.slane %v26, 7
    %v29 = vlaneseq
    %v30 = vshrl.u32 %v29, 7
    %vm31 = vcmp.lt.s32.totalorder %v30, 1
    %v32 = vsel %vm31, %v27, %v28
    %v33 = vsel %vm31, %v28, %v27
    %vm34 = vcmask 261120
    %35 = vst.msk [vmem:[#allocation5] sm:$0xff] %vm34, %v33
    %36 = vst.msk [vmem:[#allocation5 + $0x8] sm:$0xff] %vm34, %v32
    // Predicated region
    $region10: #{tpu_custom_call.1} parent=1 // pred_check
      _
    $region11: #{tpu_custom_call.1} parent=1 // pred_check_branch
      %38 = sbr.rel (0) target = $region13
    $region12: #{tpu_custom_call.1} parent=1 // pred_region
      %40 = vsyncadd [#allocation4], 0
      %s41 = sshll.u32 [#allocation5], 4
      %s42 = int_to_ptr.vmem [resolvable:$true] %s41
      %s43 = sshll.u32 %s1, 4
      %s44 = int_to_ptr.hbm [resolvable:$true] %s43
      %49 = dma.vmem_to_hbm [thread:$0]  %s42, 256, %s44, [#allocation4], 128, 128, 8
    $region13: #{tpu_custom_call.1} parent=1 // pred_fallthru
      _
    // Predicated region
    $region14: #{tpu_custom_call.1} parent=1 // pred_check
      _
    $region15: #{tpu_custom_call.1} parent=1 // pred_check_branch
      %51 = sbr.rel (0) target = $region17
    $region16: #{tpu_custom_call.1} parent=1 // pred_region
      %53 = dma.done [#allocation4], 256
    $region17: #{tpu_custom_call.1} parent=1 // pred_fallthru
      _
    %54 = vsyncpa [#allocation3], 1
    %55 = vsyncpa [#allocation4], 1

// kernel: tpu_custom_call.1
$region0: #{tpu_custom_call.1}
  #allocation0 [shape = 'u32[]', space=smem, size = 0x4, offset = 0x4, fixed_abs, tag = 'smem constant byte address 0x4 - core index']
  #allocation1 [shape = 'u32[72,128]{1,0:T(1,128)}', space=vmem, size = 0x9000, scoped, tag = 'internal scratch']
  %s0 = inlined_call_operand.vmem [shape: f32[16,32], index: 0, kind: input, shape index: {}]
  %s1 = inlined_call_operand.vmem [shape: f32[2,1,8], index: 1, kind: input, shape index: {}]
  %s2 = inlined_call_operand.vmem [shape: f32[9,16,1], index: 2, kind: input, shape index: {}]
  %s3 = inlined_call_operand.vmem [shape: f32[9,16,16], index: 3, kind: input, shape index: {}]
  %s4 = inlined_call_operand.hbm [shape: f32[16,32,64], index: 4, kind: input, shape index: {}]
  %s5 = inlined_call_operand.vmem [shape: f32[4,64,32], index: 5, kind: input, shape index: {}]
  %s6 = inlined_call_operand.vmem [shape: f32[2,32,96], index: 6, kind: input, shape index: {}]
  %s7 = inlined_call_operand.vmem [shape: f32[2,32,32], index: 7, kind: input, shape index: {}]
  %s8 = inlined_call_operand.vmem [shape: f32[2,9,64], index: 8, kind: input, shape index: {}]
  %s9 = inlined_call_operand.vmem [shape: f32[2,11,32], index: 9, kind: input, shape index: {}]
  %s10 = inlined_call_operand.vmem [shape: f32[2,7,64], index: 10, kind: input, shape index: {}]
  %s11 = inlined_call_operand.vmem [shape: f32[2,1,96], index: 11, kind: input, shape index: {}]
  %s12 = inlined_call_operand.hbm [shape: f32[16,32], index: 12, kind: output, shape index: {}]
  %s13 = sld [smem:[#allocation0]]
  $region62: #{tpu_custom_call.1} parent=0
    _
  %s15 = ssub.s32 1, %s13
  %s16 = scalar_select 0, %s15, %s13
  $region1: #{tpu_custom_call.1} parent=0
    #allocation2 [shape = 'u8[262144]{0}', space=vmem, size = 0x40000, scoped, tag = 'input window, operand 4, single buffered']
    #allocation3 [shape = 's32[1]{0}', space=sflag, size = 0x4, scoped, tag = 'scoped memory for tpu_custom_call.1']
    #allocation4 [shape = 's32[1]{0}', space=sflag, size = 0x4, scoped, tag = 'scoped memory for tpu_custom_call.1']
    #allocation5 [shape = 'u8[8192]{0}', space=vmem, size = 0x2000, scoped, tag = 'output window, operand 0, single buffered']
    %17 = vsyncpa [#allocation3], 0
    %18 = vsyncpa [#allocation4], 0
    // Predicated region
    $region2: #{tpu_custom_call.1} parent=1 // pred_check
      _
    $region3: #{tpu_custom_call.1} parent=1 // pred_check_branch
      %20 = sbr.rel (0) target = $region5
    $region4: #{tpu_custom_call.1} parent=1 // pred_region
      _
    $region5: #{tpu_custom_call.1} parent=1 // pred_fallthru
      _
    // Predicated region
    $region6: #{tpu_custom_call.1} parent=1 // pred_check
      _
    $region7: #{tpu_custom_call.1} parent=1 // pred_check_branch
      %22 = sbr.rel (0) target = $region9
    $region8: #{tpu_custom_call.1} parent=1 // pred_region
      _
    $region9: #{tpu_custom_call.1} parent=1 // pred_fallthru
      _
    // Predicated region
    $region10: #{tpu_custom_call.1} parent=1 // pred_check
      _
    $region11: #{tpu_custom_call.1} parent=1 // pred_check_branch
      %24 = sbr.rel (0) target = $region13
    $region12: #{tpu_custom_call.1} parent=1 // pred_region
      _
    $region13: #{tpu_custom_call.1} parent=1 // pred_fallthru
      _
    // Predicated region
    $region14: #{tpu_custom_call.1} parent=1 // pred_check
      _
    $region15: #{tpu_custom_call.1} parent=1 // pred_check_branch
      %26 = sbr.rel (0) target = $region17
    $region16: #{tpu_custom_call.1} parent=1 // pred_region
      _
    $region17: #{tpu_custom_call.1} parent=1 // pred_fallthru
      _
    // Predicated region
    $region18: #{tpu_custom_call.1} parent=1 // pred_check
      _
    $region19: #{tpu_custom_call.1} parent=1 // pred_check_branch
      %28 = sbr.rel (0) target = $region21
    $region20: #{tpu_custom_call.1} parent=1 // pred_region
      %30 = vsyncadd [#allocation3], 0
      %s31 = sshll.u32 %s4, 4
      %s32 = int_to_ptr.hbm [resolvable:$true] %s31
      %s33 = sshll.u32 [#allocation2], 4
      %s34 = int_to_ptr.vmem [resolvable:$true] %s33
      %39 = dma.hbm_to_vmem [thread:$0]  %s32, 8192, %s34, [#allocation3], 128, 128, 8
    $region21: #{tpu_custom_call.1} parent=1 // pred_fallthru
      _
    // Predicated region
    $region22: #{tpu_custom_call.1} parent=1 // pred_check
      _
    $region23: #{tpu_custom_call.1} parent=1 // pred_check_branch
      %41 = sbr.rel (0) target = $region25
    $region24: #{tpu_custom_call.1} parent=1 // pred_region
      _
    $region25: #{tpu_custom_call.1} parent=1 // pred_fallthru
      _
    // Predicated region
    $region26: #{tpu_custom_call.1} parent=1 // pred_check
      _
    $region27: #{tpu_custom_call.1} parent=1 // pred_check_branch
      %43 = sbr.rel (0) target = $region29
    $region28: #{tpu_custom_call.1} parent=1 // pred_region
      _
    $region29: #{tpu_custom_call.1} parent=1 // pred_fallthru
      _
    // Predicated region
    $region30: #{tpu_custom_call.1} parent=1 // pred_check
      _
    $region31: #{tpu_custom_call.1} parent=1 // pred_check_branch
      %45 = sbr.rel (0) target = $region33
    $region32: #{tpu_custom_call.1} parent=1 // pred_region
      _
    $region33: #{tpu_custom_call.1} parent=1 // pred_fallthru
      _
    // Predicated region
    $region34: #{tpu_custom_call.1} parent=1 // pred_check
      _
    $region35: #{tpu_custom_call.1} parent=1 // pred_check_branch
      %47 = sbr.rel (0) target = $region37
    $region36: #{tpu_custom_call.1} parent=1 // pred_region
      _
    $region37: #{tpu_custom_call.1} parent=1 // pred_fallthru
      _
    // Predicated region
    $region38: #{tpu_custom_call.1} parent=1 // pred_check
      _
    $region39: #{tpu_custom_call.1} parent=1 // pred_check_branch
      %49 = sbr.rel (0) target = $region41
    $region40: #{tpu_custom_call.1} parent=1 // pred_region
      _
    $region41: #{tpu_custom_call.1} parent=1 // pred_fallthru
      _
    // Predicated region
    $region42: #{tpu_custom_call.1} parent=1 // pred_check
      _
    $region43: #{tpu_custom_call.1} parent=1 // pred_check_branch
      %51 = sbr.rel (0) target = $region45
    $region44: #{tpu_custom_call.1} parent=1 // pred_region
      _
    $region45: #{tpu_custom_call.1} parent=1 // pred_fallthru
      _
    // Predicated region
    $region46: #{tpu_custom_call.1} parent=1 // pred_check
      _
    $region47: #{tpu_custom_call.1} parent=1 // pred_check_branch
      %53 = sbr.rel (0) target = $region49
    $region48: #{tpu_custom_call.1} parent=1 // pred_region
      _
    $region49: #{tpu_custom_call.1} parent=1 // pred_fallthru
      _
    // Predicated region
    $region50: #{tpu_custom_call.1} parent=1 // pred_check
      _
    $region51: #{tpu_custom_call.1} parent=1 // pred_check_branch
      %55 = sbr.rel (0) target = $region53
    $region52: #{tpu_custom_call.1} parent=1 // pred_region
      %57 = dma.done [#allocation3], 8192
    $region53: #{tpu_custom_call.1} parent=1 // pred_fallthru
      _
    %v58 = vld [vmem:[%s0] sm:$0xff]
    %v59 = vld [vmem:[%s0 + $0x8] sm:$0xff]
    %v60 = vld [vmem:[%s9] sm:$0xff]
    %v61 = vld [vmem:[%s9 + $0x8] sm:$0x7]
    %v62 = vld [vmem:[%s10] sm:$0x7f]
    %vm63 = vcmask 261120
    %v64 = vsel %vm63, %v58, 0.0
    %65 = vadd.xlane.f32.xlu0 %v64
    %v66 = vpop.xlane.xlu0 %65
    %v67 = vsel %vm63, %v59, 0.0
    %68 = vadd.xlane.f32.xlu0 %v67
    %v69 = vpop.xlane.xlu0 %68
    %v70 = vrcp.pop 32.0
    %v71 = vmul.f32 32.0, %v70
    %v72 = vsub.f32 1.0, %v71
    %v73 = vmul.f32 %v70, %v72
    %v74 = vadd.f32 %v70, %v73
    %vm75 = vweird.f32 %v70
    %v76 = vsel %vm75, %v70, %v74
    %v77 = vmul.f32 %v66, %v76
    %v78 = vmul.f32 %v69, %v76
    %v79 = vsub.f32 %v58, %v77
    %v80 = vsub.f32 %v59, %v78
    %v81 = vmul.f32 %v79, %v79
    %v82 = vmul.f32 %v80, %v80
    %v83 = vsel %vm63, %v81, 0.0
    %84 = vadd.xlane.f32.xlu0 %v83
    %v85 = vpop.xlane.xlu0 %84
    %v86 = vsel %vm63, %v82, 0.0
    %87 = vadd.xlane.f32.xlu0 %v86
    %v88 = vpop.xlane.xlu0 %87
    %v89 = vmul.f32 %v85, %v76
    %v90 = vmul.f32 %v88, %v76
    %v91 = vadd.f32 %v89, 1e-05
    %v92 = vadd.f32 %v90, 1e-05
    %v93 = vrsqrt.pop %v91
    %v94 = vmul.f32 %v93, %v91
    %v95 = vmul.f32 %v94, %v93
    %v96 = vmul.f32 0.5, %v95
    %v97 = vsub.f32 1.5, %v96
    %v98 = vmul.f32 %v93, %v97
    %vm99 = vweird.f32 %v91
    %vm100 = vweird.f32 %v93
    %vm101 = vmor %vm99, %vm100
    %v102 = vsel %vm101, %v93, %v98
    %v103 = vrsqrt.pop %v92
    %v104 = vmul.f32 %v103, %v92
    %v105 = vmul.f32 %v104, %v103
    %v106 = vmul.f32 0.5, %v105
    %v107 = vsub.f32 1.5, %v106
    %v108 = vmul.f32 %v103, %v107
    %vm109 = vweird.f32 %v92
    %vm110 = vweird.f32 %v103
    %vm111 = vmor %vm109, %vm110
    %v112 = vsel %vm111, %v103, %v108
    %v113 = vmul.f32 %v79, %v102
    %v114 = vmul.f32 %v80, %v112
    %v115 = vperm.slane %v60, 0
    %v116 = vmul.f32 %v113, %v115
    %v117 = vmul.f32 %v114, %v115
    %v118 = vperm.slane %v60, 1
    %v119 = vadd.f32 %v116, %v118
    %v120 = vadd.f32 %v117, %v118
    %s121 = scalar_lea.vmem %s3, 48
    %v122 = vld [vmem:[%s121] sm:$0xff]
    %v123 = vld [vmem:[%s121 + $0x8] sm:$0xff]
    %vm124 = vcmask 130048
    %v126 = vsel %vm124, %v122, 0
    %v129 = vsel %vm124, %v123, 0
    %131 = vmatpush.msra.mxu0 0.0
    %132 = vmatpush.msra.mxu0 0.0
    %133 = vmatpush.msra.mxu0 0.0
    %134 = vmatpush.msra.mxu0 0.0
    %135 = vmatpush.msra.mxu0 0.0
    %136 = vmatpush.msra.mxu0 0.0
    %137 = vmatpush.msra.mxu0 0.0
    %138 = vmatpush.msra.mxu0 0.0
    %139 = vmatpush.msra.mxu0 0.0
    %140 = vmatpush.msra.mxu0 0.0
    %141 = vmatpush.msra.mxu0 0.0
    %142 = vmatpush.msra.mxu0 0.0
    %143 = vmatpush.msra.mxu0 0.0
    %144 = vmatpush.msra.mxu0 0.0
    %145 = vmatpush.msra.mxu0 %v120
    %146 = vmatpush.msra.mxu0 %v119
    %147 = vmatmul.f32.gmra.mxu0 %v126
    %v148 = vpop.f32.mrf.mxu0
    %v149 = vadd.f32 0.0, %v148
    %150 = vmatmul.f32.gmra.mxu0 %v129
    %v151 = vpop.f32.mrf.mxu0
    %v152 = vadd.f32 0.0, %v151
    %153 = vdwg.mxu0
    %v154 = vld [vmem:[#allocation2] sm:$0xff]
    %v155 = vld [vmem:[#allocation2 + $0x8] sm:$0xff]
    %v156 = vld [vmem:[#allocation2 + $0x10] sm:$0xff]
    %v157 = vld [vmem:[#allocation2 + $0x18] sm:$0xff]
    %s158 = scalar_lea.vmem [#allocation2], 32
    %v159 = vld [vmem:[%s158] sm:$0xff]
    %v160 = vld [vmem:[%s158 + $0x8] sm:$0xff]
    %v161 = vld [vmem:[%s158 + $0x10] sm:$0xff]
    %v162 = vld [vmem:[%s158 + $0x18] sm:$0xff]
    %v164 = vsel %vm63, %v119, 0
    %v167 = vsel %vm63, %v120, 0
    %169 = vmatpush.msra.mxu0 0.0
    %170 = vmatpush.msra.mxu0 0.0
    %171 = vmatpush.msra.mxu0 0.0
    %172 = vmatpush.msra.mxu0 0.0
    %173 = vmatpush.msra.mxu0 0.0
    %174 = vmatpush.msra.mxu0 0.0
    %175 = vmatpush.msra.mxu0 0.0
    %176 = vmatpush.msra.mxu0 0.0
    %177 = vmatpush.msra.mxu0 0.0
    %178 = vmatpush.msra.mxu0 0.0
    %179 = vmatpush.msra.mxu0 0.0
    %180 = vmatpush.msra.mxu0 0.0
    %181 = vmatpush.msra.mxu0 %v162
    %182 = vmatpush.msra.mxu0 %v161
    %183 = vmatpush.msra.mxu0 %v160
    %184 = vmatpush.msra.mxu0 %v159
    %185 = vmatmul.f32.gmra.mxu0 %v164
    %v186 = vpop.f32.mrf.mxu0
    %v187 = vadd.f32 0.0, %v186
    %188 = vmatmul.f32.gmra.mxu0 %v167
    %v189 = vpop.f32.mrf.mxu0
    %v190 = vadd.f32 0.0, %v189
    %191 = vdwg.mxu0
    %v193 = vsel %vm63, %v149, 0
    %v196 = vsel %vm63, %v152, 0
    %198 = vmatpush.msra.mxu0 0.0
    %199 = vmatpush.msra.mxu0 0.0
    %200 = vmatpush.msra.mxu0 0.0
    %201 = vmatpush.msra.mxu0 0.0
    %202 = vmatpush.msra.mxu0 0.0
    %203 = vmatpush.msra.mxu0 0.0
    %204 = vmatpush.msra.mxu0 0.0
    %205 = vmatpush.msra.mxu0 0.0
    %206 = vmatpush.msra.mxu0 0.0
    %207 = vmatpush.msra.mxu0 0.0
    %208 = vmatpush.msra.mxu0 0.0
    %209 = vmatpush.msra.mxu0 0.0
    %210 = vmatpush.msra.mxu0 %v157
    %211 = vmatpush.msra.mxu0 %v156
    %212 = vmatpush.msra.mxu0 %v155
    %213 = vmatpush.msra.mxu0 %v154
    %214 = vmatmul.f32.gmra.mxu0 %v193
    %v215 = vpop.f32.mrf.mxu0
    %v216 = vadd.f32 %v187, %v215
    %217 = vmatmul.f32.gmra.mxu0 %v196
    %v218 = vpop.f32.mrf.mxu0
    %v219 = vadd.f32 %v190, %v218
    %220 = vdwg.mxu0
    %s221 = scalar_lea.vmem %s3, 80
    %v222 = vld [vmem:[%s221] sm:$0xff]
    %v223 = vld [vmem:[%s221 + $0x8] sm:$0xff]
    %v225 = vsel %vm124, %v222, 0
    %v228 = vsel %vm124, %v223, 0
    %230 = vmatpush.msra.mxu0 0.0
    %231 = vmatpush.msra.mxu0 0.0
    %232 = vmatpush.msra.mxu0 0.0
    %233 = vmatpush.msra.mxu0 0.0
    %234 = vmatpush.msra.mxu0 0.0
    %235 = vmatpush.msra.mxu0 0.0
    %236 = vmatpush.msra.mxu0 0.0
    %237 = vmatpush.msra.mxu0 0.0
    %238 = vmatpush.msra.mxu0 0.0
    %239 = vmatpush.msra.mxu0 0.0
    %240 = vmatpush.msra.mxu0 0.0
    %241 = vmatpush.msra.mxu0 0.0
    %242 = vmatpush.msra.mxu0 0.0
    %243 = vmatpush.msra.mxu0 0.0
    %244 = vmatpush.msra.mxu0 %v120
    %245 = vmatpush.msra.mxu0 %v119
    %246 = vmatmul.f32.gmra.mxu0 %v225
    %v247 = vpop.f32.mrf.mxu0
    %v248 = vadd.f32 0.0, %v247
    %249 = vmatmul.f32.gmra.mxu0 %v228
    %v250 = vpop.f32.mrf.mxu0
    %v251 = vadd.f32 0.0, %v250
    %252 = vdwg.mxu0
    %s253 = scalar_lea.vmem [#allocation2], 64
    %v254 = vld [vmem:[%s253] sm:$0xff]
    %v255 = vld [vmem:[%s253 + $0x8] sm:$0xff]
    %v256 = vld [vmem:[%s253 + $0x10] sm:$0xff]
    %v257 = vld [vmem:[%s253 + $0x18] sm:$0xff]
    %v259 = vsel %vm63, %v248, 0
    %v262 = vsel %vm63, %v251, 0
    %264 = vmatpush.msra.mxu0 0.0
    %265 = vmatpush.msra.mxu0 0.0
    %266 = vmatpush.msra.mxu0 0.0
    %267 = vmatpush.msra.mxu0 0.0
    %268 = vmatpush.msra.mxu0 0.0
    %269 = vmatpush.msra.mxu0 0.0
    %270 = vmatpush.msra.mxu0 0.0
    %271 = vmatpush.msra.mxu0 0.0
    %272 = vmatpush.msra.mxu0 0.0
    %273 = vmatpush.msra.mxu0 0.0
    %274 = vmatpush.msra.mxu0 0.0
    %275 = vmatpush.msra.mxu0 0.0
    %276 = vmatpush.msra.mxu0 %v257
    %277 = vmatpush.msra.mxu0 %v256
    %278 = vmatpush.msra.mxu0 %v255
    %279 = vmatpush.msra.mxu0 %v254
    %280 = vmatmul.f32.gmra.mxu0 %v259
    %v281 = vpop.f32.mrf.mxu0
    %v282 = vadd.f32 0.0, %v281
    %283 = vmatmul.f32.gmra.mxu0 %v262
    %v284 = vpop.f32.mrf.mxu0
    %v285 = vadd.f32 0.0, %v284
    %286 = vdwg.mxu0
    %v287 = vadd.f32 %v216, %v282
    %v288 = vadd.f32 %v219, %v285
    %v289 = vperm.slane %v62, 0
    %v290 = vadd.f32 %v287, %v289
    %v291 = vadd.f32 %v288, %v289
    %v292 = vxor.u32 %v290, 2147483648
    %v293 = vxor.u32 %v291, 2147483648
    %v294 = vmul.f32 %v292, 1.442695
    %v295 = vpow.pop %v294
    %v296 = vmul.f32 %v293, 1.442695
    %v297 = vpow.pop %v296
    %v298 = vadd.f32 %v295, 1.0
    %v299 = vadd.f32 %v297, 1.0
    %v300 = vrcp.pop %v298
    %v301 = vmul.f32 %v298, %v300
    %v302 = vsub.f32 1.0, %v301
    %v303 = vmul.f32 %v300, %v302
    %v304 = vadd.f32 %v300, %v303
    %vm305 = vweird.f32 %v298
    %vm306 = vweird.f32 %v300
    %vm307 = vmor %vm305, %vm306
    %v308 = vsel %vm307, %v300, %v304
    %v309 = vand.u32 2147483647, %v298
    %vm310 = vcmp.eq.f32.partialorder %v309, 8.507059e+37
    %v311 = vand.u32 %v298, 2147483648
    %v312 = vor.u32 1.1754944e-38, %v311
    %v313 = vsel %vm310, %v312, %v308
    %v314 = vmul.f32 1.0, %v313
    %v315 = vrcp.pop %v299
    %v316 = vmul.f32 %v299, %v315
    %v317 = vsub.f32 1.0, %v316
    %v318 = vmul.f32 %v315, %v317
    %v319 = vadd.f32 %v315, %v318
    %vm320 = vweird.f32 %v299
    %vm321 = vweird.f32 %v315
    %vm322 = vmor %vm320, %vm321
    %v323 = vsel %vm322, %v315, %v319
    %v324 = vand.u32 2147483647, %v299
    %vm325 = vcmp.eq.f32.partialorder %v324, 8.507059e+37
    %v326 = vand.u32 %v299, 2147483648
    %v327 = vor.u32 1.1754944e-38, %v326
    %v328 = vsel %vm325, %v327, %v323
    %v329 = vmul.f32 1.0, %v328
    %332 = vrot.lane.b32.xlu0 %v314, 96
    %v333 = vpop.permute.xlu0 %332
    %334 = vrot.lane.b32.xlu0 %v329, 96
    %v335 = vpop.permute.xlu0 %334
    %v338 = vmul.f32 %v290, %v333
    %v339 = vmul.f32 %v291, %v335
    %v340 = vsel %vm63, %v338, 0.0
    %341 = vadd.xlane.f32.xlu0 %v340
    %v342 = vpop.xlane.xlu0 %341
    %v343 = vsel %vm63, %v339, 0.0
    %344 = vadd.xlane.f32.xlu0 %v343
    %v345 = vpop.xlane.xlu0 %344
    %v346 = vmul.f32 %v342, %v76
    %v347 = vmul.f32 %v345, %v76
    %v348 = vsub.f32 %v338, %v346
    %v349 = vsub.f32 %v339, %v347
    %v350 = vmul.f32 %v348, %v348
    %v351 = vmul.f32 %v349, %v349
    %v352 = vsel %vm63, %v350, 0.0
    %353 = vadd.xlane.f32.xlu0 %v352
    %v354 = vpop.xlane.xlu0 %353
    %v355 = vsel %vm63, %v351, 0.0
    %356 = vadd.xlane.f32.xlu0 %v355
    %v357 = vpop.xlane.xlu0 %356
    %v358 = vmul.f32 %v354, %v76
    %v359 = vmul.f32 %v357, %v76
    %v360 = vadd.f32 %v358, 1e-05
    %v361 = vadd.f32 %v359, 1e-05
    %v362 = vrsqrt.pop %v360
    %v363 = vmul.f32 %v362, %v360
    %v364 = vmul.f32 %v363, %v362
    %v365 = vmul.f32 0.5, %v364
    %v366 = vsub.f32 1.5, %v365
    %v367 = vmul.f32 %v362, %v366
    %vm368 = vweird.f32 %v360
    %vm369 = vweird.f32 %v362
    %vm370 = vmor %vm368, %vm369
    %v371 = vsel %vm370, %v362, %v367
    %v372 = vrsqrt.pop %v361
    %v373 = vmul.f32 %v372, %v361
    %v374 = vmul.f32 %v373, %v372
    %v375 = vmul.f32 0.5, %v374
    %v376 = vsub.f32 1.5, %v375
    %v377 = vmul.f32 %v372, %v376
    %vm378 = vweird.f32 %v361
    %vm379 = vweird.f32 %v372
    %vm380 = vmor %vm378, %vm379
    %v381 = vsel %vm380, %v372, %v377
    %v382 = vmul.f32 %v348, %v371
    %v383 = vmul.f32 %v349, %v381
    %v384 = vperm.slane %v60, 2
    %v385 = vmul.f32 %v382, %v384
    %v386 = vmul.f32 %v383, %v384
    %v387 = vperm.slane %v60, 3
    %v388 = vadd.f32 %v385, %v387
    %v389 = vadd.f32 %v386, %v387
    %s390 = scalar_lea.vmem [#allocation2], 192
    %v391 = vld [vmem:[%s390] sm:$0xff]
    %v392 = vld [vmem:[%s390 + $0x8] sm:$0xff]
    %v393 = vld [vmem:[%s390 + $0x10] sm:$0xff]
    %v394 = vld [vmem:[%s390 + $0x18] sm:$0xff]
    %v395 = vperm.slane %v62, 1
    %v397 = vsel %vm63, %v388, 0
    %v400 = vsel %vm63, %v389, 0
    %402 = vmatpush.msra.mxu0 0.0
    %403 = vmatpush.msra.mxu0 0.0
    %404 = vmatpush.msra.mxu0 0.0
    %405 = vmatpush.msra.mxu0 0.0
    %406 = vmatpush.msra.mxu0 0.0
    %407 = vmatpush.msra.mxu0 0.0
    %408 = vmatpush.msra.mxu0 0.0
    %409 = vmatpush.msra.mxu0 0.0
    %410 = vmatpush.msra.mxu0 0.0
    %411 = vmatpush.msra.mxu0 0.0
    %412 = vmatpush.msra.mxu0 0.0
    %413 = vmatpush.msra.mxu0 0.0
    %414 = vmatpush.msra.mxu0 %v394
    %415 = vmatpush.msra.mxu0 %v393
    %416 = vmatpush.msra.mxu0 %v392
    %417 = vmatpush.msra.mxu0 %v391
    %418 = vmatmul.f32.gmra.mxu0 %v397
    %v419 = vpop.f32.mrf.mxu0
    %v420 = vadd.f32 %v395, %v419
    %421 = vmatmul.f32.gmra.mxu0 %v400
    %v422 = vpop.f32.mrf.mxu0
    %v423 = vadd.f32 %v395, %v422
    %424 = vdwg.mxu0
    %v425 = vmax.f32 %v420, 0.0
    %v426 = vmax.f32 %v423, 0.0
    %427 = vmatpush.msra.mxu0 0.0
    %428 = vmatpush.msra.mxu0 0.0
    %429 = vmatpush.msra.mxu0 0.0
    %430 = vmatpush.msra.mxu0 0.0
    %431 = vmatpush.msra.mxu0 0.0
    %432 = vmatpush.msra.mxu0 0.0
    %433 = vmatpush.msra.mxu0 0.0
    %434 = vmatpush.msra.mxu0 0.0
    %435 = vmatpush.msra.mxu0 0.0
    %436 = vmatpush.msra.mxu0 0.0
    %437 = vmatpush.msra.mxu0 0.0
    %438 = vmatpush.msra.mxu0 0.0
    %439 = vmatpush.msra.mxu0 0.0
    %440 = vmatpush.msra.mxu0 0.0
    %441 = vmatpush.msra.mxu0 %v389
    %442 = vmatpush.msra.mxu0 %v388
    %443 = vmatmul.f32.gmra.mxu0 %v126
    %v444 = vpop.f32.mrf.mxu0
    %v445 = vadd.f32 0.0, %v444
    %446 = vmatmul.f32.gmra.mxu0 %v129
    %v447 = vpop.f32.mrf.mxu0
    %v448 = vadd.f32 0.0, %v447
    %449 = vdwg.mxu0
    %s450 = scalar_lea.vmem [#allocation2], 96
    %v451 = vld [vmem:[%s450] sm:$0xff]
    %v452 = vld [vmem:[%s450 + $0x8] sm:$0xff]
    %v453 = vld [vmem:[%s450 + $0x10] sm:$0xff]
    %v454 = vld [vmem:[%s450 + $0x18] sm:$0xff]
    %s455 = scalar_lea.vmem [#allocation2], 128
    %v456 = vld [vmem:[%s455] sm:$0xff]
    %v457 = vld [vmem:[%s455 + $0x8] sm:$0xff]
    %v458 = vld [vmem:[%s455 + $0x10] sm:$0xff]
    %v459 = vld [vmem:[%s455 + $0x18] sm:$0xff]
    %460 = vmatpush.msra.mxu0 0.0
    %461 = vmatpush.msra.mxu0 0.0
    %462 = vmatpush.msra.mxu0 0.0
    %463 = vmatpush.msra.mxu0 0.0
    %464 = vmatpush.msra.mxu0 0.0
    %465 = vmatpush.msra.mxu0 0.0
    %466 = vmatpush.msra.mxu0 0.0
    %467 = vmatpush.msra.mxu0 0.0
    %468 = vmatpush.msra.mxu0 0.0
    %469 = vmatpush.msra.mxu0 0.0
    %470 = vmatpush.msra.mxu0 0.0
    %471 = vmatpush.msra.mxu0 0.0
    %472 = vmatpush.msra.mxu0 %v459
    %473 = vmatpush.msra.mxu0 %v458
    %474 = vmatpush.msra.mxu0 %v457
    %475 = vmatpush.msra.mxu0 %v456
    %476 = vmatmul.f32.gmra.mxu0 %v397
    %v477 = vpop.f32.mrf.mxu0
    %v478 = vadd.f32 0.0, %v477
    %479 = vmatmul.f32.gmra.mxu0 %v400
    %v480 = vpop.f32.mrf.mxu0
    %v481 = vadd.f32 0.0, %v480
    %482 = vdwg.mxu0
    %v484 = vsel %vm63, %v445, 0
    %v487 = vsel %vm63, %v448, 0
    %489 = vmatpush.msra.mxu0 0.0
    %490 = vmatpush.msra.mxu0 0.0
    %491 = vmatpush.msra.mxu0 0.0
    %492 = vmatpush.msra.mxu0 0.0
    %493 = vmatpush.msra.mxu0 0.0
    %494 = vmatpush.msra.mxu0 0.0
    %495 = vmatpush.msra.mxu0 0.0
    %496 = vmatpush.msra.mxu0 0.0
    %497 = vmatpush.msra.mxu0 0.0
    %498 = vmatpush.msra.mxu0 0.0
    %499 = vmatpush.msra.mxu0 0.0
    %500 = vmatpush.msra.mxu0 0.0
    %501 = vmatpush.msra.mxu0 %v454
    %502 = vmatpush.msra.mxu0 %v453
    %503 = vmatpush.msra.mxu0 %v452
    %504 = vmatpush.msra.mxu0 %v451
    %505 = vmatmul.f32.gmra.mxu0 %v484
    %v506 = vpop.f32.mrf.mxu0
    %v507 = vadd.f32 %v478, %v506
    %508 = vmatmul.f32.gmra.mxu0 %v487
    %v509 = vpop.f32.mrf.mxu0
    %v510 = vadd.f32 %v481, %v509
    %511 = vdwg.mxu0
    %512 = vmatpush.msra.mxu0 0.0
    %513 = vmatpush.msra.mxu0 0.0
    %514 = vmatpush.msra.mxu0 0.0
    %515 = vmatpush.msra.mxu0 0.0
    %516 = vmatpush.msra.mxu0 0.0
    %517 = vmatpush.msra.mxu0 0.0
    %518 = vmatpush.msra.mxu0 0.0
    %519 = vmatpush.msra.mxu0 0.0
    %520 = vmatpush.msra.mxu0 0.0
    %521 = vmatpush.msra.mxu0 0.0
    %522 = vmatpush.msra.mxu0 0.0
    %523 = vmatpush.msra.mxu0 0.0
    %524 = vmatpush.msra.mxu0 0.0
    %525 = vmatpush.msra.mxu0 0.0
    %526 = vmatpush.msra.mxu0 %v389
    %527 = vmatpush.msra.mxu0 %v388
    %528 = vmatmul.f32.gmra.mxu0 %v225
    %v529 = vpop.f32.mrf.mxu0
    %v530 = vadd.f32 0.0, %v529
    %531 = vmatmul.f32.gmra.mxu0 %v228
    %v532 = vpop.f32.mrf.mxu0
    %v533 = vadd.f32 0.0, %v532
    %534 = vdwg.mxu0
    %s535 = scalar_lea.vmem [#allocation2], 160
    %v536 = vld [vmem:[%s535] sm:$0xff]
    %v537 = vld [vmem:[%s535 + $0x8] sm:$0xff]
    %v538 = vld [vmem:[%s535 + $0x10] sm:$0xff]
    %v539 = vld [vmem:[%s535 + $0x18] sm:$0xff]
    %v541 = vsel %vm63, %v530, 0
    %v544 = vsel %vm63, %v533, 0
    %546 = vmatpush.msra.mxu0 0.0
    %547 = vmatpush.msra.mxu0 0.0
    %548 = vmatpush.msra.mxu0 0.0
    %549 = vmatpush.msra.mxu0 0.0
    %550 = vmatpush.msra.mxu0 0.0
    %551 = vmatpush.msra.mxu0 0.0
    %552 = vmatpush.msra.mxu0 0.0
    %553 = vmatpush.msra.mxu0 0.0
    %554 = vmatpush.msra.mxu0 0.0
    %555 = vmatpush.msra.mxu0 0.0
    %556 = vmatpush.msra.mxu0 0.0
    %557 = vmatpush.msra.mxu0 0.0
    %558 = vmatpush.msra.mxu0 %v539
    %559 = vmatpush.msra.mxu0 %v538
    %560 = vmatpush.msra.mxu0 %v537
    %561 = vmatpush.msra.mxu0 %v536
    %562 = vmatmul.f32.gmra.mxu0 %v541
    %v563 = vpop.f32.mrf.mxu0
    %v564 = vadd.f32 0.0, %v563
    %565 = vmatmul.f32.gmra.mxu0 %v544
    %v566 = vpop.f32.mrf.mxu0
    %v567 = vadd.f32 0.0, %v566
    %568 = vdwg.mxu0
    %v569 = vadd.f32 %v507, %v564
    %v570 = vadd.f32 %v510, %v567
    %v571 = vperm.slane %v62, 2
    %v572 = vadd.f32 %v569, %v571
    %v573 = vadd.f32 %v570, %v571
    %v574 = vmax.f32 %v572, 0.0
    %v575 = vmax.f32 %v573, 0.0
    %v576 = vadd.f32 %v425, %v574
    %v577 = vadd.f32 %v426, %v575
    %vm578 = vcmask 523264
    %v579 = vsel %vm578, %v576, 0.0
    %580 = vadd.xlane.f32.xlu0 %v579
    %v581 = vpop.xlane.xlu0 %580
    %v582 = vsel %vm578, %v577, 0.0
    %583 = vadd.xlane.f32.xlu0 %v582
    %v584 = vpop.xlane.xlu0 %583
    %v585 = vrcp.pop 64.0
    %v586 = vmul.f32 64.0, %v585
    %v587 = vsub.f32 1.0, %v586
    %v588 = vmul.f32 %v585, %v587
    %v589 = vadd.f32 %v585, %v588
    %vm590 = vweird.f32 %v585
    %v591 = vsel %vm590, %v585, %v589
    %v592 = vmul.f32 %v581, %v591
    %v593 = vmul.f32 %v584, %v591
    %v594 = vsub.f32 %v576, %v592
    %v595 = vsub.f32 %v577, %v593
    %v596 = vmul.f32 %v594, %v594
    %v597 = vmul.f32 %v595, %v595
    %v598 = vsel %vm578, %v596, 0.0
    %599 = vadd.xlane.f32.xlu0 %v598
    %v600 = vpop.xlane.xlu0 %599
    %v601 = vsel %vm578, %v597, 0.0
    %602 = vadd.xlane.f32.xlu0 %v601
    %v603 = vpop.xlane.xlu0 %602
    %v604 = vmul.f32 %v600, %v591
    %v605 = vmul.f32 %v603, %v591
    %v606 = vadd.f32 %v604, 1e-05
    %v607 = vadd.f32 %v605, 1e-05
    %v608 = vrsqrt.pop %v606
    %v609 = vmul.f32 %v608, %v606
    %v610 = vmul.f32 %v609, %v608
    %v611 = vmul.f32 0.5, %v610
    %v612 = vsub.f32 1.5, %v611
    %v613 = vmul.f32 %v608, %v612
    %vm614 = vweird.f32 %v606
    %vm615 = vweird.f32 %v608
    %vm616 = vmor %vm614, %vm615
    %v617 = vsel %vm616, %v608, %v613
    %v618 = vrsqrt.pop %v607
    %v619 = vmul.f32 %v618, %v607
    %v620 = vmul.f32 %v619, %v618
    %v621 = vmul.f32 0.5, %v620
    %v622 = vsub.f32 1.5, %v621
    %v623 = vmul.f32 %v618, %v622
    %vm624 = vweird.f32 %v607
    %vm625 = vweird.f32 %v618
    %vm626 = vmor %vm624, %vm625
    %v627 = vsel %vm626, %v618, %v623
    %v628 = vmul.f32 %v594, %v617
    %v629 = vmul.f32 %v595, %v627
    %v630 = vperm.slane %v62, 3
    %v631 = vmul.f32 %v628, %v630
    %v632 = vmul.f32 %v629, %v630
    %v633 = vperm.slane %v62, 4
    %v634 = vadd.f32 %v631, %v633
    %v635 = vadd.f32 %v632, %v633
    %v636 = vld [vmem:[%s8] sm:$0xff]
    %v637 = vld [vmem:[%s8 + $0x8] sm:$0x1]
    %v638 = vld [vmem:[%s3] sm:$0xff]
    %v639 = vld [vmem:[%s3 + $0x8] sm:$0xff]
    %v641 = vsel %vm124, %v638, 0
    %v644 = vsel %vm124, %v639, 0
    %646 = vmatpush.msra.mxu0 0.0
    %647 = vmatpush.msra.mxu0 0.0
    %648 = vmatpush.msra.mxu0 0.0
    %649 = vmatpush.msra.mxu0 0.0
    %650 = vmatpush.msra.mxu0 0.0
    %651 = vmatpush.msra.mxu0 0.0
    %652 = vmatpush.msra.mxu0 0.0
    %653 = vmatpush.msra.mxu0 0.0
    %654 = vmatpush.msra.mxu0 0.0
    %655 = vmatpush.msra.mxu0 0.0
    %656 = vmatpush.msra.mxu0 0.0
    %657 = vmatpush.msra.mxu0 0.0
    %658 = vmatpush.msra.mxu0 0.0
    %659 = vmatpush.msra.mxu0 0.0
    %660 = vmatpush.msra.mxu0 %v635
    %661 = vmatpush.msra.mxu0 %v634
    %662 = vmatmul.f32.gmra.mxu0 %v641
    %v663 = vpop.f32.mrf.mxu0
    %v664 = vadd.f32 0.0, %v663
    %665 = vmatmul.f32.gmra.mxu0 %v644
    %v666 = vpop.f32.mrf.mxu0
    %v667 = vadd.f32 0.0, %v666
    %668 = vdwg.mxu0
    %v669 = vperm.slane %v636, 0
    %v670 = vmul.f32 %v664, %v669
    %v671 = vmul.f32 %v667, %v669
    %s672 = scalar_lea.vmem %s3, 16
    %v673 = vld [vmem:[%s672] sm:$0xff]
    %v674 = vld [vmem:[%s672 + $0x8] sm:$0xff]
    %v676 = vsel %vm124, %v673, 0
    %v679 = vsel %vm124, %v674, 0
    %681 = vmatpush.msra.mxu0 0.0
    %682 = vmatpush.msra.mxu0 0.0
    %683 = vmatpush.msra.mxu0 0.0
    %684 = vmatpush.msra.mxu0 0.0
    %685 = vmatpush.msra.mxu0 0.0
    %686 = vmatpush.msra.mxu0 0.0
    %687 = vmatpush.msra.mxu0 0.0
    %688 = vmatpush.msra.mxu0 0.0
    %689 = vmatpush.msra.mxu0 0.0
    %690 = vmatpush.msra.mxu0 0.0
    %691 = vmatpush.msra.mxu0 0.0
    %692 = vmatpush.msra.mxu0 0.0
    %693 = vmatpush.msra.mxu0 0.0
    %694 = vmatpush.msra.mxu0 0.0
    %695 = vmatpush.msra.mxu0 %v635
    %696 = vmatpush.msra.mxu0 %v634
    %697 = vmatmul.f32.gmra.mxu0 %v676
    %v698 = vpop.f32.mrf.mxu0
    %v699 = vadd.f32 0.0, %v698
    %700 = vmatmul.f32.gmra.mxu0 %v679
    %v701 = vpop.f32.mrf.mxu0
    %v702 = vadd.f32 0.0, %v701
    %703 = vdwg.mxu0
    %v704 = vperm.slane %v636, 1
    %v705 = vmul.f32 %v699, %v704
    %v706 = vmul.f32 %v702, %v704
    %v707 = vadd.f32 %v670, %v705
    %v708 = vadd.f32 %v671, %v706
    %s709 = scalar_lea.vmem %s3, 32
    %v710 = vld [vmem:[%s709] sm:$0xff]
    %v711 = vld [vmem:[%s709 + $0x8] sm:$0xff]
    %v713 = vsel %vm124, %v710, 0
    %v716 = vsel %vm124, %v711, 0
    %718 = vmatpush.msra.mxu0 0.0
    %719 = vmatpush.msra.mxu0 0.0
    %720 = vmatpush.msra.mxu0 0.0
    %721 = vmatpush.msra.mxu0 0.0
    %722 = vmatpush.msra.mxu0 0.0
    %723 = vmatpush.msra.mxu0 0.0
    %724 = vmatpush.msra.mxu0 0.0
    %725 = vmatpush.msra.mxu0 0.0
    %726 = vmatpush.msra.mxu0 0.0
    %727 = vmatpush.msra.mxu0 0.0
    %728 = vmatpush.msra.mxu0 0.0
    %729 = vmatpush.msra.mxu0 0.0
    %730 = vmatpush.msra.mxu0 0.0
    %731 = vmatpush.msra.mxu0 0.0
    %732 = vmatpush.msra.mxu0 %v635
    %733 = vmatpush.msra.mxu0 %v634
    %734 = vmatmul.f32.gmra.mxu0 %v713
    %v735 = vpop.f32.mrf.mxu0
    %v736 = vadd.f32 0.0, %v735
    %737 = vmatmul.f32.gmra.mxu0 %v716
    %v738 = vpop.f32.mrf.mxu0
    %v739 = vadd.f32 0.0, %v738
    %740 = vdwg.mxu0
    %v741 = vperm.slane %v636, 2
    %v742 = vmul.f32 %v736, %v741
    %v743 = vmul.f32 %v739, %v741
    %v744 = vadd.f32 %v707, %v742
    %v745 = vadd.f32 %v708, %v743
    %746 = vmatpush.msra.mxu0 0.0
    %747 = vmatpush.msra.mxu0 0.0
    %748 = vmatpush.msra.mxu0 0.0
    %749 = vmatpush.msra.mxu0 0.0
    %750 = vmatpush.msra.mxu0 0.0
    %751 = vmatpush.msra.mxu0 0.0
    %752 = vmatpush.msra.mxu0 0.0
    %753 = vmatpush.msra.mxu0 0.0
    %754 = vmatpush.msra.mxu0 0.0
    %755 = vmatpush.msra.mxu0 0.0
    %756 = vmatpush.msra.mxu0 0.0
    %757 = vmatpush.msra.mxu0 0.0
    %758 = vmatpush.msra.mxu0 0.0
    %759 = vmatpush.msra.mxu0 0.0
    %760 = vmatpush.msra.mxu0 %v635
    %761 = vmatpush.msra.mxu0 %v634
    %762 = vmatmul.f32.gmra.mxu0 %v126
    %v763 = vpop.f32.mrf.mxu0
    %v764 = vadd.f32 0.0, %v763
    %765 = vmatmul.f32.gmra.mxu0 %v129
    %v766 = vpop.f32.mrf.mxu0
    %v767 = vadd.f32 0.0, %v766
    %768 = vdwg.mxu0
    %v769 = vperm.slane %v636, 3
    %v770 = vmul.f32 %v764, %v769
    %v771 = vmul.f32 %v767, %v769
    %v772 = vadd.f32 %v744, %v770
    %v773 = vadd.f32 %v745, %v771
    %v774 = vperm.slane %v636, 4
    %v775 = vmul.f32 %v634, %v774
    %v776 = vmul.f32 %v635, %v774
    %v777 = vadd.f32 %v772, %v775
    %v778 = vadd.f32 %v773, %v776
    %779 = vmatpush.msra.mxu0 0.0
    %780 = vmatpush.msra.mxu0 0.0
    %781 = vmatpush.msra.mxu0 0.0
    %782 = vmatpush.msra.mxu0 0.0
    %783 = vmatpush.msra.mxu0 0.0
    %784 = vmatpush.msra.mxu0 0.0
    %785 = vmatpush.msra.mxu0 0.0
    %786 = vmatpush.msra.mxu0 0.0
    %787 = vmatpush.msra.mxu0 0.0
    %788 = vmatpush.msra.mxu0 0.0
    %789 = vmatpush.msra.mxu0 0.0
    %790 = vmatpush.msra.mxu0 0.0
    %791 = vmatpush.msra.mxu0 0.0
    %792 = vmatpush.msra.mxu0 0.0
    %793 = vmatpush.msra.mxu0 %v635
    %794 = vmatpush.msra.mxu0 %v634
    %795 = vmatmul.f32.gmra.mxu0 %v225
    %v796 = vpop.f32.mrf.mxu0
    %v797 = vadd.f32 0.0, %v796
    %798 = vmatmul.f32.gmra.mxu0 %v228
    %v799 = vpop.f32.mrf.mxu0
    %v800 = vadd.f32 0.0, %v799
    %801 = vdwg.mxu0
    %v802 = vperm.slane %v636, 5
    %v803 = vmul.f32 %v797, %v802
    %v804 = vmul.f32 %v800, %v802
    %v805 = vadd.f32 %v777, %v803
    %v806 = vadd.f32 %v778, %v804
    %s807 = scalar_lea.vmem %s3, 96
    %v808 = vld [vmem:[%s807] sm:$0xff]
    %v809 = vld [vmem:[%s807 + $0x8] sm:$0xff]
    %v811 = vsel %vm124, %v808, 0
    %v814 = vsel %vm124, %v809, 0
    %816 = vmatpush.msra.mxu0 0.0
    %817 = vmatpush.msra.mxu0 0.0
    %818 = vmatpush.msra.mxu0 0.0
    %819 = vmatpush.msra.mxu0 0.0
    %820 = vmatpush.msra.mxu0 0.0
    %821 = vmatpush.msra.mxu0 0.0
    %822 = vmatpush.msra.mxu0 0.0
    %823 = vmatpush.msra.mxu0 0.0
    %824 = vmatpush.msra.mxu0 0.0
    %825 = vmatpush.msra.mxu0 0.0
    %826 = vmatpush.msra.mxu0 0.0
    %827 = vmatpush.msra.mxu0 0.0
    %828 = vmatpush.msra.mxu0 0.0
    %829 = vmatpush.msra.mxu0 0.0
    %830 = vmatpush.msra.mxu0 %v635
    %831 = vmatpush.msra.mxu0 %v634
    %832 = vmatmul.f32.gmra.mxu0 %v811
    %v833 = vpop.f32.mrf.mxu0
    %v834 = vadd.f32 0.0, %v833
    %835 = vmatmul.f32.gmra.mxu0 %v814
    %v836 = vpop.f32.mrf.mxu0
    %v837 = vadd.f32 0.0, %v836
    %838 = vdwg.mxu0
    %v839 = vperm.slane %v636, 6
    %v840 = vmul.f32 %v834, %v839
    %v841 = vmul.f32 %v837, %v839
    %v842 = vadd.f32 %v805, %v840
    %v843 = vadd.f32 %v806, %v841
    %s844 = scalar_lea.vmem %s3, 112
    %v845 = vld [vmem:[%s844] sm:$0xff]
    %v846 = vld [vmem:[%s844 + $0x8] sm:$0xff]
    %v848 = vsel %vm124, %v845, 0
    %v851 = vsel %vm124, %v846, 0
    %853 = vmatpush.msra.mxu0 0.0
    %854 = vmatpush.msra.mxu0 0.0
    %855 = vmatpush.msra.mxu0 0.0
    %856 = vmatpush.msra.mxu0 0.0
    %857 = vmatpush.msra.mxu0 0.0
    %858 = vmatpush.msra.mxu0 0.0
    %859 = vmatpush.msra.mxu0 0.0
    %860 = vmatpush.msra.mxu0 0.0
    %861 = vmatpush.msra.mxu0 0.0
    %862 = vmatpush.msra.mxu0 0.0
    %863 = vmatpush.msra.mxu0 0.0
    %864 = vmatpush.msra.mxu0 0.0
    %865 = vmatpush.msra.mxu0 0.0
    %866 = vmatpush.msra.mxu0 0.0
    %867 = vmatpush.msra.mxu0 %v635
    %868 = vmatpush.msra.mxu0 %v634
    %869 = vmatmul.f32.gmra.mxu0 %v848
    %v870 = vpop.f32.mrf.mxu0
    %v871 = vadd.f32 0.0, %v870
    %872 = vmatmul.f32.gmra.mxu0 %v851
    %v873 = vpop.f32.mrf.mxu0
    %v874 = vadd.f32 0.0, %v873
    %875 = vdwg.mxu0
    %v876 = vperm.slane %v636, 7
    %v877 = vmul.f32 %v871, %v876
    %v878 = vmul.f32 %v874, %v876
    %v879 = vadd.f32 %v842, %v877
    %v880 = vadd.f32 %v843, %v878
    %s881 = scalar_lea.vmem %s3, 128
    %v882 = vld [vmem:[%s881] sm:$0xff]
    %v883 = vld [vmem:[%s881 + $0x8] sm:$0xff]
    %v885 = vsel %vm124, %v882, 0
    %v888 = vsel %vm124, %v883, 0
    %890 = vmatpush.msra.mxu0 0.0
    %891 = vmatpush.msra.mxu0 0.0
    %892 = vmatpush.msra.mxu0 0.0
    %893 = vmatpush.msra.mxu0 0.0
    %894 = vmatpush.msra.mxu0 0.0
    %895 = vmatpush.msra.mxu0 0.0
    %896 = vmatpush.msra.mxu0 0.0
    %897 = vmatpush.msra.mxu0 0.0
    %898 = vmatpush.msra.mxu0 0.0
    %899 = vmatpush.msra.mxu0 0.0
    %900 = vmatpush.msra.mxu0 0.0
    %901 = vmatpush.msra.mxu0 0.0
    %902 = vmatpush.msra.mxu0 0.0
    %903 = vmatpush.msra.mxu0 0.0
    %904 = vmatpush.msra.mxu0 %v635
    %905 = vmatpush.msra.mxu0 %v634
    %906 = vmatmul.f32.gmra.mxu0 %v885
    %v907 = vpop.f32.mrf.mxu0
    %v908 = vadd.f32 0.0, %v907
    %909 = vmatmul.f32.gmra.mxu0 %v888
    %v910 = vpop.f32.mrf.mxu0
    %v911 = vadd.f32 0.0, %v910
    %912 = vdwg.mxu0
    %v913 = vperm.slane %v637, 0
    %v914 = vmul.f32 %v908, %v913
    %v915 = vmul.f32 %v911, %v913
    %v916 = vadd.f32 %v879, %v914
    %v917 = vadd.f32 %v880, %v915
    %v918 = vperm.slane %v62, 5
    %v919 = vadd.f32 %v916, %v918
    %v920 = vadd.f32 %v917, %v918
    %v921 = vld [vmem:[%s5] sm:$0xff]
    %v922 = vld [vmem:[%s5 + $0x8] sm:$0xff]
    %v923 = vld [vmem:[%s5 + $0x10] sm:$0xff]
    %v924 = vld [vmem:[%s5 + $0x18] sm:$0xff]
    %v925 = vld [vmem:[%s5 + $0x20] sm:$0xff]
    %v926 = vld [vmem:[%s5 + $0x28] sm:$0xff]
    %v927 = vld [vmem:[%s5 + $0x30] sm:$0xff]
    %v928 = vld [vmem:[%s5 + $0x38] sm:$0xff]
    %v929 = vperm.slane %v61, 1
    %v931 = vsel %vm578, %v919, 0
    %v934 = vsel %vm578, %v920, 0
    %936 = vmatpush.msra.mxu0 0.0
    %937 = vmatpush.msra.mxu0 0.0
    %938 = vmatpush.msra.mxu0 0.0
    %939 = vmatpush.msra.mxu0 0.0
    %940 = vmatpush.msra.mxu0 0.0
    %941 = vmatpush.msra.mxu0 0.0
    %942 = vmatpush.msra.mxu0 0.0
    %943 = vmatpush.msra.mxu0 0.0
    %944 = vmatpush.msra.mxu0 %v928
    %945 = vmatpush.msra.mxu0 %v927
    %946 = vmatpush.msra.mxu0 %v926
    %947 = vmatpush.msra.mxu0 %v925
    %948 = vmatpush.msra.mxu0 %v924
    %949 = vmatpush.msra.mxu0 %v923
    %950 = vmatpush.msra.mxu0 %v922
    %951 = vmatpush.msra.mxu0 %v921
    %952 = vmatmul.f32.gmra.mxu0 %v931
    %v953 = vpop.f32.mrf.mxu0
    %v954 = vadd.f32 %v929, %v953
    %955 = vmatmul.f32.gmra.mxu0 %v934
    %v956 = vpop.f32.mrf.mxu0
    %v957 = vadd.f32 %v929, %v956
    %958 = vdwg.mxu0
    %v959 = vadd.f32 %v954, %v338
    %v960 = vadd.f32 %v957, %v339
    %v961 = vsel %vm63, %v959, 0.0
    %962 = vadd.xlane.f32.xlu0 %v961
    %v963 = vpop.xlane.xlu0 %962
    %v964 = vsel %vm63, %v960, 0.0
    %965 = vadd.xlane.f32.xlu0 %v964
    %v966 = vpop.xlane.xlu0 %965
    %v967 = vmul.f32 %v963, %v76
    %v968 = vmul.f32 %v966, %v76
    %v969 = vsub.f32 %v959, %v967
    %v970 = vsub.f32 %v960, %v968
    %v971 = vmul.f32 %v969, %v969
    %v972 = vmul.f32 %v970, %v970
    %v973 = vsel %vm63, %v971, 0.0
    %974 = vadd.xlane.f32.xlu0 %v973
    %v975 = vpop.xlane.xlu0 %974
    %v976 = vsel %vm63, %v972, 0.0
    %977 = vadd.xlane.f32.xlu0 %v976
    %v978 = vpop.xlane.xlu0 %977
    %v979 = vmul.f32 %v975, %v76
    %v980 = vmul.f32 %v978, %v76
    %v981 = vadd.f32 %v979, 1e-05
    %v982 = vadd.f32 %v980, 1e-05
    %v983 = vrsqrt.pop %v981
    %v984 = vmul.f32 %v983, %v981
    %v985 = vmul.f32 %v984, %v983
    %v986 = vmul.f32 0.5, %v985
    %v987 = vsub.f32 1.5, %v986
    %v988 = vmul.f32 %v983, %v987
    %vm989 = vweird.f32 %v981
    %vm990 = vweird.f32 %v983
    %vm991 = vmor %vm989, %vm990
    %v992 = vsel %vm991, %v983, %v988
    %v993 = vrsqrt.pop %v982
    %v994 = vmul.f32 %v993, %v982
    %v995 = vmul.f32 %v994, %v993
    %v996 = vmul.f32 0.5, %v995
    %v997 = vsub.f32 1.5, %v996
    %v998 = vmul.f32 %v993, %v997
    %vm999 = vweird.f32 %v982
    %vm1000 = vweird.f32 %v993
    %vm1001 = vmor %vm999, %vm1000
    %v1002 = vsel %vm1001, %v993, %v998
    %v1003 = vmul.f32 %v969, %v992
    %v1004 = vmul.f32 %v970, %v1002
    %v1005 = vperm.slane %v60, 4
    %v1006 = vmul.f32 %v1003, %v1005
    %v1007 = vmul.f32 %v1004, %v1005
    %v1008 = vperm.slane %v60, 5
    %v1009 = vadd.f32 %v1006, %v1008
    %v1010 = vadd.f32 %v1007, %v1008
    %v1011 = vld [vmem:[%s6] sm:$0xff]
    %v1012 = vld [vmem:[%s6 + $0x8] sm:$0xff]
    %v1013 = vld [vmem:[%s6 + $0x10] sm:$0xff]
    %v1014 = vld [vmem:[%s6 + $0x18] sm:$0xff]
    %v1015 = vld [vmem:[%s11] sm:$0x1]
    %v1017 = vperm.slane %v1015, 0
    %v1020 = vsel %vm63, %v1009, 0
    %v1023 = vsel %vm63, %v1010, 0
    %1025 = vmatpush.msra.mxu0 0.0
    %1026 = vmatpush.msra.mxu0 0.0
    %1027 = vmatpush.msra.mxu0 0.0
    %1028 = vmatpush.msra.mxu0 0.0
    %1029 = vmatpush.msra.mxu0 0.0
    %1030 = vmatpush.msra.mxu0 0.0
    %1031 = vmatpush.msra.mxu0 0.0
    %1032 = vmatpush.msra.mxu0 0.0
    %1033 = vmatpush.msra.mxu0 0.0
    %1034 = vmatpush.msra.mxu0 0.0
    %1035 = vmatpush.msra.mxu0 0.0
    %1036 = vmatpush.msra.mxu0 0.0
    %1037 = vmatpush.msra.mxu0 %v1014
    %1038 = vmatpush.msra.mxu0 %v1013
    %1039 = vmatpush.msra.mxu0 %v1012
    %1040 = vmatpush.msra.mxu0 %v1011
    %1041 = vmatmul.f32.gmra.mxu0 %v1020
    %v1042 = vpop.f32.mrf.mxu0
    %v1043 = vadd.f32 %v1017, %v1042
    %1044 = vmatmul.f32.gmra.mxu0 %v1023
    %v1045 = vpop.f32.mrf.mxu0
    %v1046 = vadd.f32 %v1017, %v1045
    %1047 = vdwg.mxu0
    %v1048 = vld [vmem:[%s1] sm:$0x1]
    %v1049 = vmul.f32 %v1048, -1e+09
    %v1051 = vperm.slane %v1049, 0
    %1054 = vrot.lane.b32.xlu0 %v1043, 96
    %v1055 = vpop.permute.xlu0 %1054
    %vm1056 = vcmask 64512
    %v1057 = vsel %vm1056, %v1043, 0
    %v1059 = vsel %vm1056, %v1055, 0
    %1061 = vmatpush.xpose.msra.mxu0 0.0
    %1062 = vmatpush.xpose.msra.mxu0 0.0
    %1063 = vmatpush.xpose.msra.mxu0 0.0
    %1064 = vmatpush.xpose.msra.mxu0 0.0
    %1065 = vmatpush.xpose.msra.mxu0 0.0
    %1066 = vmatpush.xpose.msra.mxu0 0.0
    %1067 = vmatpush.xpose.msra.mxu0 0.0
    %1068 = vmatpush.xpose.msra.mxu0 0.0
    %1069 = vmatpush.xpose.msra.mxu0 0.0
    %1070 = vmatpush.xpose.msra.mxu0 0.0
    %1071 = vmatpush.xpose.msra.mxu0 0.0
    %1072 = vmatpush.xpose.msra.mxu0 0.0
    %1073 = vmatpush.xpose.msra.mxu0 0.0
    %1074 = vmatpush.xpose.msra.mxu0 0.0
    %1075 = vmatpush.xpose.msra.mxu0 0.0
    %1076 = vmatpush.xpose.msra.mxu0 %v1059
    %1077 = vmatmul.f32.gmra.mxu0 %v1057
    %v1078 = vpop.f32.mrf.mxu0
    %v1079 = vadd.f32 %v1051, %v1078
    %1080 = vdwg.mxu0
    %v1081 = vsel %vm1056, %v1079, -inf
    %1082 = vmax.xlane.f32.xlu0 %v1081
    %v1083 = vpop.xlane.xlu0 %1082
    %v1084 = vsub.f32 %v1079, %v1083
    %v1085 = vmul.f32 %v1084, 1.442695
    %v1086 = vpow.pop %v1085
    %v1087 = vsel %vm1056, %v1086, 0.0
    %1088 = vadd.xlane.f32.xlu0 %v1087
    %v1089 = vpop.xlane.xlu0 %1088
    %v1090 = vrcp.pop %v1089
    %v1091 = vmul.f32 %v1086, %v1090
    %1092 = vrot.lane.b32.xlu0 %v1043, 64
    %v1093 = vpop.permute.xlu0 %1092
    %v1096 = vsel %vm1056, %v1091, 0
    %1098 = vmatpush.msra.mxu0 0.0
    %1099 = vmatpush.msra.mxu0 0.0
    %1100 = vmatpush.msra.mxu0 0.0
    %1101 = vmatpush.msra.mxu0 0.0
    %1102 = vmatpush.msra.mxu0 0.0
    %1103 = vmatpush.msra.mxu0 0.0
    %1104 = vmatpush.msra.mxu0 0.0
    %1105 = vmatpush.msra.mxu0 0.0
    %1106 = vmatpush.msra.mxu0 0.0
    %1107 = vmatpush.msra.mxu0 0.0
    %1108 = vmatpush.msra.mxu0 0.0
    %1109 = vmatpush.msra.mxu0 0.0
    %1110 = vmatpush.msra.mxu0 0.0
    %1111 = vmatpush.msra.mxu0 0.0
    %1112 = vmatpush.msra.mxu0 0.0
    %1113 = vmatpush.msra.mxu0 %v1093
    %1114 = vmatmul.f32.gmra.mxu0 %v1096
    %v1115 = vpop.f32.mrf.mxu0
    %v1116 = vadd.f32 0.0, %v1115
    %1117 = vdwg.mxu0
    %1118 = vrot.lane.b32.xlu0 %v1043, 120
    %v1119 = vpop.permute.xlu0 %1118
    %1120 = vrot.lane.b32.xlu0 %v1043, 88
    %v1121 = vpop.permute.xlu0 %1120
    %v1122 = vsel %vm1056, %v1119, 0
    %v1124 = vsel %vm1056, %v1121, 0
    %1126 = vmatpush.xpose.msra.mxu0 0.0
    %1127 = vmatpush.xpose.msra.mxu0 0.0
    %1128 = vmatpush.xpose.msra.mxu0 0.0
    %1129 = vmatpush.xpose.msra.mxu0 0.0
    %1130 = vmatpush.xpose.msra.mxu0 0.0
    %1131 = vmatpush.xpose.msra.mxu0 0.0
    %1132 = vmatpush.xpose.msra.mxu0 0.0
    %1133 = vmatpush.xpose.msra.mxu0 0.0
    %1134 = vmatpush.xpose.msra.mxu0 0.0
    %1135 = vmatpush.xpose.msra.mxu0 0.0
    %1136 = vmatpush.xpose.msra.mxu0 0.0
    %1137 = vmatpush.xpose.msra.mxu0 0.0
    %1138 = vmatpush.xpose.msra.mxu0 0.0
    %1139 = vmatpush.xpose.msra.mxu0 0.0
    %1140 = vmatpush.xpose.msra.mxu0 0.0
    %1141 = vmatpush.xpose.msra.mxu0 %v1124
    %1142 = vmatmul.f32.gmra.mxu0 %v1122
    %v1143 = vpop.f32.mrf.mxu0
    %v1144 = vadd.f32 %v1051, %v1143
    %1145 = vdwg.mxu0
    %v1146 = vsel %vm1056, %v1144, -inf
    %1147 = vmax.xlane.f32.xlu0 %v1146
    %v1148 = vpop.xlane.xlu0 %1147
    %v1149 = vsub.f32 %v1144, %v1148
    %v1150 = vmul.f32 %v1149, 1.442695
    %v1151 = vpow.pop %v1150
    %v1152 = vsel %vm1056, %v1151, 0.0
    %1153 = vadd.xlane.f32.xlu0 %v1152
    %v1154 = vpop.xlane.xlu0 %1153
    %v1155 = vrcp.pop %v1154
    %v1156 = vmul.f32 %v1151, %v1155
    %1157 = vrot.lane.b32.xlu0 %v1043, 56
    %v1158 = vpop.permute.xlu0 %1157
    %v1161 = vsel %vm1056, %v1156, 0
    %1163 = vmatpush.msra.mxu0 0.0
    %1164 = vmatpush.msra.mxu0 0.0
    %1165 = vmatpush.msra.mxu0 0.0
    %1166 = vmatpush.msra.mxu0 0.0
    %1167 = vmatpush.msra.mxu0 0.0
    %1168 = vmatpush.msra.mxu0 0.0
    %1169 = vmatpush.msra.mxu0 0.0
    %1170 = vmatpush.msra.mxu0 0.0
    %1171 = vmatpush.msra.mxu0 0.0
    %1172 = vmatpush.msra.mxu0 0.0
    %1173 = vmatpush.msra.mxu0 0.0
    %1174 = vmatpush.msra.mxu0 0.0
    %1175 = vmatpush.msra.mxu0 0.0
    %1176 = vmatpush.msra.mxu0 0.0
    %1177 = vmatpush.msra.mxu0 0.0
    %1178 = vmatpush.msra.mxu0 %v1158
    %1179 = vmatmul.f32.gmra.mxu0 %v1161
    %v1180 = vpop.f32.mrf.mxu0
    %v1181 = vadd.f32 0.0, %v1180
    %1182 = vdwg.mxu0
    %1183 = vrot.lane.b32.xlu0 %v1043, 112
    %v1184 = vpop.permute.xlu0 %1183
    %1185 = vrot.lane.b32.xlu0 %v1043, 80
    %v1186 = vpop.permute.xlu0 %1185
    %v1187 = vsel %vm1056, %v1184, 0
    %v1189 = vsel %vm1056, %v1186, 0
    %1191 = vmatpush.xpose.msra.mxu0 0.0
    %1192 = vmatpush.xpose.msra.mxu0 0.0
    %1193 = vmatpush.xpose.msra.mxu0 0.0
    %1194 = vmatpush.xpose.msra.mxu0 0.0
    %1195 = vmatpush.xpose.msra.mxu0 0.0
    %1196 = vmatpush.xpose.msra.mxu0 0.0
    %1197 = vmatpush.xpose.msra.mxu0 0.0
    %1198 = vmatpush.xpose.msra.mxu0 0.0
    %1199 = vmatpush.xpose.msra.mxu0 0.0
    %1200 = vmatpush.xpose.msra.mxu0 0.0
    %1201 = vmatpush.xpose.msra.mxu0 0.0
    %1202 = vmatpush.xpose.msra.mxu0 0.0
    %1203 = vmatpush.xpose.msra.mxu0 0.0
    %1204 = vmatpush.xpose.msra.mxu0 0.0
    %1205 = vmatpush.xpose.msra.mxu0 0.0
    %1206 = vmatpush.xpose.msra.mxu0 %v1189
    %1207 = vmatmul.f32.gmra.mxu0 %v1187
    %v1208 = vpop.f32.mrf.mxu0
    %v1209 = vadd.f32 %v1051, %v1208
    %1210 = vdwg.mxu0
    %v1211 = vsel %vm1056, %v1209, -inf
    %1212 = vmax.xlane.f32.xlu0 %v1211
    %v1213 = vpop.xlane.xlu0 %1212
    %v1214 = vsub.f32 %v1209, %v1213
    %v1215 = vmul.f32 %v1214, 1.442695
    %v1216 = vpow.pop %v1215
    %v1217 = vsel %vm1056, %v1216, 0.0
    %1218 = vadd.xlane.f32.xlu0 %v1217
    %v1219 = vpop.xlane.xlu0 %1218
    %v1220 = vrcp.pop %v1219
    %v1221 = vmul.f32 %v1216, %v1220
    %1222 = vrot.lane.b32.xlu0 %v1043, 48
    %v1223 = vpop.permute.xlu0 %1222
    %v1226 = vsel %vm1056, %v1221, 0
    %1228 = vmatpush.msra.mxu0 0.0
    %1229 = vmatpush.msra.mxu0 0.0
    %1230 = vmatpush.msra.mxu0 0.0
    %1231 = vmatpush.msra.mxu0 0.0
    %1232 = vmatpush.msra.mxu0 0.0
    %1233 = vmatpush.msra.mxu0 0.0
    %1234 = vmatpush.msra.mxu0 0.0
    %1235 = vmatpush.msra.mxu0 0.0
    %1236 = vmatpush.msra.mxu0 0.0
    %1237 = vmatpush.msra.mxu0 0.0
    %1238 = vmatpush.msra.mxu0 0.0
    %1239 = vmatpush.msra.mxu0 0.0
    %1240 = vmatpush.msra.mxu0 0.0
    %1241 = vmatpush.msra.mxu0 0.0
    %1242 = vmatpush.msra.mxu0 0.0
    %1243 = vmatpush.msra.mxu0 %v1223
    %1244 = vmatmul.f32.gmra.mxu0 %v1226
    %v1245 = vpop.f32.mrf.mxu0
    %v1246 = vadd.f32 0.0, %v1245
    %1247 = vdwg.mxu0
    %1248 = vrot.lane.b32.xlu0 %v1043, 104
    %v1249 = vpop.permute.xlu0 %1248
    %1250 = vrot.lane.b32.xlu0 %v1043, 72
    %v1251 = vpop.permute.xlu0 %1250
    %v1252 = vsel %vm1056, %v1249, 0
    %v1254 = vsel %vm1056, %v1251, 0
    %1256 = vmatpush.xpose.msra.mxu0 0.0
    %1257 = vmatpush.xpose.msra.mxu0 0.0
    %1258 = vmatpush.xpose.msra.mxu0 0.0
    %1259 = vmatpush.xpose.msra.mxu0 0.0
    %1260 = vmatpush.xpose.msra.mxu0 0.0
    %1261 = vmatpush.xpose.msra.mxu0 0.0
    %1262 = vmatpush.xpose.msra.mxu0 0.0
    %1263 = vmatpush.xpose.msra.mxu0 0.0
    %1264 = vmatpush.xpose.msra.mxu0 0.0
    %1265 = vmatpush.xpose.msra.mxu0 0.0
    %1266 = vmatpush.xpose.msra.mxu0 0.0
    %1267 = vmatpush.xpose.msra.mxu0 0.0
    %1268 = vmatpush.xpose.msra.mxu0 0.0
    %1269 = vmatpush.xpose.msra.mxu0 0.0
    %1270 = vmatpush.xpose.msra.mxu0 0.0
    %1271 = vmatpush.xpose.msra.mxu0 %v1254
    %1272 = vmatmul.f32.gmra.mxu0 %v1252
    %v1273 = vpop.f32.mrf.mxu0
    %v1274 = vadd.f32 %v1051, %v1273
    %1275 = vdwg.mxu0
    %v1276 = vsel %vm1056, %v1274, -inf
    %1277 = vmax.xlane.f32.xlu0 %v1276
    %v1278 = vpop.xlane.xlu0 %1277
    %v1279 = vsub.f32 %v1274, %v1278
    %v1280 = vmul.f32 %v1279, 1.442695
    %v1281 = vpow.pop %v1280
    %v1282 = vsel %vm1056, %v1281, 0.0
    %1283 = vadd.xlane.f32.xlu0 %v1282
    %v1284 = vpop.xlane.xlu0 %1283
    %v1285 = vrcp.pop %v1284
    %v1286 = vmul.f32 %v1281, %v1285
    %1287 = vrot.lane.b32.xlu0 %v1043, 40
    %v1288 = vpop.permute.xlu0 %1287
    %v1291 = vsel %vm1056, %v1286, 0
    %1293 = vmatpush.msra.mxu0 0.0
    %1294 = vmatpush.msra.mxu0 0.0
    %1295 = vmatpush.msra.mxu0 0.0
    %1296 = vmatpush.msra.mxu0 0.0
    %1297 = vmatpush.msra.mxu0 0.0
    %1298 = vmatpush.msra.mxu0 0.0
    %1299 = vmatpush.msra.mxu0 0.0
    %1300 = vmatpush.msra.mxu0 0.0
    %1301 = vmatpush.msra.mxu0 0.0
    %1302 = vmatpush.msra.mxu0 0.0
    %1303 = vmatpush.msra.mxu0 0.0
    %1304 = vmatpush.msra.mxu0 0.0
    %1305 = vmatpush.msra.mxu0 0.0
    %1306 = vmatpush.msra.mxu0 0.0
    %1307 = vmatpush.msra.mxu0 0.0
    %1308 = vmatpush.msra.mxu0 %v1288
    %1309 = vmatmul.f32.gmra.mxu0 %v1291
    %v1310 = vpop.f32.mrf.mxu0
    %v1311 = vadd.f32 0.0, %v1310
    %1312 = vdwg.mxu0
    %1314 = vrot.lane.b32.xlu0 %v1181, 8
    %v1315 = vpop.permute.xlu0 %1314
    %1318 = vrot.lane.b32.xlu0 %v1246, 16
    %v1319 = vpop.permute.xlu0 %1318
    %1322 = vrot.lane.b32.xlu0 %v1311, 24
    %v1323 = vpop.permute.xlu0 %1322
    %v1325 = vsel %vm1056, %v1116, %v1315
    %v1326 = vsel %vm124, %v1325, %v1319
    %vm1327 = vcmask 195584
    %v1328 = vsel %vm1327, %v1326, %v1323
    %s1329 = scalar_lea.vmem %s1, 1
    %v1330 = vld [vmem:[%s1329] sm:$0x1]
    %v1331 = vmul.f32 %v1330, -1e+09
    %v1333 = vperm.slane %v1331, 0
    %1336 = vrot.lane.b32.xlu0 %v1046, 96
    %v1337 = vpop.permute.xlu0 %1336
    %v1338 = vsel %vm1056, %v1046, 0
    %v1340 = vsel %vm1056, %v1337, 0
    %1342 = vmatpush.xpose.msra.mxu0 0.0
    %1343 = vmatpush.xpose.msra.mxu0 0.0
    %1344 = vmatpush.xpose.msra.mxu0 0.0
    %1345 = vmatpush.xpose.msra.mxu0 0.0
    %1346 = vmatpush.xpose.msra.mxu0 0.0
    %1347 = vmatpush.xpose.msra.mxu0 0.0
    %1348 = vmatpush.xpose.msra.mxu0 0.0
    %1349 = vmatpush.xpose.msra.mxu0 0.0
    %1350 = vmatpush.xpose.msra.mxu0 0.0
    %1351 = vmatpush.xpose.msra.mxu0 0.0
    %1352 = vmatpush.xpose.msra.mxu0 0.0
    %1353 = vmatpush.xpose.msra.mxu0 0.0
    %1354 = vmatpush.xpose.msra.mxu0 0.0
    %1355 = vmatpush.xpose.msra.mxu0 0.0
    %1356 = vmatpush.xpose.msra.mxu0 0.0
    %1357 = vmatpush.xpose.msra.mxu0 %v1340
    %1358 = vmatmul.f32.gmra.mxu0 %v1338
    %v1359 = vpop.f32.mrf.mxu0
    %v1360 = vadd.f32 %v1333, %v1359
    %1361 = vdwg.mxu0
    %v1362 = vsel %vm1056, %v1360, -inf
    %1363 = vmax.xlane.f32.xlu0 %v1362
    %v1364 = vpop.xlane.xlu0 %1363
    %v1365 = vsub.f32 %v1360, %v1364
    %v1366 = vmul.f32 %v1365, 1.442695
    %v1367 = vpow.pop %v1366
    %v1368 = vsel %vm1056, %v1367, 0.0
    %1369 = vadd.xlane.f32.xlu0 %v1368
    %v1370 = vpop.xlane.xlu0 %1369
    %v1371 = vrcp.pop %v1370
    %v1372 = vmul.f32 %v1367, %v1371
    %1373 = vrot.lane.b32.xlu0 %v1046, 64
    %v1374 = vpop.permute.xlu0 %1373
    %v1377 = vsel %vm1056, %v1372, 0
    %1379 = vmatpush.msra.mxu0 0.0
    %1380 = vmatpush.msra.mxu0 0.0
    %1381 = vmatpush.msra.mxu0 0.0
    %1382 = vmatpush.msra.mxu0 0.0
    %1383 = vmatpush.msra.mxu0 0.0
    %1384 = vmatpush.msra.mxu0 0.0
    %1385 = vmatpush.msra.mxu0 0.0
    %1386 = vmatpush.msra.mxu0 0.0
    %1387 = vmatpush.msra.mxu0 0.0
    %1388 = vmatpush.msra.mxu0 0.0
    %1389 = vmatpush.msra.mxu0 0.0
    %1390 = vmatpush.msra.mxu0 0.0
    %1391 = vmatpush.msra.mxu0 0.0
    %1392 = vmatpush.msra.mxu0 0.0
    %1393 = vmatpush.msra.mxu0 0.0
    %1394 = vmatpush.msra.mxu0 %v1374
    %1395 = vmatmul.f32.gmra.mxu0 %v1377
    %v1396 = vpop.f32.mrf.mxu0
    %v1397 = vadd.f32 0.0, %v1396
    %1398 = vdwg.mxu0
    %1399 = vrot.lane.b32.xlu0 %v1046, 120
    %v1400 = vpop.permute.xlu0 %1399
    %1401 = vrot.lane.b32.xlu0 %v1046, 88
    %v1402 = vpop.permute.xlu0 %1401
    %v1403 = vsel %vm1056, %v1400, 0
    %v1405 = vsel %vm1056, %v1402, 0
    %1407 = vmatpush.xpose.msra.mxu0 0.0
    %1408 = vmatpush.xpose.msra.mxu0 0.0
    %1409 = vmatpush.xpose.msra.mxu0 0.0
    %1410 = vmatpush.xpose.msra.mxu0 0.0
    %1411 = vmatpush.xpose.msra.mxu0 0.0
    %1412 = vmatpush.xpose.msra.mxu0 0.0
    %1413 = vmatpush.xpose.msra.mxu0 0.0
    %1414 = vmatpush.xpose.msra.mxu0 0.0
    %1415 = vmatpush.xpose.msra.mxu0 0.0
    %1416 = vmatpush.xpose.msra.mxu0 0.0
    %1417 = vmatpush.xpose.msra.mxu0 0.0
    %1418 = vmatpush.xpose.msra.mxu0 0.0
    %1419 = vmatpush.xpose.msra.mxu0 0.0
    %1420 = vmatpush.xpose.msra.mxu0 0.0
    %1421 = vmatpush.xpose.msra.mxu0 0.0
    %1422 = vmatpush.xpose.msra.mxu0 %v1405
    %1423 = vmatmul.f32.gmra.mxu0 %v1403
    %v1424 = vpop.f32.mrf.mxu0
    %v1425 = vadd.f32 %v1333, %v1424
    %1426 = vdwg.mxu0
    %v1427 = vsel %vm1056, %v1425, -inf
    %1428 = vmax.xlane.f32.xlu0 %v1427
    %v1429 = vpop.xlane.xlu0 %1428
    %v1430 = vsub.f32 %v1425, %v1429
    %v1431 = vmul.f32 %v1430, 1.442695
    %v1432 = vpow.pop %v1431
    %v1433 = vsel %vm1056, %v1432, 0.0
    %1434 = vadd.xlane.f32.xlu0 %v1433
    %v1435 = vpop.xlane.xlu0 %1434
    %v1436 = vrcp.pop %v1435
    %v1437 = vmul.f32 %v1432, %v1436
    %1438 = vrot.lane.b32.xlu0 %v1046, 56
    %v1439 = vpop.permute.xlu0 %1438
    %v1442 = vsel %vm1056, %v1437, 0
    %1444 = vmatpush.msra.mxu0 0.0
    %1445 = vmatpush.msra.mxu0 0.0
    %1446 = vmatpush.msra.mxu0 0.0
    %1447 = vmatpush.msra.mxu0 0.0
    %1448 = vmatpush.msra.mxu0 0.0
    %1449 = vmatpush.msra.mxu0 0.0
    %1450 = vmatpush.msra.mxu0 0.0
    %1451 = vmatpush.msra.mxu0 0.0
    %1452 = vmatpush.msra.mxu0 0.0
    %1453 = vmatpush.msra.mxu0 0.0
    %1454 = vmatpush.msra.mxu0 0.0
    %1455 = vmatpush.msra.mxu0 0.0
    %1456 = vmatpush.msra.mxu0 0.0
    %1457 = vmatpush.msra.mxu0 0.0
    %1458 = vmatpush.msra.mxu0 0.0
    %1459 = vmatpush.msra.mxu0 %v1439
    %1460 = vmatmul.f32.gmra.mxu0 %v1442
    %v1461 = vpop.f32.mrf.mxu0
    %v1462 = vadd.f32 0.0, %v1461
    %1463 = vdwg.mxu0
    %1464 = vrot.lane.b32.xlu0 %v1046, 112
    %v1465 = vpop.permute.xlu0 %1464
    %1466 = vrot.lane.b32.xlu0 %v1046, 80
    %v1467 = vpop.permute.xlu0 %1466
    %v1468 = vsel %vm1056, %v1465, 0
    %v1470 = vsel %vm1056, %v1467, 0
    %1472 = vmatpush.xpose.msra.mxu0 0.0
    %1473 = vmatpush.xpose.msra.mxu0 0.0
    %1474 = vmatpush.xpose.msra.mxu0 0.0
    %1475 = vmatpush.xpose.msra.mxu0 0.0
    %1476 = vmatpush.xpose.msra.mxu0 0.0
    %1477 = vmatpush.xpose.msra.mxu0 0.0
    %1478 = vmatpush.xpose.msra.mxu0 0.0
    %1479 = vmatpush.xpose.msra.mxu0 0.0
    %1480 = vmatpush.xpose.msra.mxu0 0.0
    %1481 = vmatpush.xpose.msra.mxu0 0.0
    %1482 = vmatpush.xpose.msra.mxu0 0.0
    %1483 = vmatpush.xpose.msra.mxu0 0.0
    %1484 = vmatpush.xpose.msra.mxu0 0.0
    %1485 = vmatpush.xpose.msra.mxu0 0.0
    %1486 = vmatpush.xpose.msra.mxu0 0.0
    %1487 = vmatpush.xpose.msra.mxu0 %v1470
    %1488 = vmatmul.f32.gmra.mxu0 %v1468
    %v1489 = vpop.f32.mrf.mxu0
    %v1490 = vadd.f32 %v1333, %v1489
    %1491 = vdwg.mxu0
    %v1492 = vsel %vm1056, %v1490, -inf
    %1493 = vmax.xlane.f32.xlu0 %v1492
    %v1494 = vpop.xlane.xlu0 %1493
    %v1495 = vsub.f32 %v1490, %v1494
    %v1496 = vmul.f32 %v1495, 1.442695
    %v1497 = vpow.pop %v1496
    %v1498 = vsel %vm1056, %v1497, 0.0
    %1499 = vadd.xlane.f32.xlu0 %v1498
    %v1500 = vpop.xlane.xlu0 %1499
    %v1501 = vrcp.pop %v1500
    %v1502 = vmul.f32 %v1497, %v1501
    %1503 = vrot.lane.b32.xlu0 %v1046, 48
    %v1504 = vpop.permute.xlu0 %1503
    %v1507 = vsel %vm1056, %v1502, 0
    %1509 = vmatpush.msra.mxu0 0.0
    %1510 = vmatpush.msra.mxu0 0.0
    %1511 = vmatpush.msra.mxu0 0.0
    %1512 = vmatpush.msra.mxu0 0.0
    %1513 = vmatpush.msra.mxu0 0.0
    %1514 = vmatpush.msra.mxu0 0.0
    %1515 = vmatpush.msra.mxu0 0.0
    %1516 = vmatpush.msra.mxu0 0.0
    %1517 = vmatpush.msra.mxu0 0.0
    %1518 = vmatpush.msra.mxu0 0.0
    %1519 = vmatpush.msra.mxu0 0.0
    %1520 = vmatpush.msra.mxu0 0.0
    %1521 = vmatpush.msra.mxu0 0.0
    %1522 = vmatpush.msra.mxu0 0.0
    %1523 = vmatpush.msra.mxu0 0.0
    %1524 = vmatpush.msra.mxu0 %v1504
    %1525 = vmatmul.f32.gmra.mxu0 %v1507
    %v1526 = vpop.f32.mrf.mxu0
    %v1527 = vadd.f32 0.0, %v1526
    %1528 = vdwg.mxu0
    %1529 = vrot.lane.b32.xlu0 %v1046, 104
    %v1530 = vpop.permute.xlu0 %1529
    %1531 = vrot.lane.b32.xlu0 %v1046, 72
    %v1532 = vpop.permute.xlu0 %1531
    %v1533 = vsel %vm1056, %v1530, 0
    %v1535 = vsel %vm1056, %v1532, 0
    %1537 = vmatpush.xpose.msra.mxu0 0.0
    %1538 = vmatpush.xpose.msra.mxu0 0.0
    %1539 = vmatpush.xpose.msra.mxu0 0.0
    %1540 = vmatpush.xpose.msra.mxu0 0.0
    %1541 = vmatpush.xpose.msra.mxu0 0.0
    %1542 = vmatpush.xpose.msra.mxu0 0.0
    %1543 = vmatpush.xpose.msra.mxu0 0.0
    %1544 = vmatpush.xpose.msra.mxu0 0.0
    %1545 = vmatpush.xpose.msra.mxu0 0.0
    %1546 = vmatpush.xpose.msra.mxu0 0.0
    %1547 = vmatpush.xpose.msra.mxu0 0.0
    %1548 = vmatpush.xpose.msra.mxu0 0.0
    %1549 = vmatpush.xpose.msra.mxu0 0.0
    %1550 = vmatpush.xpose.msra.mxu0 0.0
    %1551 = vmatpush.xpose.msra.mxu0 0.0
    %1552 = vmatpush.xpose.msra.mxu0 %v1535
    %1553 = vmatmul.f32.gmra.mxu0 %v1533
    %v1554 = vpop.f32.mrf.mxu0
    %v1555 = vadd.f32 %v1333, %v1554
    %1556 = vdwg.mxu0
    %v1557 = vsel %vm1056, %v1555, -inf
    %1558 = vmax.xlane.f32.xlu0 %v1557
    %v1559 = vpop.xlane.xlu0 %1558
    %v1560 = vsub.f32 %v1555, %v1559
    %v1561 = vmul.f32 %v1560, 1.442695
    %v1562 = vpow.pop %v1561
    %v1563 = vsel %vm1056, %v1562, 0.0
    %1564 = vadd.xlane.f32.xlu0 %v1563
    %v1565 = vpop.xlane.xlu0 %1564
    %v1566 = vrcp.pop %v1565
    %v1567 = vmul.f32 %v1562, %v1566
    %1568 = vrot.lane.b32.xlu0 %v1046, 40
    %v1569 = vpop.permute.xlu0 %1568
    %v1572 = vsel %vm1056, %v1567, 0
    %1574 = vmatpush.msra.mxu0 0.0
    %1575 = vmatpush.msra.mxu0 0.0
    %1576 = vmatpush.msra.mxu0 0.0
    %1577 = vmatpush.msra.mxu0 0.0
    %1578 = vmatpush.msra.mxu0 0.0
    %1579 = vmatpush.msra.mxu0 0.0
    %1580 = vmatpush.msra.mxu0 0.0
    %1581 = vmatpush.msra.mxu0 0.0
    %1582 = vmatpush.msra.mxu0 0.0
    %1583 = vmatpush.msra.mxu0 0.0
    %1584 = vmatpush.msra.mxu0 0.0
    %1585 = vmatpush.msra.mxu0 0.0
    %1586 = vmatpush.msra.mxu0 0.0
    %1587 = vmatpush.msra.mxu0 0.0
    %1588 = vmatpush.msra.mxu0 0.0
    %1589 = vmatpush.msra.mxu0 %v1569
    %1590 = vmatmul.f32.gmra.mxu0 %v1572
    %v1591 = vpop.f32.mrf.mxu0
    %v1592 = vadd.f32 0.0, %v1591
    %1593 = vdwg.mxu0
    %1595 = vrot.lane.b32.xlu0 %v1462, 8
    %v1596 = vpop.permute.xlu0 %1595
    %1599 = vrot.lane.b32.xlu0 %v1527, 16
    %v1600 = vpop.permute.xlu0 %1599
    %1603 = vrot.lane.b32.xlu0 %v1592, 24
    %v1604 = vpop.permute.xlu0 %1603
    %v1606 = vsel %vm1056, %v1397, %v1596
    %v1607 = vsel %vm124, %v1606, %v1600
    %v1608 = vsel %vm1327, %v1607, %v1604
    %v1609 = vld [vmem:[%s7] sm:$0xff]
    %v1610 = vld [vmem:[%s7 + $0x8] sm:$0xff]
    %v1611 = vld [vmem:[%s7 + $0x10] sm:$0xff]
    %v1612 = vld [vmem:[%s7 + $0x18] sm:$0xff]
    %v1614 = vsel %vm63, %v1328, 0
    %v1617 = vsel %vm63, %v1608, 0
    %1619 = vmatpush.msra.mxu0 0.0
    %1620 = vmatpush.msra.mxu0 0.0
    %1621 = vmatpush.msra.mxu0 0.0
    %1622 = vmatpush.msra.mxu0 0.0
    %1623 = vmatpush.msra.mxu0 0.0
    %1624 = vmatpush.msra.mxu0 0.0
    %1625 = vmatpush.msra.mxu0 0.0
    %1626 = vmatpush.msra.mxu0 0.0
    %1627 = vmatpush.msra.mxu0 0.0
    %1628 = vmatpush.msra.mxu0 0.0
    %1629 = vmatpush.msra.mxu0 0.0
    %1630 = vmatpush.msra.mxu0 0.0
    %1631 = vmatpush.msra.mxu0 %v1612
    %1632 = vmatpush.msra.mxu0 %v1611
    %1633 = vmatpush.msra.mxu0 %v1610
    %1634 = vmatpush.msra.mxu0 %v1609
    %1635 = vmatmul.f32.gmra.mxu0 %v1614
    %v1636 = vpop.f32.mrf.mxu0
    %v1637 = vadd.f32 0.0, %v1636
    %1638 = vmatmul.f32.gmra.mxu0 %v1617
    %v1639 = vpop.f32.mrf.mxu0
    %v1640 = vadd.f32 0.0, %v1639
    %1641 = vdwg.mxu0
    %v1642 = vadd.f32 %v1009, %v1637
    %v1643 = vadd.f32 %v1010, %v1640
    %v1644 = vperm.slane %v61, 0
    %v1645 = vadd.f32 %v1642, %v1644
    %v1646 = vadd.f32 %v1643, %v1644
    %v1647 = vsel %vm63, %v1645, 0.0
    %1648 = vadd.xlane.f32.xlu0 %v1647
    %v1649 = vpop.xlane.xlu0 %1648
    %v1650 = vsel %vm63, %v1646, 0.0
    %1651 = vadd.xlane.f32.xlu0 %v1650
    %v1652 = vpop.xlane.xlu0 %1651
    %v1653 = vmul.f32 %v1649, %v76
    %v1654 = vmul.f32 %v1652, %v76
    %v1655 = vsub.f32 %v1645, %v1653
    %v1656 = vsub.f32 %v1646, %v1654
    %v1657 = vmul.f32 %v1655, %v1655
    %v1658 = vmul.f32 %v1656, %v1656
    %v1659 = vsel %vm63, %v1657, 0.0
    %1660 = vadd.xlane.f32.xlu0 %v1659
    %v1661 = vpop.xlane.xlu0 %1660
    %v1662 = vsel %vm63, %v1658, 0.0
    %1663 = vadd.xlane.f32.xlu0 %v1662
    %v1664 = vpop.xlane.xlu0 %1663
    %v1665 = vmul.f32 %v1661, %v76
    %v1666 = vmul.f32 %v1664, %v76
    %v1667 = vadd.f32 %v1665, 1e-05
    %v1668 = vadd.f32 %v1666, 1e-05
    %v1669 = vrsqrt.pop %v1667
    %v1670 = vmul.f32 %v1669, %v1667
    %v1671 = vmul.f32 %v1670, %v1669
    %v1672 = vmul.f32 0.5, %v1671
    %v1673 = vsub.f32 1.5, %v1672
    %v1674 = vmul.f32 %v1669, %v1673
    %vm1675 = vweird.f32 %v1667
    %vm1676 = vweird.f32 %v1669
    %vm1677 = vmor %vm1675, %vm1676
    %v1678 = vsel %vm1677, %v1669, %v1674
    %v1679 = vrsqrt.pop %v1668
    %v1680 = vmul.f32 %v1679, %v1668
    %v1681 = vmul.f32 %v1680, %v1679
    %v1682 = vmul.f32 0.5, %v1681
    %v1683 = vsub.f32 1.5, %v1682
    %v1684 = vmul.f32 %v1679, %v1683
    %vm1685 = vweird.f32 %v1668
    %vm1686 = vweird.f32 %v1679
    %vm1687 = vmor %vm1685, %vm1686
    %v1688 = vsel %vm1687, %v1679, %v1684
    %v1689 = vmul.f32 %v1655, %v1678
    %v1690 = vmul.f32 %v1656, %v1688
    %v1691 = vperm.slane %v60, 6
    %v1692 = vmul.f32 %v1689, %v1691
    %v1693 = vmul.f32 %v1690, %v1691
    %v1694 = vperm.slane %v60, 7
    %v1695 = vadd.f32 %v1692, %v1694
    %v1696 = vadd.f32 %v1693, %v1694
    %s1697 = scalar_lea.vmem [#allocation2], 224
    %v1698 = vld [vmem:[%s1697] sm:$0xff]
    %v1699 = vld [vmem:[%s1697 + $0x8] sm:$0xff]
    %v1700 = vld [vmem:[%s1697 + $0x10] sm:$0xff]
    %v1701 = vld [vmem:[%s1697 + $0x18] sm:$0xff]
    %v1702 = vperm.slane %v62, 6
    %v1704 = vsel %vm63, %v1695, 0
    %v1707 = vsel %vm63, %v1696, 0
    %1709 = vmatpush.msra.mxu0 0.0
    %1710 = vmatpush.msra.mxu0 0.0
    %1711 = vmatpush.msra.mxu0 0.0
    %1712 = vmatpush.msra.mxu0 0.0
    %1713 = vmatpush.msra.mxu0 0.0
    %1714 = vmatpush.msra.mxu0 0.0
    %1715 = vmatpush.msra.mxu0 0.0
    %1716 = vmatpush.msra.mxu0 0.0
    %1717 = vmatpush.msra.mxu0 0.0
    %1718 = vmatpush.msra.mxu0 0.0
    %1719 = vmatpush.msra.mxu0 0.0
    %1720 = vmatpush.msra.mxu0 0.0
    %1721 = vmatpush.msra.mxu0 %v1701
    %1722 = vmatpush.msra.mxu0 %v1700
    %1723 = vmatpush.msra.mxu0 %v1699
    %1724 = vmatpush.msra.mxu0 %v1698
    %1725 = vmatmul.f32.gmra.mxu0 %v1704
    %v1726 = vpop.f32.mrf.mxu0
    %v1727 = vadd.f32 %v1702, %v1726
    %1728 = vmatmul.f32.gmra.mxu0 %v1707
    %v1729 = vpop.f32.mrf.mxu0
    %v1730 = vadd.f32 %v1702, %v1729
    %1731 = vdwg.mxu0
    %v1732 = vxor.u32 %v1727, 2147483648
    %v1733 = vxor.u32 %v1730, 2147483648
    %v1734 = vmul.f32 %v1732, 1.442695
    %v1735 = vpow.pop %v1734
    %v1736 = vmul.f32 %v1733, 1.442695
    %v1737 = vpow.pop %v1736
    %v1738 = vadd.f32 %v1735, 1.0
    %v1739 = vadd.f32 %v1737, 1.0
    %v1740 = vrcp.pop %v1738
    %v1741 = vmul.f32 %v1738, %v1740
    %v1742 = vsub.f32 1.0, %v1741
    %v1743 = vmul.f32 %v1740, %v1742
    %v1744 = vadd.f32 %v1740, %v1743
    %vm1745 = vweird.f32 %v1738
    %vm1746 = vweird.f32 %v1740
    %vm1747 = vmor %vm1745, %vm1746
    %v1748 = vsel %vm1747, %v1740, %v1744
    %v1749 = vand.u32 2147483647, %v1738
    %vm1750 = vcmp.eq.f32.partialorder %v1749, 8.507059e+37
    %v1751 = vand.u32 %v1738, 2147483648
    %v1752 = vor.u32 1.1754944e-38, %v1751
    %v1753 = vsel %vm1750, %v1752, %v1748
    %v1754 = vmul.f32 1.0, %v1753
    %v1755 = vrcp.pop %v1739
    %v1756 = vmul.f32 %v1739, %v1755
    %v1757 = vsub.f32 1.0, %v1756
    %v1758 = vmul.f32 %v1755, %v1757
    %v1759 = vadd.f32 %v1755, %v1758
    %vm1760 = vweird.f32 %v1739
    %vm1761 = vweird.f32 %v1755
    %vm1762 = vmor %vm1760, %vm1761
    %v1763 = vsel %vm1762, %v1755, %v1759
    %v1764 = vand.u32 2147483647, %v1739
    %vm1765 = vcmp.eq.f32.partialorder %v1764, 8.507059e+37
    %v1766 = vand.u32 %v1739, 2147483648
    %v1767 = vor.u32 1.1754944e-38, %v1766
    %v1768 = vsel %vm1765, %v1767, %v1763
    %v1769 = vmul.f32 1.0, %v1768
    %v1770 = vmul.f32 %v1727, %v1754
    %v1771 = vmul.f32 %v1730, %v1769
    %s1772 = scalar_lea.vmem %s5, 64
    %v1773 = vld [vmem:[%s1772] sm:$0xff]
    %v1774 = vld [vmem:[%s1772 + $0x8] sm:$0xff]
    %v1775 = vld [vmem:[%s1772 + $0x10] sm:$0xff]
    %v1776 = vld [vmem:[%s1772 + $0x18] sm:$0xff]
    %v1777 = vld [vmem:[%s1772 + $0x20] sm:$0xff]
    %v1778 = vld [vmem:[%s1772 + $0x28] sm:$0xff]
    %v1779 = vld [vmem:[%s1772 + $0x30] sm:$0xff]
    %v1780 = vld [vmem:[%s1772 + $0x38] sm:$0xff]
    %v1781 = vperm.slane %v61, 2
    %v1783 = vsel %vm578, %v1770, 0
    %v1786 = vsel %vm578, %v1771, 0
    %1788 = vmatpush.msra.mxu0 0.0
    %1789 = vmatpush.msra.mxu0 0.0
    %1790 = vmatpush.msra.mxu0 0.0
    %1791 = vmatpush.msra.mxu0 0.0
    %1792 = vmatpush.msra.mxu0 0.0
    %1793 = vmatpush.msra.mxu0 0.0
    %1794 = vmatpush.msra.mxu0 0.0
    %1795 = vmatpush.msra.mxu0 0.0
    %1796 = vmatpush.msra.mxu0 %v1780
    %1797 = vmatpush.msra.mxu0 %v1779
    %1798 = vmatpush.msra.mxu0 %v1778
    %1799 = vmatpush.msra.mxu0 %v1777
    %1800 = vmatpush.msra.mxu0 %v1776
    %1801 = vmatpush.msra.mxu0 %v1775
    %1802 = vmatpush.msra.mxu0 %v1774
    %1803 = vmatpush.msra.mxu0 %v1773
    %1804 = vmatmul.f32.gmra.mxu0 %v1783
    %v1805 = vpop.f32.mrf.mxu0
    %v1806 = vadd.f32 %v1781, %v1805
    %1807 = vmatmul.f32.gmra.mxu0 %v1786
    %v1808 = vpop.f32.mrf.mxu0
    %v1809 = vadd.f32 %v1781, %v1808
    %1810 = vdwg.mxu0
    %v1811 = vadd.f32 %v1806, %v1645
    %v1812 = vadd.f32 %v1809, %v1646
    %s1813 = scalar_lea.vmem %s9, 16
    %v1814 = vld [vmem:[%s1813] sm:$0xff]
    %v1815 = vld [vmem:[%s1813 + $0x8] sm:$0x7]
    %s1816 = scalar_lea.vmem %s10, 8
    %v1817 = vld [vmem:[%s1816] sm:$0x7f]
    %v1818 = vsel %vm63, %v1811, 0.0
    %1819 = vadd.xlane.f32.xlu0 %v1818
    %v1820 = vpop.xlane.xlu0 %1819
    %v1821 = vsel %vm63, %v1812, 0.0
    %1822 = vadd.xlane.f32.xlu0 %v1821
    %v1823 = vpop.xlane.xlu0 %1822
    %v1824 = vmul.f32 %v1820, %v76
    %v1825 = vmul.f32 %v1823, %v76
    %v1826 = vsub.f32 %v1811, %v1824
    %v1827 = vsub.f32 %v1812, %v1825
    %v1828 = vmul.f32 %v1826, %v1826
    %v1829 = vmul.f32 %v1827, %v1827
    %v1830 = vsel %vm63, %v1828, 0.0
    %1831 = vadd.xlane.f32.xlu0 %v1830
    %v1832 = vpop.xlane.xlu0 %1831
    %v1833 = vsel %vm63, %v1829, 0.0
    %1834 = vadd.xlane.f32.xlu0 %v1833
    %v1835 = vpop.xlane.xlu0 %1834
    %v1836 = vmul.f32 %v1832, %v76
    %v1837 = vmul.f32 %v1835, %v76
    %v1838 = vadd.f32 %v1836, 1e-05
    %v1839 = vadd.f32 %v1837, 1e-05
    %v1840 = vrsqrt.pop %v1838
    %v1841 = vmul.f32 %v1840, %v1838
    %v1842 = vmul.f32 %v1841, %v1840
    %v1843 = vmul.f32 0.5, %v1842
    %v1844 = vsub.f32 1.5, %v1843
    %v1845 = vmul.f32 %v1840, %v1844
    %vm1846 = vweird.f32 %v1838
    %vm1847 = vweird.f32 %v1840
    %vm1848 = vmor %vm1846, %vm1847
    %v1849 = vsel %vm1848, %v1840, %v1845
    %v1850 = vrsqrt.pop %v1839
    %v1851 = vmul.f32 %v1850, %v1839
    %v1852 = vmul.f32 %v1851, %v1850
    %v1853 = vmul.f32 0.5, %v1852
    %v1854 = vsub.f32 1.5, %v1853
    %v1855 = vmul.f32 %v1850, %v1854
    %vm1856 = vweird.f32 %v1839
    %vm1857 = vweird.f32 %v1850
    %vm1858 = vmor %vm1856, %vm1857
    %v1859 = vsel %vm1858, %v1850, %v1855
    %v1860 = vmul.f32 %v1826, %v1849
    %v1861 = vmul.f32 %v1827, %v1859
    %v1862 = vperm.slane %v1814, 0
    %v1863 = vmul.f32 %v1860, %v1862
    %v1864 = vmul.f32 %v1861, %v1862
    %v1865 = vperm.slane %v1814, 1
    %v1866 = vadd.f32 %v1863, %v1865
    %v1867 = vadd.f32 %v1864, %v1865
    %1868 = vmatpush.msra.mxu0 0.0
    %1869 = vmatpush.msra.mxu0 0.0
    %1870 = vmatpush.msra.mxu0 0.0
    %1871 = vmatpush.msra.mxu0 0.0
    %1872 = vmatpush.msra.mxu0 0.0
    %1873 = vmatpush.msra.mxu0 0.0
    %1874 = vmatpush.msra.mxu0 0.0
    %1875 = vmatpush.msra.mxu0 0.0
    %1876 = vmatpush.msra.mxu0 0.0
    %1877 = vmatpush.msra.mxu0 0.0
    %1878 = vmatpush.msra.mxu0 0.0
    %1879 = vmatpush.msra.mxu0 0.0
    %1880 = vmatpush.msra.mxu0 0.0
    %1881 = vmatpush.msra.mxu0 0.0
    %1882 = vmatpush.msra.mxu0 %v1867
    %1883 = vmatpush.msra.mxu0 %v1866
    %1884 = vmatmul.f32.gmra.mxu0 %v126
    %v1885 = vpop.f32.mrf.mxu0
    %v1886 = vadd.f32 0.0, %v1885
    %1887 = vmatmul.f32.gmra.mxu0 %v129
    %v1888 = vpop.f32.mrf.mxu0
    %v1889 = vadd.f32 0.0, %v1888
    %1890 = vdwg.mxu0
    %s1891 = scalar_lea.vmem [#allocation2], 256
    %v1892 = vld [vmem:[%s1891] sm:$0xff]
    %v1893 = vld [vmem:[%s1891 + $0x8] sm:$0xff]
    %v1894 = vld [vmem:[%s1891 + $0x10] sm:$0xff]
    %v1895 = vld [vmem:[%s1891 + $0x18] sm:$0xff]
    %s1896 = scalar_lea.vmem [#allocation2], 288
    %v1897 = vld [vmem:[%s1896] sm:$0xff]
    %v1898 = vld [vmem:[%s1896 + $0x8] sm:$0xff]
    %v1899 = vld [vmem:[%s1896 + $0x10] sm:$0xff]
    %v1900 = vld [vmem:[%s1896 + $0x18] sm:$0xff]
    %v1902 = vsel %vm63, %v1866, 0
    %v1905 = vsel %vm63, %v1867, 0
    %1907 = vmatpush.msra.mxu0 0.0
    %1908 = vmatpush.msra.mxu0 0.0
    %1909 = vmatpush.msra.mxu0 0.0
    %1910 = vmatpush.msra.mxu0 0.0
    %1911 = vmatpush.msra.mxu0 0.0
    %1912 = vmatpush.msra.mxu0 0.0
    %1913 = vmatpush.msra.mxu0 0.0
    %1914 = vmatpush.msra.mxu0 0.0
    %1915 = vmatpush.msra.mxu0 0.0
    %1916 = vmatpush.msra.mxu0 0.0
    %1917 = vmatpush.msra.mxu0 0.0
    %1918 = vmatpush.msra.mxu0 0.0
    %1919 = vmatpush.msra.mxu0 %v1900
    %1920 = vmatpush.msra.mxu0 %v1899
    %1921 = vmatpush.msra.mxu0 %v1898
    %1922 = vmatpush.msra.mxu0 %v1897
    %1923 = vmatmul.f32.gmra.mxu0 %v1902
    %v1924 = vpop.f32.mrf.mxu0
    %v1925 = vadd.f32 0.0, %v1924
    %1926 = vmatmul.f32.gmra.mxu0 %v1905
    %v1927 = vpop.f32.mrf.mxu0
    %v1928 = vadd.f32 0.0, %v1927
    %1929 = vdwg.mxu0
    %v1931 = vsel %vm63, %v1886, 0
    %v1934 = vsel %vm63, %v1889, 0
    %1936 = vmatpush.msra.mxu0 0.0
    %1937 = vmatpush.msra.mxu0 0.0
    %1938 = vmatpush.msra.mxu0 0.0
    %1939 = vmatpush.msra.mxu0 0.0
    %1940 = vmatpush.msra.mxu0 0.0
    %1941 = vmatpush.msra.mxu0 0.0
    %1942 = vmatpush.msra.mxu0 0.0
    %1943 = vmatpush.msra.mxu0 0.0
    %1944 = vmatpush.msra.mxu0 0.0
    %1945 = vmatpush.msra.mxu0 0.0
    %1946 = vmatpush.msra.mxu0 0.0
    %1947 = vmatpush.msra.mxu0 0.0
    %1948 = vmatpush.msra.mxu0 %v1895
    %1949 = vmatpush.msra.mxu0 %v1894
    %1950 = vmatpush.msra.mxu0 %v1893
    %1951 = vmatpush.msra.mxu0 %v1892
    %1952 = vmatmul.f32.gmra.mxu0 %v1931
    %v1953 = vpop.f32.mrf.mxu0
    %v1954 = vadd.f32 %v1925, %v1953
    %1955 = vmatmul.f32.gmra.mxu0 %v1934
    %v1956 = vpop.f32.mrf.mxu0
    %v1957 = vadd.f32 %v1928, %v1956
    %1958 = vdwg.mxu0
    %1959 = vmatpush.msra.mxu0 0.0
    %1960 = vmatpush.msra.mxu0 0.0
    %1961 = vmatpush.msra.mxu0 0.0
    %1962 = vmatpush.msra.mxu0 0.0
    %1963 = vmatpush.msra.mxu0 0.0
    %1964 = vmatpush.msra.mxu0 0.0
    %1965 = vmatpush.msra.mxu0 0.0
    %1966 = vmatpush.msra.mxu0 0.0
    %1967 = vmatpush.msra.mxu0 0.0
    %1968 = vmatpush.msra.mxu0 0.0
    %1969 = vmatpush.msra.mxu0 0.0
    %1970 = vmatpush.msra.mxu0 0.0
    %1971 = vmatpush.msra.mxu0 0.0
    %1972 = vmatpush.msra.mxu0 0.0
    %1973 = vmatpush.msra.mxu0 %v1867
    %1974 = vmatpush.msra.mxu0 %v1866
    %1975 = vmatmul.f32.gmra.mxu0 %v225
    %v1976 = vpop.f32.mrf.mxu0
    %v1977 = vadd.f32 0.0, %v1976
    %1978 = vmatmul.f32.gmra.mxu0 %v228
    %v1979 = vpop.f32.mrf.mxu0
    %v1980 = vadd.f32 0.0, %v1979
    %1981 = vdwg.mxu0
    %s1982 = scalar_lea.vmem [#allocation2], 320
    %v1983 = vld [vmem:[%s1982] sm:$0xff]
    %v1984 = vld [vmem:[%s1982 + $0x8] sm:$0xff]
    %v1985 = vld [vmem:[%s1982 + $0x10] sm:$0xff]
    %v1986 = vld [vmem:[%s1982 + $0x18] sm:$0xff]
    %v1988 = vsel %vm63, %v1977, 0
    %v1991 = vsel %vm63, %v1980, 0
    %1993 = vmatpush.msra.mxu0 0.0
    %1994 = vmatpush.msra.mxu0 0.0
    %1995 = vmatpush.msra.mxu0 0.0
    %1996 = vmatpush.msra.mxu0 0.0
    %1997 = vmatpush.msra.mxu0 0.0
    %1998 = vmatpush.msra.mxu0 0.0
    %1999 = vmatpush.msra.mxu0 0.0
    %2000 = vmatpush.msra.mxu0 0.0
    %2001 = vmatpush.msra.mxu0 0.0
    %2002 = vmatpush.msra.mxu0 0.0
    %2003 = vmatpush.msra.mxu0 0.0
    %2004 = vmatpush.msra.mxu0 0.0
    %2005 = vmatpush.msra.mxu0 %v1986
    %2006 = vmatpush.msra.mxu0 %v1985
    %2007 = vmatpush.msra.mxu0 %v1984
    %2008 = vmatpush.msra.mxu0 %v1983
    %2009 = vmatmul.f32.gmra.mxu0 %v1988
    %v2010 = vpop.f32.mrf.mxu0
    %v2011 = vadd.f32 0.0, %v2010
    %2012 = vmatmul.f32.gmra.mxu0 %v1991
    %v2013 = vpop.f32.mrf.mxu0
    %v2014 = vadd.f32 0.0, %v2013
    %2015 = vdwg.mxu0
    %v2016 = vadd.f32 %v1954, %v2011
    %v2017 = vadd.f32 %v1957, %v2014
    %v2018 = vperm.slane %v1817, 0
    %v2019 = vadd.f32 %v2016, %v2018
    %v2020 = vadd.f32 %v2017, %v2018
    %v2021 = vxor.u32 %v2019, 2147483648
    %v2022 = vxor.u32 %v2020, 2147483648
    %v2023 = vmul.f32 %v2021, 1.442695
    %v2024 = vpow.pop %v2023
    %v2025 = vmul.f32 %v2022, 1.442695
    %v2026 = vpow.pop %v2025
    %v2027 = vadd.f32 %v2024, 1.0
    %v2028 = vadd.f32 %v2026, 1.0
    %v2029 = vrcp.pop %v2027
    %v2030 = vmul.f32 %v2027, %v2029
    %v2031 = vsub.f32 1.0, %v2030
    %v2032 = vmul.f32 %v2029, %v2031
    %v2033 = vadd.f32 %v2029, %v2032
    %vm2034 = vweird.f32 %v2027
    %vm2035 = vweird.f32 %v2029
    %vm2036 = vmor %vm2034, %vm2035
    %v2037 = vsel %vm2036, %v2029, %v2033
    %v2038 = vand.u32 2147483647, %v2027
    %vm2039 = vcmp.eq.f32.partialorder %v2038, 8.507059e+37
    %v2040 = vand.u32 %v2027, 2147483648
    %v2041 = vor.u32 1.1754944e-38, %v2040
    %v2042 = vsel %vm2039, %v2041, %v2037
    %v2043 = vmul.f32 1.0, %v2042
    %v2044 = vrcp.pop %v2028
    %v2045 = vmul.f32 %v2028, %v2044
    %v2046 = vsub.f32 1.0, %v2045
    %v2047 = vmul.f32 %v2044, %v2046
    %v2048 = vadd.f32 %v2044, %v2047
    %vm2049 = vweird.f32 %v2028
    %vm2050 = vweird.f32 %v2044
    %vm2051 = vmor %vm2049, %vm2050
    %v2052 = vsel %vm2051, %v2044, %v2048
    %v2053 = vand.u32 2147483647, %v2028
    %vm2054 = vcmp.eq.f32.partialorder %v2053, 8.507059e+37
    %v2055 = vand.u32 %v2028, 2147483648
    %v2056 = vor.u32 1.1754944e-38, %v2055
    %v2057 = vsel %vm2054, %v2056, %v2052
    %v2058 = vmul.f32 1.0, %v2057
    %2061 = vrot.lane.b32.xlu0 %v2043, 96
    %v2062 = vpop.permute.xlu0 %2061
    %2063 = vrot.lane.b32.xlu0 %v2058, 96
    %v2064 = vpop.permute.xlu0 %2063
    %v2067 = vmul.f32 %v2019, %v2062
    %v2068 = vmul.f32 %v2020, %v2064
    %v2069 = vsel %vm63, %v2067, 0.0
    %2070 = vadd.xlane.f32.xlu0 %v2069
    %v2071 = vpop.xlane.xlu0 %2070
    %v2072 = vsel %vm63, %v2068, 0.0
    %2073 = vadd.xlane.f32.xlu0 %v2072
    %v2074 = vpop.xlane.xlu0 %2073
    %v2075 = vmul.f32 %v2071, %v76
    %v2076 = vmul.f32 %v2074, %v76
    %v2077 = vsub.f32 %v2067, %v2075
    %v2078 = vsub.f32 %v2068, %v2076
    %v2079 = vmul.f32 %v2077, %v2077
    %v2080 = vmul.f32 %v2078, %v2078
    %v2081 = vsel %vm63, %v2079, 0.0
    %2082 = vadd.xlane.f32.xlu0 %v2081
    %v2083 = vpop.xlane.xlu0 %2082
    %v2084 = vsel %vm63, %v2080, 0.0
    %2085 = vadd.xlane.f32.xlu0 %v2084
    %v2086 = vpop.xlane.xlu0 %2085
    %v2087 = vmul.f32 %v2083, %v76
    %v2088 = vmul.f32 %v2086, %v76
    %v2089 = vadd.f32 %v2087, 1e-05
    %v2090 = vadd.f32 %v2088, 1e-05
    %v2091 = vrsqrt.pop %v2089
    %v2092 = vmul.f32 %v2091, %v2089
    %v2093 = vmul.f32 %v2092, %v2091
    %v2094 = vmul.f32 0.5, %v2093
    %v2095 = vsub.f32 1.5, %v2094
    %v2096 = vmul.f32 %v2091, %v2095
    %vm2097 = vweird.f32 %v2089
    %vm2098 = vweird.f32 %v2091
    %vm2099 = vmor %vm2097, %vm2098
    %v2100 = vsel %vm2099, %v2091, %v2096
    %v2101 = vrsqrt.pop %v2090
    %v2102 = vmul.f32 %v2101, %v2090
    %v2103 = vmul.f32 %v2102, %v2101
    %v2104 = vmul.f32 0.5, %v2103
    %v2105 = vsub.f32 1.5, %v2104
    %v2106 = vmul.f32 %v2101, %v2105
    %vm2107 = vweird.f32 %v2090
    %vm2108 = vweird.f32 %v2101
    %vm2109 = vmor %vm2107, %vm2108
    %v2110 = vsel %vm2109, %v2101, %v2106
    %v2111 = vmul.f32 %v2077, %v2100
    %v2112 = vmul.f32 %v2078, %v2110
    %v2113 = vperm.slane %v1814, 2
    %v2114 = vmul.f32 %v2111, %v2113
    %v2115 = vmul.f32 %v2112, %v2113
    %v2116 = vperm.slane %v1814, 3
    %v2117 = vadd.f32 %v2114, %v2116
    %v2118 = vadd.f32 %v2115, %v2116
    %s2119 = scalar_lea.vmem [#allocation2], 448
    %v2120 = vld [vmem:[%s2119] sm:$0xff]
    %v2121 = vld [vmem:[%s2119 + $0x8] sm:$0xff]
    %v2122 = vld [vmem:[%s2119 + $0x10] sm:$0xff]
    %v2123 = vld [vmem:[%s2119 + $0x18] sm:$0xff]
    %v2124 = vperm.slane %v1817, 1
    %v2126 = vsel %vm63, %v2117, 0
    %v2129 = vsel %vm63, %v2118, 0
    %2131 = vmatpush.msra.mxu0 0.0
    %2132 = vmatpush.msra.mxu0 0.0
    %2133 = vmatpush.msra.mxu0 0.0
    %2134 = vmatpush.msra.mxu0 0.0
    %2135 = vmatpush.msra.mxu0 0.0
    %2136 = vmatpush.msra.mxu0 0.0
    %2137 = vmatpush.msra.mxu0 0.0
    %2138 = vmatpush.msra.mxu0 0.0
    %2139 = vmatpush.msra.mxu0 0.0
    %2140 = vmatpush.msra.mxu0 0.0
    %2141 = vmatpush.msra.mxu0 0.0
    %2142 = vmatpush.msra.mxu0 0.0
    %2143 = vmatpush.msra.mxu0 %v2123
    %2144 = vmatpush.msra.mxu0 %v2122
    %2145 = vmatpush.msra.mxu0 %v2121
    %2146 = vmatpush.msra.mxu0 %v2120
    %2147 = vmatmul.f32.gmra.mxu0 %v2126
    %v2148 = vpop.f32.mrf.mxu0
    %v2149 = vadd.f32 %v2124, %v2148
    %2150 = vmatmul.f32.gmra.mxu0 %v2129
    %v2151 = vpop.f32.mrf.mxu0
    %v2152 = vadd.f32 %v2124, %v2151
    %2153 = vdwg.mxu0
    %v2154 = vmax.f32 %v2149, 0.0
    %v2155 = vmax.f32 %v2152, 0.0
    %2156 = vmatpush.msra.mxu0 0.0
    %2157 = vmatpush.msra.mxu0 0.0
    %2158 = vmatpush.msra.mxu0 0.0
    %2159 = vmatpush.msra.mxu0 0.0
    %2160 = vmatpush.msra.mxu0 0.0
    %2161 = vmatpush.msra.mxu0 0.0
    %2162 = vmatpush.msra.mxu0 0.0
    %2163 = vmatpush.msra.mxu0 0.0
    %2164 = vmatpush.msra.mxu0 0.0
    %2165 = vmatpush.msra.mxu0 0.0
    %2166 = vmatpush.msra.mxu0 0.0
    %2167 = vmatpush.msra.mxu0 0.0
    %2168 = vmatpush.msra.mxu0 0.0
    %2169 = vmatpush.msra.mxu0 0.0
    %2170 = vmatpush.msra.mxu0 %v2118
    %2171 = vmatpush.msra.mxu0 %v2117
    %2172 = vmatmul.f32.gmra.mxu0 %v126
    %v2173 = vpop.f32.mrf.mxu0
    %v2174 = vadd.f32 0.0, %v2173
    %2175 = vmatmul.f32.gmra.mxu0 %v129
    %v2176 = vpop.f32.mrf.mxu0
    %v2177 = vadd.f32 0.0, %v2176
    %2178 = vdwg.mxu0
    %s2179 = scalar_lea.vmem [#allocation2], 352
    %v2180 = vld [vmem:[%s2179] sm:$0xff]
    %v2181 = vld [vmem:[%s2179 + $0x8] sm:$0xff]
    %v2182 = vld [vmem:[%s2179 + $0x10] sm:$0xff]
    %v2183 = vld [vmem:[%s2179 + $0x18] sm:$0xff]
    %s2184 = scalar_lea.vmem [#allocation2], 384
    %v2185 = vld [vmem:[%s2184] sm:$0xff]
    %v2186 = vld [vmem:[%s2184 + $0x8] sm:$0xff]
    %v2187 = vld [vmem:[%s2184 + $0x10] sm:$0xff]
    %v2188 = vld [vmem:[%s2184 + $0x18] sm:$0xff]
    %2189 = vmatpush.msra.mxu0 0.0
    %2190 = vmatpush.msra.mxu0 0.0
    %2191 = vmatpush.msra.mxu0 0.0
    %2192 = vmatpush.msra.mxu0 0.0
    %2193 = vmatpush.msra.mxu0 0.0
    %2194 = vmatpush.msra.mxu0 0.0
    %2195 = vmatpush.msra.mxu0 0.0
    %2196 = vmatpush.msra.mxu0 0.0
    %2197 = vmatpush.msra.mxu0 0.0
    %2198 = vmatpush.msra.mxu0 0.0
    %2199 = vmatpush.msra.mxu0 0.0
    %2200 = vmatpush.msra.mxu0 0.0
    %2201 = vmatpush.msra.mxu0 %v2188
    %2202 = vmatpush.msra.mxu0 %v2187
    %2203 = vmatpush.msra.mxu0 %v2186
    %2204 = vmatpush.msra.mxu0 %v2185
    %2205 = vmatmul.f32.gmra.mxu0 %v2126
    %v2206 = vpop.f32.mrf.mxu0
    %v2207 = vadd.f32 0.0, %v2206
    %2208 = vmatmul.f32.gmra.mxu0 %v2129
    %v2209 = vpop.f32.mrf.mxu0
    %v2210 = vadd.f32 0.0, %v2209
    %2211 = vdwg.mxu0
    %v2213 = vsel %vm63, %v2174, 0
    %v2216 = vsel %vm63, %v2177, 0
    %2218 = vmatpush.msra.mxu0 0.0
    %2219 = vmatpush.msra.mxu0 0.0
    %2220 = vmatpush.msra.mxu0 0.0
    %2221 = vmatpush.msra.mxu0 0.0
    %2222 = vmatpush.msra.mxu0 0.0
    %2223 = vmatpush.msra.mxu0 0.0
    %2224 = vmatpush.msra.mxu0 0.0
    %2225 = vmatpush.msra.mxu0 0.0
    %2226 = vmatpush.msra.mxu0 0.0
    %2227 = vmatpush.msra.mxu0 0.0
    %2228 = vmatpush.msra.mxu0 0.0
    %2229 = vmatpush.msra.mxu0 0.0
    %2230 = vmatpush.msra.mxu0 %v2183
    %2231 = vmatpush.msra.mxu0 %v2182
    %2232 = vmatpush.msra.mxu0 %v2181
    %2233 = vmatpush.msra.mxu0 %v2180
    %2234 = vmatmul.f32.gmra.mxu0 %v2213
    %v2235 = vpop.f32.mrf.mxu0
    %v2236 = vadd.f32 %v2207, %v2235
    %2237 = vmatmul.f32.gmra.mxu0 %v2216
    %v2238 = vpop.f32.mrf.mxu0
    %v2239 = vadd.f32 %v2210, %v2238
    %2240 = vdwg.mxu0
    %2241 = vmatpush.msra.mxu0 0.0
    %2242 = vmatpush.msra.mxu0 0.0
    %2243 = vmatpush.msra.mxu0 0.0
    %2244 = vmatpush.msra.mxu0 0.0
    %2245 = vmatpush.msra.mxu0 0.0
    %2246 = vmatpush.msra.mxu0 0.0
    %2247 = vmatpush.msra.mxu0 0.0
    %2248 = vmatpush.msra.mxu0 0.0
    %2249 = vmatpush.msra.mxu0 0.0
    %2250 = vmatpush.msra.mxu0 0.0
    %2251 = vmatpush.msra.mxu0 0.0
    %2252 = vmatpush.msra.mxu0 0.0
    %2253 = vmatpush.msra.mxu0 0.0
    %2254 = vmatpush.msra.mxu0 0.0
    %2255 = vmatpush.msra.mxu0 %v2118
    %2256 = vmatpush.msra.mxu0 %v2117
    %2257 = vmatmul.f32.gmra.mxu0 %v225
    %v2258 = vpop.f32.mrf.mxu0
    %v2259 = vadd.f32 0.0, %v2258
    %2260 = vmatmul.f32.gmra.mxu0 %v228
    %v2261 = vpop.f32.mrf.mxu0
    %v2262 = vadd.f32 0.0, %v2261
    %2263 = vdwg.mxu0
    %s2264 = scalar_lea.vmem [#allocation2], 416
    %v2265 = vld [vmem:[%s2264] sm:$0xff]
    %v2266 = vld [vmem:[%s2264 + $0x8] sm:$0xff]
    %v2267 = vld [vmem:[%s2264 + $0x10] sm:$0xff]
    %v2268 = vld [vmem:[%s2264 + $0x18] sm:$0xff]
    %v2270 = vsel %vm63, %v2259, 0
    %v2273 = vsel %vm63, %v2262, 0
    %2275 = vmatpush.msra.mxu0 0.0
    %2276 = vmatpush.msra.mxu0 0.0
    %2277 = vmatpush.msra.mxu0 0.0
    %2278 = vmatpush.msra.mxu0 0.0
    %2279 = vmatpush.msra.mxu0 0.0
    %2280 = vmatpush.msra.mxu0 0.0
    %2281 = vmatpush.msra.mxu0 0.0
    %2282 = vmatpush.msra.mxu0 0.0
    %2283 = vmatpush.msra.mxu0 0.0
    %2284 = vmatpush.msra.mxu0 0.0
    %2285 = vmatpush.msra.mxu0 0.0
    %2286 = vmatpush.msra.mxu0 0.0
    %2287 = vmatpush.msra.mxu0 %v2268
    %2288 = vmatpush.msra.mxu0 %v2267
    %2289 = vmatpush.msra.mxu0 %v2266
    %2290 = vmatpush.msra.mxu0 %v2265
    %2291 = vmatmul.f32.gmra.mxu0 %v2270
    %v2292 = vpop.f32.mrf.mxu0
    %v2293 = vadd.f32 0.0, %v2292
    %2294 = vmatmul.f32.gmra.mxu0 %v2273
    %v2295 = vpop.f32.mrf.mxu0
    %v2296 = vadd.f32 0.0, %v2295
    %2297 = vdwg.mxu0
    %v2298 = vadd.f32 %v2236, %v2293
    %v2299 = vadd.f32 %v2239, %v2296
    %v2300 = vperm.slane %v1817, 2
    %v2301 = vadd.f32 %v2298, %v2300
    %v2302 = vadd.f32 %v2299, %v2300
    %v2303 = vmax.f32 %v2301, 0.0
    %v2304 = vmax.f32 %v2302, 0.0
    %v2305 = vadd.f32 %v2154, %v2303
    %v2306 = vadd.f32 %v2155, %v2304
    %v2307 = vsel %vm578, %v2305, 0.0
    %2308 = vadd.xlane.f32.xlu0 %v2307
    %v2309 = vpop.xlane.xlu0 %2308
    %v2310 = vsel %vm578, %v2306, 0.0
    %2311 = vadd.xlane.f32.xlu0 %v2310
    %v2312 = vpop.xlane.xlu0 %2311
    %v2313 = vmul.f32 %v2309, %v591
    %v2314 = vmul.f32 %v2312, %v591
    %v2315 = vsub.f32 %v2305, %v2313
    %v2316 = vsub.f32 %v2306, %v2314
    %v2317 = vmul.f32 %v2315, %v2315
    %v2318 = vmul.f32 %v2316, %v2316
    %v2319 = vsel %vm578, %v2317, 0.0
    %2320 = vadd.xlane.f32.xlu0 %v2319
    %v2321 = vpop.xlane.xlu0 %2320
    %v2322 = vsel %vm578, %v2318, 0.0
    %2323 = vadd.xlane.f32.xlu0 %v2322
    %v2324 = vpop.xlane.xlu0 %2323
    %v2325 = vmul.f32 %v2321, %v591
    %v2326 = vmul.f32 %v2324, %v591
    %v2327 = vadd.f32 %v2325, 1e-05
    %v2328 = vadd.f32 %v2326, 1e-05
    %v2329 = vrsqrt.pop %v2327
    %v2330 = vmul.f32 %v2329, %v2327
    %v2331 = vmul.f32 %v2330, %v2329
    %v2332 = vmul.f32 0.5, %v2331
    %v2333 = vsub.f32 1.5, %v2332
    %v2334 = vmul.f32 %v2329, %v2333
    %vm2335 = vweird.f32 %v2327
    %vm2336 = vweird.f32 %v2329
    %vm2337 = vmor %vm2335, %vm2336
    %v2338 = vsel %vm2337, %v2329, %v2334
    %v2339 = vrsqrt.pop %v2328
    %v2340 = vmul.f32 %v2339, %v2328
    %v2341 = vmul.f32 %v2340, %v2339
    %v2342 = vmul.f32 0.5, %v2341
    %v2343 = vsub.f32 1.5, %v2342
    %v2344 = vmul.f32 %v2339, %v2343
    %vm2345 = vweird.f32 %v2328
    %vm2346 = vweird.f32 %v2339
    %vm2347 = vmor %vm2345, %vm2346
    %v2348 = vsel %vm2347, %v2339, %v2344
    %v2349 = vmul.f32 %v2315, %v2338
    %v2350 = vmul.f32 %v2316, %v2348
    %v2351 = vperm.slane %v1817, 3
    %v2352 = vmul.f32 %v2349, %v2351
    %v2353 = vmul.f32 %v2350, %v2351
    %v2354 = vperm.slane %v1817, 4
    %v2355 = vadd.f32 %v2352, %v2354
    %v2356 = vadd.f32 %v2353, %v2354
    %s2357 = scalar_lea.vmem %s8, 16
    %v2358 = vld [vmem:[%s2357] sm:$0xff]
    %v2359 = vld [vmem:[%s2357 + $0x8] sm:$0x1]
    %2360 = vmatpush.msra.mxu0 0.0
    %2361 = vmatpush.msra.mxu0 0.0
    %2362 = vmatpush.msra.mxu0 0.0
    %2363 = vmatpush.msra.mxu0 0.0
    %2364 = vmatpush.msra.mxu0 0.0
    %2365 = vmatpush.msra.mxu0 0.0
    %2366 = vmatpush.msra.mxu0 0.0
    %2367 = vmatpush.msra.mxu0 0.0
    %2368 = vmatpush.msra.mxu0 0.0
    %2369 = vmatpush.msra.mxu0 0.0
    %2370 = vmatpush.msra.mxu0 0.0
    %2371 = vmatpush.msra.mxu0 0.0
    %2372 = vmatpush.msra.mxu0 0.0
    %2373 = vmatpush.msra.mxu0 0.0
    %2374 = vmatpush.msra.mxu0 %v2356
    %2375 = vmatpush.msra.mxu0 %v2355
    %2376 = vmatmul.f32.gmra.mxu0 %v641
    %v2377 = vpop.f32.mrf.mxu0
    %v2378 = vadd.f32 0.0, %v2377
    %2379 = vmatmul.f32.gmra.mxu0 %v644
    %v2380 = vpop.f32.mrf.mxu0
    %v2381 = vadd.f32 0.0, %v2380
    %2382 = vdwg.mxu0
    %v2383 = vperm.slane %v2358, 0
    %v2384 = vmul.f32 %v2378, %v2383
    %v2385 = vmul.f32 %v2381, %v2383
    %2386 = vmatpush.msra.mxu0 0.0
    %2387 = vmatpush.msra.mxu0 0.0
    %2388 = vmatpush.msra.mxu0 0.0
    %2389 = vmatpush.msra.mxu0 0.0
    %2390 = vmatpush.msra.mxu0 0.0
    %2391 = vmatpush.msra.mxu0 0.0
    %2392 = vmatpush.msra.mxu0 0.0
    %2393 = vmatpush.msra.mxu0 0.0
    %2394 = vmatpush.msra.mxu0 0.0
    %2395 = vmatpush.msra.mxu0 0.0
    %2396 = vmatpush.msra.mxu0 0.0
    %2397 = vmatpush.msra.mxu0 0.0
    %2398 = vmatpush.msra.mxu0 0.0
    %2399 = vmatpush.msra.mxu0 0.0
    %2400 = vmatpush.msra.mxu0 %v2356
    %2401 = vmatpush.msra.mxu0 %v2355
    %2402 = vmatmul.f32.gmra.mxu0 %v676
    %v2403 = vpop.f32.mrf.mxu0
    %v2404 = vadd.f32 0.0, %v2403
    %2405 = vmatmul.f32.gmra.mxu0 %v679
    %v2406 = vpop.f32.mrf.mxu0
    %v2407 = vadd.f32 0.0, %v2406
    %2408 = vdwg.mxu0
    %v2409 = vperm.slane %v2358, 1
    %v2410 = vmul.f32 %v2404, %v2409
    %v2411 = vmul.f32 %v2407, %v2409
    %v2412 = vadd.f32 %v2384, %v2410
    %v2413 = vadd.f32 %v2385, %v2411
    %2414 = vmatpush.msra.mxu0 0.0
    %2415 = vmatpush.msra.mxu0 0.0
    %2416 = vmatpush.msra.mxu0 0.0
    %2417 = vmatpush.msra.mxu0 0.0
    %2418 = vmatpush.msra.mxu0 0.0
    %2419 = vmatpush.msra.mxu0 0.0
    %2420 = vmatpush.msra.mxu0 0.0
    %2421 = vmatpush.msra.mxu0 0.0
    %2422 = vmatpush.msra.mxu0 0.0
    %2423 = vmatpush.msra.mxu0 0.0
    %2424 = vmatpush.msra.mxu0 0.0
    %2425 = vmatpush.msra.mxu0 0.0
    %2426 = vmatpush.msra.mxu0 0.0
    %2427 = vmatpush.msra.mxu0 0.0
    %2428 = vmatpush.msra.mxu0 %v2356
    %2429 = vmatpush.msra.mxu0 %v2355
    %2430 = vmatmul.f32.gmra.mxu0 %v713
    %v2431 = vpop.f32.mrf.mxu0
    %v2432 = vadd.f32 0.0, %v2431
    %2433 = vmatmul.f32.gmra.mxu0 %v716
    %v2434 = vpop.f32.mrf.mxu0
    %v2435 = vadd.f32 0.0, %v2434
    %2436 = vdwg.mxu0
    %v2437 = vperm.slane %v2358, 2
    %v2438 = vmul.f32 %v2432, %v2437
    %v2439 = vmul.f32 %v2435, %v2437
    %v2440 = vadd.f32 %v2412, %v2438
    %v2441 = vadd.f32 %v2413, %v2439
    %2442 = vmatpush.msra.mxu0 0.0
    %2443 = vmatpush.msra.mxu0 0.0
    %2444 = vmatpush.msra.mxu0 0.0
    %2445 = vmatpush.msra.mxu0 0.0
    %2446 = vmatpush.msra.mxu0 0.0
    %2447 = vmatpush.msra.mxu0 0.0
    %2448 = vmatpush.msra.mxu0 0.0
    %2449 = vmatpush.msra.mxu0 0.0
    %2450 = vmatpush.msra.mxu0 0.0
    %2451 = vmatpush.msra.mxu0 0.0
    %2452 = vmatpush.msra.mxu0 0.0
    %2453 = vmatpush.msra.mxu0 0.0
    %2454 = vmatpush.msra.mxu0 0.0
    %2455 = vmatpush.msra.mxu0 0.0
    %2456 = vmatpush.msra.mxu0 %v2356
    %2457 = vmatpush.msra.mxu0 %v2355
    %2458 = vmatmul.f32.gmra.mxu0 %v126
    %v2459 = vpop.f32.mrf.mxu0
    %v2460 = vadd.f32 0.0, %v2459
    %2461 = vmatmul.f32.gmra.mxu0 %v129
    %v2462 = vpop.f32.mrf.mxu0
    %v2463 = vadd.f32 0.0, %v2462
    %2464 = vdwg.mxu0
    %v2465 = vperm.slane %v2358, 3
    %v2466 = vmul.f32 %v2460, %v2465
    %v2467 = vmul.f32 %v2463, %v2465
    %v2468 = vadd.f32 %v2440, %v2466
    %v2469 = vadd.f32 %v2441, %v2467
    %v2470 = vperm.slane %v2358, 4
    %v2471 = vmul.f32 %v2355, %v2470
    %v2472 = vmul.f32 %v2356, %v2470
    %v2473 = vadd.f32 %v2468, %v2471
    %v2474 = vadd.f32 %v2469, %v2472
    %2475 = vmatpush.msra.mxu0 0.0
    %2476 = vmatpush.msra.mxu0 0.0
    %2477 = vmatpush.msra.mxu0 0.0
    %2478 = vmatpush.msra.mxu0 0.0
    %2479 = vmatpush.msra.mxu0 0.0
    %2480 = vmatpush.msra.mxu0 0.0
    %2481 = vmatpush.msra.mxu0 0.0
    %2482 = vmatpush.msra.mxu0 0.0
    %2483 = vmatpush.msra.mxu0 0.0
    %2484 = vmatpush.msra.mxu0 0.0
    %2485 = vmatpush.msra.mxu0 0.0
    %2486 = vmatpush.msra.mxu0 0.0
    %2487 = vmatpush.msra.mxu0 0.0
    %2488 = vmatpush.msra.mxu0 0.0
    %2489 = vmatpush.msra.mxu0 %v2356
    %2490 = vmatpush.msra.mxu0 %v2355
    %2491 = vmatmul.f32.gmra.mxu0 %v225
    %v2492 = vpop.f32.mrf.mxu0
    %v2493 = vadd.f32 0.0, %v2492
    %2494 = vmatmul.f32.gmra.mxu0 %v228
    %v2495 = vpop.f32.mrf.mxu0
    %v2496 = vadd.f32 0.0, %v2495
    %2497 = vdwg.mxu0
    %v2498 = vperm.slane %v2358, 5
    %v2499 = vmul.f32 %v2493, %v2498
    %v2500 = vmul.f32 %v2496, %v2498
    %v2501 = vadd.f32 %v2473, %v2499
    %v2502 = vadd.f32 %v2474, %v2500
    %2503 = vmatpush.msra.mxu0 0.0
    %2504 = vmatpush.msra.mxu0 0.0
    %2505 = vmatpush.msra.mxu0 0.0
    %2506 = vmatpush.msra.mxu0 0.0
    %2507 = vmatpush.msra.mxu0 0.0
    %2508 = vmatpush.msra.mxu0 0.0
    %2509 = vmatpush.msra.mxu0 0.0
    %2510 = vmatpush.msra.mxu0 0.0
    %2511 = vmatpush.msra.mxu0 0.0
    %2512 = vmatpush.msra.mxu0 0.0
    %2513 = vmatpush.msra.mxu0 0.0
    %2514 = vmatpush.msra.mxu0 0.0
    %2515 = vmatpush.msra.mxu0 0.0
    %2516 = vmatpush.msra.mxu0 0.0
    %2517 = vmatpush.msra.mxu0 %v2356
    %2518 = vmatpush.msra.mxu0 %v2355
    %2519 = vmatmul.f32.gmra.mxu0 %v811
    %v2520 = vpop.f32.mrf.mxu0
    %v2521 = vadd.f32 0.0, %v2520
    %2522 = vmatmul.f32.gmra.mxu0 %v814
    %v2523 = vpop.f32.mrf.mxu0
    %v2524 = vadd.f32 0.0, %v2523
    %2525 = vdwg.mxu0
    %v2526 = vperm.slane %v2358, 6
    %v2527 = vmul.f32 %v2521, %v2526
    %v2528 = vmul.f32 %v2524, %v2526
    %v2529 = vadd.f32 %v2501, %v2527
    %v2530 = vadd.f32 %v2502, %v2528
    %2531 = vmatpush.msra.mxu0 0.0
    %2532 = vmatpush.msra.mxu0 0.0
    %2533 = vmatpush.msra.mxu0 0.0
    %2534 = vmatpush.msra.mxu0 0.0
    %2535 = vmatpush.msra.mxu0 0.0
    %2536 = vmatpush.msra.mxu0 0.0
    %2537 = vmatpush.msra.mxu0 0.0
    %2538 = vmatpush.msra.mxu0 0.0
    %2539 = vmatpush.msra.mxu0 0.0
    %2540 = vmatpush.msra.mxu0 0.0
    %2541 = vmatpush.msra.mxu0 0.0
    %2542 = vmatpush.msra.mxu0 0.0
    %2543 = vmatpush.msra.mxu0 0.0
    %2544 = vmatpush.msra.mxu0 0.0
    %2545 = vmatpush.msra.mxu0 %v2356
    %2546 = vmatpush.msra.mxu0 %v2355
    %2547 = vmatmul.f32.gmra.mxu0 %v848
    %v2548 = vpop.f32.mrf.mxu0
    %v2549 = vadd.f32 0.0, %v2548
    %2550 = vmatmul.f32.gmra.mxu0 %v851
    %v2551 = vpop.f32.mrf.mxu0
    %v2552 = vadd.f32 0.0, %v2551
    %2553 = vdwg.mxu0
    %v2554 = vperm.slane %v2358, 7
    %v2555 = vmul.f32 %v2549, %v2554
    %v2556 = vmul.f32 %v2552, %v2554
    %v2557 = vadd.f32 %v2529, %v2555
    %v2558 = vadd.f32 %v2530, %v2556
    %2559 = vmatpush.msra.mxu0 0.0
    %2560 = vmatpush.msra.mxu0 0.0
    %2561 = vmatpush.msra.mxu0 0.0
    %2562 = vmatpush.msra.mxu0 0.0
    %2563 = vmatpush.msra.mxu0 0.0
    %2564 = vmatpush.msra.mxu0 0.0
    %2565 = vmatpush.msra.mxu0 0.0
    %2566 = vmatpush.msra.mxu0 0.0
    %2567 = vmatpush.msra.mxu0 0.0
    %2568 = vmatpush.msra.mxu0 0.0
    %2569 = vmatpush.msra.mxu0 0.0
    %2570 = vmatpush.msra.mxu0 0.0
    %2571 = vmatpush.msra.mxu0 0.0
    %2572 = vmatpush.msra.mxu0 0.0
    %2573 = vmatpush.msra.mxu0 %v2356
    %2574 = vmatpush.msra.mxu0 %v2355
    %2575 = vmatmul.f32.gmra.mxu0 %v885
    %v2576 = vpop.f32.mrf.mxu0
    %v2577 = vadd.f32 0.0, %v2576
    %2578 = vmatmul.f32.gmra.mxu0 %v888
    %v2579 = vpop.f32.mrf.mxu0
    %v2580 = vadd.f32 0.0, %v2579
    %2581 = vdwg.mxu0
    %v2582 = vperm.slane %v2359, 0
    %v2583 = vmul.f32 %v2577, %v2582
    %v2584 = vmul.f32 %v2580, %v2582
    %v2585 = vadd.f32 %v2557, %v2583
    %v2586 = vadd.f32 %v2558, %v2584
    %v2587 = vperm.slane %v1817, 5
    %v2588 = vadd.f32 %v2585, %v2587
    %v2589 = vadd.f32 %v2586, %v2587
    %s2590 = scalar_lea.vmem %s5, 128
    %v2591 = vld [vmem:[%s2590] sm:$0xff]
    %v2592 = vld [vmem:[%s2590 + $0x8] sm:$0xff]
    %v2593 = vld [vmem:[%s2590 + $0x10] sm:$0xff]
    %v2594 = vld [vmem:[%s2590 + $0x18] sm:$0xff]
    %v2595 = vld [vmem:[%s2590 + $0x20] sm:$0xff]
    %v2596 = vld [vmem:[%s2590 + $0x28] sm:$0xff]
    %v2597 = vld [vmem:[%s2590 + $0x30] sm:$0xff]
    %v2598 = vld [vmem:[%s2590 + $0x38] sm:$0xff]
    %v2599 = vperm.slane %v1815, 1
    %v2601 = vsel %vm578, %v2588, 0
    %v2604 = vsel %vm578, %v2589, 0
    %2606 = vmatpush.msra.mxu0 0.0
    %2607 = vmatpush.msra.mxu0 0.0
    %2608 = vmatpush.msra.mxu0 0.0
    %2609 = vmatpush.msra.mxu0 0.0
    %2610 = vmatpush.msra.mxu0 0.0
    %2611 = vmatpush.msra.mxu0 0.0
    %2612 = vmatpush.msra.mxu0 0.0
    %2613 = vmatpush.msra.mxu0 0.0
    %2614 = vmatpush.msra.mxu0 %v2598
    %2615 = vmatpush.msra.mxu0 %v2597
    %2616 = vmatpush.msra.mxu0 %v2596
    %2617 = vmatpush.msra.mxu0 %v2595
    %2618 = vmatpush.msra.mxu0 %v2594
    %2619 = vmatpush.msra.mxu0 %v2593
    %2620 = vmatpush.msra.mxu0 %v2592
    %2621 = vmatpush.msra.mxu0 %v2591
    %2622 = vmatmul.f32.gmra.mxu0 %v2601
    %v2623 = vpop.f32.mrf.mxu0
    %v2624 = vadd.f32 %v2599, %v2623
    %2625 = vmatmul.f32.gmra.mxu0 %v2604
    %v2626 = vpop.f32.mrf.mxu0
    %v2627 = vadd.f32 %v2599, %v2626
    %2628 = vdwg.mxu0
    %v2629 = vadd.f32 %v2624, %v2067
    %v2630 = vadd.f32 %v2627, %v2068
    %v2631 = vsel %vm63, %v2629, 0.0
    %2632 = vadd.xlane.f32.xlu0 %v2631
    %v2633 = vpop.xlane.xlu0 %2632
    %v2634 = vsel %vm63, %v2630, 0.0
    %2635 = vadd.xlane.f32.xlu0 %v2634
    %v2636 = vpop.xlane.xlu0 %2635
    %v2637 = vmul.f32 %v2633, %v76
    %v2638 = vmul.f32 %v2636, %v76
    %v2639 = vsub.f32 %v2629, %v2637
    %v2640 = vsub.f32 %v2630, %v2638
    %v2641 = vmul.f32 %v2639, %v2639
    %v2642 = vmul.f32 %v2640, %v2640
    %v2643 = vsel %vm63, %v2641, 0.0
    %2644 = vadd.xlane.f32.xlu0 %v2643
    %v2645 = vpop.xlane.xlu0 %2644
    %v2646 = vsel %vm63, %v2642, 0.0
    %2647 = vadd.xlane.f32.xlu0 %v2646
    %v2648 = vpop.xlane.xlu0 %2647
    %v2649 = vmul.f32 %v2645, %v76
    %v2650 = vmul.f32 %v2648, %v76
    %v2651 = vadd.f32 %v2649, 1e-05
    %v2652 = vadd.f32 %v2650, 1e-05
    %v2653 = vrsqrt.pop %v2651
    %v2654 = vmul.f32 %v2653, %v2651
    %v2655 = vmul.f32 %v2654, %v2653
    %v2656 = vmul.f32 0.5, %v2655
    %v2657 = vsub.f32 1.5, %v2656
    %v2658 = vmul.f32 %v2653, %v2657
    %vm2659 = vweird.f32 %v2651
    %vm2660 = vweird.f32 %v2653
    %vm2661 = vmor %vm2659, %vm2660
    %v2662 = vsel %vm2661, %v2653, %v2658
    %v2663 = vrsqrt.pop %v2652
    %v2664 = vmul.f32 %v2663, %v2652
    %v2665 = vmul.f32 %v2664, %v2663
    %v2666 = vmul.f32 0.5, %v2665
    %v2667 = vsub.f32 1.5, %v2666
    %v2668 = vmul.f32 %v2663, %v2667
    %vm2669 = vweird.f32 %v2652
    %vm2670 = vweird.f32 %v2663
    %vm2671 = vmor %vm2669, %vm2670
    %v2672 = vsel %vm2671, %v2663, %v2668
    %v2673 = vmul.f32 %v2639, %v2662
    %v2674 = vmul.f32 %v2640, %v2672
    %v2675 = vperm.slane %v1814, 4
    %v2676 = vmul.f32 %v2673, %v2675
    %v2677 = vmul.f32 %v2674, %v2675
    %v2678 = vperm.slane %v1814, 5
    %v2679 = vadd.f32 %v2676, %v2678
    %v2680 = vadd.f32 %v2677, %v2678
    %s2681 = scalar_lea.vmem %s6, 32
    %v2682 = vld [vmem:[%s2681] sm:$0xff]
    %v2683 = vld [vmem:[%s2681 + $0x8] sm:$0xff]
    %v2684 = vld [vmem:[%s2681 + $0x10] sm:$0xff]
    %v2685 = vld [vmem:[%s2681 + $0x18] sm:$0xff]
    %s2686 = scalar_lea.vmem %s11, 1
    %v2687 = vld [vmem:[%s2686] sm:$0x1]
    %v2689 = vperm.slane %v2687, 0
    %v2692 = vsel %vm63, %v2679, 0
    %v2695 = vsel %vm63, %v2680, 0
    %2697 = vmatpush.msra.mxu0 0.0
    %2698 = vmatpush.msra.mxu0 0.0
    %2699 = vmatpush.msra.mxu0 0.0
    %2700 = vmatpush.msra.mxu0 0.0
    %2701 = vmatpush.msra.mxu0 0.0
    %2702 = vmatpush.msra.mxu0 0.0
    %2703 = vmatpush.msra.mxu0 0.0
    %2704 = vmatpush.msra.mxu0 0.0
    %2705 = vmatpush.msra.mxu0 0.0
    %2706 = vmatpush.msra.mxu0 0.0
    %2707 = vmatpush.msra.mxu0 0.0
    %2708 = vmatpush.msra.mxu0 0.0
    %2709 = vmatpush.msra.mxu0 %v2685
    %2710 = vmatpush.msra.mxu0 %v2684
    %2711 = vmatpush.msra.mxu0 %v2683
    %2712 = vmatpush.msra.mxu0 %v2682
    %2713 = vmatmul.f32.gmra.mxu0 %v2692
    %v2714 = vpop.f32.mrf.mxu0
    %v2715 = vadd.f32 %v2689, %v2714
    %2716 = vmatmul.f32.gmra.mxu0 %v2695
    %v2717 = vpop.f32.mrf.mxu0
    %v2718 = vadd.f32 %v2689, %v2717
    %2719 = vdwg.mxu0
    %2721 = vrot.lane.b32.xlu0 %v2715, 96
    %v2722 = vpop.permute.xlu0 %2721
    %v2723 = vsel %vm1056, %v2715, 0
    %v2725 = vsel %vm1056, %v2722, 0
    %2727 = vmatpush.xpose.msra.mxu0 0.0
    %2728 = vmatpush.xpose.msra.mxu0 0.0
    %2729 = vmatpush.xpose.msra.mxu0 0.0
    %2730 = vmatpush.xpose.msra.mxu0 0.0
    %2731 = vmatpush.xpose.msra.mxu0 0.0
    %2732 = vmatpush.xpose.msra.mxu0 0.0
    %2733 = vmatpush.xpose.msra.mxu0 0.0
    %2734 = vmatpush.xpose.msra.mxu0 0.0
    %2735 = vmatpush.xpose.msra.mxu0 0.0
    %2736 = vmatpush.xpose.msra.mxu0 0.0
    %2737 = vmatpush.xpose.msra.mxu0 0.0
    %2738 = vmatpush.xpose.msra.mxu0 0.0
    %2739 = vmatpush.xpose.msra.mxu0 0.0
    %2740 = vmatpush.xpose.msra.mxu0 0.0
    %2741 = vmatpush.xpose.msra.mxu0 0.0
    %2742 = vmatpush.xpose.msra.mxu0 %v2725
    %2743 = vmatmul.f32.gmra.mxu0 %v2723
    %v2744 = vpop.f32.mrf.mxu0
    %v2745 = vadd.f32 %v1051, %v2744
    %2746 = vdwg.mxu0
    %v2747 = vsel %vm1056, %v2745, -inf
    %2748 = vmax.xlane.f32.xlu0 %v2747
    %v2749 = vpop.xlane.xlu0 %2748
    %v2750 = vsub.f32 %v2745, %v2749
    %v2751 = vmul.f32 %v2750, 1.442695
    %v2752 = vpow.pop %v2751
    %v2753 = vsel %vm1056, %v2752, 0.0
    %2754 = vadd.xlane.f32.xlu0 %v2753
    %v2755 = vpop.xlane.xlu0 %2754
    %v2756 = vrcp.pop %v2755
    %v2757 = vmul.f32 %v2752, %v2756
    %2758 = vrot.lane.b32.xlu0 %v2715, 64
    %v2759 = vpop.permute.xlu0 %2758
    %v2762 = vsel %vm1056, %v2757, 0
    %2764 = vmatpush.msra.mxu0 0.0
    %2765 = vmatpush.msra.mxu0 0.0
    %2766 = vmatpush.msra.mxu0 0.0
    %2767 = vmatpush.msra.mxu0 0.0
    %2768 = vmatpush.msra.mxu0 0.0
    %2769 = vmatpush.msra.mxu0 0.0
    %2770 = vmatpush.msra.mxu0 0.0
    %2771 = vmatpush.msra.mxu0 0.0
    %2772 = vmatpush.msra.mxu0 0.0
    %2773 = vmatpush.msra.mxu0 0.0
    %2774 = vmatpush.msra.mxu0 0.0
    %2775 = vmatpush.msra.mxu0 0.0
    %2776 = vmatpush.msra.mxu0 0.0
    %2777 = vmatpush.msra.mxu0 0.0
    %2778 = vmatpush.msra.mxu0 0.0
    %2779 = vmatpush.msra.mxu0 %v2759
    %2780 = vmatmul.f32.gmra.mxu0 %v2762
    %v2781 = vpop.f32.mrf.mxu0
    %v2782 = vadd.f32 0.0, %v2781
    %2783 = vdwg.mxu0
    %2784 = vrot.lane.b32.xlu0 %v2715, 120
    %v2785 = vpop.permute.xlu0 %2784
    %2786 = vrot.lane.b32.xlu0 %v2715, 88
    %v2787 = vpop.permute.xlu0 %2786
    %v2788 = vsel %vm1056, %v2785, 0
    %v2790 = vsel %vm1056, %v2787, 0
    %2792 = vmatpush.xpose.msra.mxu0 0.0
    %2793 = vmatpush.xpose.msra.mxu0 0.0
    %2794 = vmatpush.xpose.msra.mxu0 0.0
    %2795 = vmatpush.xpose.msra.mxu0 0.0
    %2796 = vmatpush.xpose.msra.mxu0 0.0
    %2797 = vmatpush.xpose.msra.mxu0 0.0
    %2798 = vmatpush.xpose.msra.mxu0 0.0
    %2799 = vmatpush.xpose.msra.mxu0 0.0
    %2800 = vmatpush.xpose.msra.mxu0 0.0
    %2801 = vmatpush.xpose.msra.mxu0 0.0
    %2802 = vmatpush.xpose.msra.mxu0 0.0
    %2803 = vmatpush.xpose.msra.mxu0 0.0
    %2804 = vmatpush.xpose.msra.mxu0 0.0
    %2805 = vmatpush.xpose.msra.mxu0 0.0
    %2806 = vmatpush.xpose.msra.mxu0 0.0
    %2807 = vmatpush.xpose.msra.mxu0 %v2790
    %2808 = vmatmul.f32.gmra.mxu0 %v2788
    %v2809 = vpop.f32.mrf.mxu0
    %v2810 = vadd.f32 %v1051, %v2809
    %2811 = vdwg.mxu0
    %v2812 = vsel %vm1056, %v2810, -inf
    %2813 = vmax.xlane.f32.xlu0 %v2812
    %v2814 = vpop.xlane.xlu0 %2813
    %v2815 = vsub.f32 %v2810, %v2814
    %v2816 = vmul.f32 %v2815, 1.442695
    %v2817 = vpow.pop %v2816
    %v2818 = vsel %vm1056, %v2817, 0.0
    %2819 = vadd.xlane.f32.xlu0 %v2818
    %v2820 = vpop.xlane.xlu0 %2819
    %v2821 = vrcp.pop %v2820
    %v2822 = vmul.f32 %v2817, %v2821
    %2823 = vrot.lane.b32.xlu0 %v2715, 56
    %v2824 = vpop.permute.xlu0 %2823
    %v2827 = vsel %vm1056, %v2822, 0
    %2829 = vmatpush.msra.mxu0 0.0
    %2830 = vmatpush.msra.mxu0 0.0
    %2831 = vmatpush.msra.mxu0 0.0
    %2832 = vmatpush.msra.mxu0 0.0
    %2833 = vmatpush.msra.mxu0 0.0
    %2834 = vmatpush.msra.mxu0 0.0
    %2835 = vmatpush.msra.mxu0 0.0
    %2836 = vmatpush.msra.mxu0 0.0
    %2837 = vmatpush.msra.mxu0 0.0
    %2838 = vmatpush.msra.mxu0 0.0
    %2839 = vmatpush.msra.mxu0 0.0
    %2840 = vmatpush.msra.mxu0 0.0
    %2841 = vmatpush.msra.mxu0 0.0
    %2842 = vmatpush.msra.mxu0 0.0
    %2843 = vmatpush.msra.mxu0 0.0
    %2844 = vmatpush.msra.mxu0 %v2824
    %2845 = vmatmul.f32.gmra.mxu0 %v2827
    %v2846 = vpop.f32.mrf.mxu0
    %v2847 = vadd.f32 0.0, %v2846
    %2848 = vdwg.mxu0
    %2849 = vrot.lane.b32.xlu0 %v2715, 112
    %v2850 = vpop.permute.xlu0 %2849
    %2851 = vrot.lane.b32.xlu0 %v2715, 80
    %v2852 = vpop.permute.xlu0 %2851
    %v2853 = vsel %vm1056, %v2850, 0
    %v2855 = vsel %vm1056, %v2852, 0
    %2857 = vmatpush.xpose.msra.mxu0 0.0
    %2858 = vmatpush.xpose.msra.mxu0 0.0
    %2859 = vmatpush.xpose.msra.mxu0 0.0
    %2860 = vmatpush.xpose.msra.mxu0 0.0
    %2861 = vmatpush.xpose.msra.mxu0 0.0
    %2862 = vmatpush.xpose.msra.mxu0 0.0
    %2863 = vmatpush.xpose.msra.mxu0 0.0
    %2864 = vmatpush.xpose.msra.mxu0 0.0
    %2865 = vmatpush.xpose.msra.mxu0 0.0
    %2866 = vmatpush.xpose.msra.mxu0 0.0
    %2867 = vmatpush.xpose.msra.mxu0 0.0
    %2868 = vmatpush.xpose.msra.mxu0 0.0
    %2869 = vmatpush.xpose.msra.mxu0 0.0
    %2870 = vmatpush.xpose.msra.mxu0 0.0
    %2871 = vmatpush.xpose.msra.mxu0 0.0
    %2872 = vmatpush.xpose.msra.mxu0 %v2855
    %2873 = vmatmul.f32.gmra.mxu0 %v2853
    %v2874 = vpop.f32.mrf.mxu0
    %v2875 = vadd.f32 %v1051, %v2874
    %2876 = vdwg.mxu0
    %v2877 = vsel %vm1056, %v2875, -inf
    %2878 = vmax.xlane.f32.xlu0 %v2877
    %v2879 = vpop.xlane.xlu0 %2878
    %v2880 = vsub.f32 %v2875, %v2879
    %v2881 = vmul.f32 %v2880, 1.442695
    %v2882 = vpow.pop %v2881
    %v2883 = vsel %vm1056, %v2882, 0.0
    %2884 = vadd.xlane.f32.xlu0 %v2883
    %v2885 = vpop.xlane.xlu0 %2884
    %v2886 = vrcp.pop %v2885
    %v2887 = vmul.f32 %v2882, %v2886
    %2888 = vrot.lane.b32.xlu0 %v2715, 48
    %v2889 = vpop.permute.xlu0 %2888
    %v2892 = vsel %vm1056, %v2887, 0
    %2894 = vmatpush.msra.mxu0 0.0
    %2895 = vmatpush.msra.mxu0 0.0
    %2896 = vmatpush.msra.mxu0 0.0
    %2897 = vmatpush.msra.mxu0 0.0
    %2898 = vmatpush.msra.mxu0 0.0
    %2899 = vmatpush.msra.mxu0 0.0
    %2900 = vmatpush.msra.mxu0 0.0
    %2901 = vmatpush.msra.mxu0 0.0
    %2902 = vmatpush.msra.mxu0 0.0
    %2903 = vmatpush.msra.mxu0 0.0
    %2904 = vmatpush.msra.mxu0 0.0
    %2905 = vmatpush.msra.mxu0 0.0
    %2906 = vmatpush.msra.mxu0 0.0
    %2907 = vmatpush.msra.mxu0 0.0
    %2908 = vmatpush.msra.mxu0 0.0
    %2909 = vmatpush.msra.mxu0 %v2889
    %2910 = vmatmul.f32.gmra.mxu0 %v2892
    %v2911 = vpop.f32.mrf.mxu0
    %v2912 = vadd.f32 0.0, %v2911
    %2913 = vdwg.mxu0
    %2914 = vrot.lane.b32.xlu0 %v2715, 104
    %v2915 = vpop.permute.xlu0 %2914
    %2916 = vrot.lane.b32.xlu0 %v2715, 72
    %v2917 = vpop.permute.xlu0 %2916
    %v2918 = vsel %vm1056, %v2915, 0
    %v2920 = vsel %vm1056, %v2917, 0
    %2922 = vmatpush.xpose.msra.mxu0 0.0
    %2923 = vmatpush.xpose.msra.mxu0 0.0
    %2924 = vmatpush.xpose.msra.mxu0 0.0
    %2925 = vmatpush.xpose.msra.mxu0 0.0
    %2926 = vmatpush.xpose.msra.mxu0 0.0
    %2927 = vmatpush.xpose.msra.mxu0 0.0
    %2928 = vmatpush.xpose.msra.mxu0 0.0
    %2929 = vmatpush.xpose.msra.mxu0 0.0
    %2930 = vmatpush.xpose.msra.mxu0 0.0
    %2931 = vmatpush.xpose.msra.mxu0 0.0
    %2932 = vmatpush.xpose.msra.mxu0 0.0
    %2933 = vmatpush.xpose.msra.mxu0 0.0
    %2934 = vmatpush.xpose.msra.mxu0 0.0
    %2935 = vmatpush.xpose.msra.mxu0 0.0
    %2936 = vmatpush.xpose.msra.mxu0 0.0
    %2937 = vmatpush.xpose.msra.mxu0 %v2920
    %2938 = vmatmul.f32.gmra.mxu0 %v2918
    %v2939 = vpop.f32.mrf.mxu0
    %v2940 = vadd.f32 %v1051, %v2939
    %2941 = vdwg.mxu0
    %v2942 = vsel %vm1056, %v2940, -inf
    %2943 = vmax.xlane.f32.xlu0 %v2942
    %v2944 = vpop.xlane.xlu0 %2943
    %v2945 = vsub.f32 %v2940, %v2944
    %v2946 = vmul.f32 %v2945, 1.442695
    %v2947 = vpow.pop %v2946
    %v2948 = vsel %vm1056, %v2947, 0.0
    %2949 = vadd.xlane.f32.xlu0 %v2948
    %v2950 = vpop.xlane.xlu0 %2949
    %v2951 = vrcp.pop %v2950
    %v2952 = vmul.f32 %v2947, %v2951
    %2953 = vrot.lane.b32.xlu0 %v2715, 40
    %v2954 = vpop.permute.xlu0 %2953
    %v2957 = vsel %vm1056, %v2952, 0
    %2959 = vmatpush.msra.mxu0 0.0
    %2960 = vmatpush.msra.mxu0 0.0
    %2961 = vmatpush.msra.mxu0 0.0
    %2962 = vmatpush.msra.mxu0 0.0
    %2963 = vmatpush.msra.mxu0 0.0
    %2964 = vmatpush.msra.mxu0 0.0
    %2965 = vmatpush.msra.mxu0 0.0
    %2966 = vmatpush.msra.mxu0 0.0
    %2967 = vmatpush.msra.mxu0 0.0
    %2968 = vmatpush.msra.mxu0 0.0
    %2969 = vmatpush.msra.mxu0 0.0
    %2970 = vmatpush.msra.mxu0 0.0
    %2971 = vmatpush.msra.mxu0 0.0
    %2972 = vmatpush.msra.mxu0 0.0
    %2973 = vmatpush.msra.mxu0 0.0
    %2974 = vmatpush.msra.mxu0 %v2954
    %2975 = vmatmul.f32.gmra.mxu0 %v2957
    %v2976 = vpop.f32.mrf.mxu0
    %v2977 = vadd.f32 0.0, %v2976
    %2978 = vdwg.mxu0
    %2980 = vrot.lane.b32.xlu0 %v2847, 8
    %v2981 = vpop.permute.xlu0 %2980
    %2984 = vrot.lane.b32.xlu0 %v2912, 16
    %v2985 = vpop.permute.xlu0 %2984
    %2988 = vrot.lane.b32.xlu0 %v2977, 24
    %v2989 = vpop.permute.xlu0 %2988
    %v2991 = vsel %vm1056, %v2782, %v2981
    %v2992 = vsel %vm124, %v2991, %v2985
    %v2993 = vsel %vm1327, %v2992, %v2989
    %2995 = vrot.lane.b32.xlu0 %v2718, 96
    %v2996 = vpop.permute.xlu0 %2995
    %v2997 = vsel %vm1056, %v2718, 0
    %v2999 = vsel %vm1056, %v2996, 0
    %3001 = vmatpush.xpose.msra.mxu0 0.0
    %3002 = vmatpush.xpose.msra.mxu0 0.0
    %3003 = vmatpush.xpose.msra.mxu0 0.0
    %3004 = vmatpush.xpose.msra.mxu0 0.0
    %3005 = vmatpush.xpose.msra.mxu0 0.0
    %3006 = vmatpush.xpose.msra.mxu0 0.0
    %3007 = vmatpush.xpose.msra.mxu0 0.0
    %3008 = vmatpush.xpose.msra.mxu0 0.0
    %3009 = vmatpush.xpose.msra.mxu0 0.0
    %3010 = vmatpush.xpose.msra.mxu0 0.0
    %3011 = vmatpush.xpose.msra.mxu0 0.0
    %3012 = vmatpush.xpose.msra.mxu0 0.0
    %3013 = vmatpush.xpose.msra.mxu0 0.0
    %3014 = vmatpush.xpose.msra.mxu0 0.0
    %3015 = vmatpush.xpose.msra.mxu0 0.0
    %3016 = vmatpush.xpose.msra.mxu0 %v2999
    %3017 = vmatmul.f32.gmra.mxu0 %v2997
    %v3018 = vpop.f32.mrf.mxu0
    %v3019 = vadd.f32 %v1333, %v3018
    %3020 = vdwg.mxu0
    %v3021 = vsel %vm1056, %v3019, -inf
    %3022 = vmax.xlane.f32.xlu0 %v3021
    %v3023 = vpop.xlane.xlu0 %3022
    %v3024 = vsub.f32 %v3019, %v3023
    %v3025 = vmul.f32 %v3024, 1.442695
    %v3026 = vpow.pop %v3025
    %v3027 = vsel %vm1056, %v3026, 0.0
    %3028 = vadd.xlane.f32.xlu0 %v3027
    %v3029 = vpop.xlane.xlu0 %3028
    %v3030 = vrcp.pop %v3029
    %v3031 = vmul.f32 %v3026, %v3030
    %3032 = vrot.lane.b32.xlu0 %v2718, 64
    %v3033 = vpop.permute.xlu0 %3032
    %v3036 = vsel %vm1056, %v3031, 0
    %3038 = vmatpush.msra.mxu0 0.0
    %3039 = vmatpush.msra.mxu0 0.0
    %3040 = vmatpush.msra.mxu0 0.0
    %3041 = vmatpush.msra.mxu0 0.0
    %3042 = vmatpush.msra.mxu0 0.0
    %3043 = vmatpush.msra.mxu0 0.0
    %3044 = vmatpush.msra.mxu0 0.0
    %3045 = vmatpush.msra.mxu0 0.0
    %3046 = vmatpush.msra.mxu0 0.0
    %3047 = vmatpush.msra.mxu0 0.0
    %3048 = vmatpush.msra.mxu0 0.0
    %3049 = vmatpush.msra.mxu0 0.0
    %3050 = vmatpush.msra.mxu0 0.0
    %3051 = vmatpush.msra.mxu0 0.0
    %3052 = vmatpush.msra.mxu0 0.0
    %3053 = vmatpush.msra.mxu0 %v3033
    %3054 = vmatmul.f32.gmra.mxu0 %v3036
    %v3055 = vpop.f32.mrf.mxu0
    %v3056 = vadd.f32 0.0, %v3055
    %3057 = vdwg.mxu0
    %3058 = vrot.lane.b32.xlu0 %v2718, 120
    %v3059 = vpop.permute.xlu0 %3058
    %3060 = vrot.lane.b32.xlu0 %v2718, 88
    %v3061 = vpop.permute.xlu0 %3060
    %v3062 = vsel %vm1056, %v3059, 0
    %v3064 = vsel %vm1056, %v3061, 0
    %3066 = vmatpush.xpose.msra.mxu0 0.0
    %3067 = vmatpush.xpose.msra.mxu0 0.0
    %3068 = vmatpush.xpose.msra.mxu0 0.0
    %3069 = vmatpush.xpose.msra.mxu0 0.0
    %3070 = vmatpush.xpose.msra.mxu0 0.0
    %3071 = vmatpush.xpose.msra.mxu0 0.0
    %3072 = vmatpush.xpose.msra.mxu0 0.0
    %3073 = vmatpush.xpose.msra.mxu0 0.0
    %3074 = vmatpush.xpose.msra.mxu0 0.0
    %3075 = vmatpush.xpose.msra.mxu0 0.0
    %3076 = vmatpush.xpose.msra.mxu0 0.0
    %3077 = vmatpush.xpose.msra.mxu0 0.0
    %3078 = vmatpush.xpose.msra.mxu0 0.0
    %3079 = vmatpush.xpose.msra.mxu0 0.0
    %3080 = vmatpush.xpose.msra.mxu0 0.0
    %3081 = vmatpush.xpose.msra.mxu0 %v3064
    %3082 = vmatmul.f32.gmra.mxu0 %v3062
    %v3083 = vpop.f32.mrf.mxu0
    %v3084 = vadd.f32 %v1333, %v3083
    %3085 = vdwg.mxu0
    %v3086 = vsel %vm1056, %v3084, -inf
    %3087 = vmax.xlane.f32.xlu0 %v3086
    %v3088 = vpop.xlane.xlu0 %3087
    %v3089 = vsub.f32 %v3084, %v3088
    %v3090 = vmul.f32 %v3089, 1.442695
    %v3091 = vpow.pop %v3090
    %v3092 = vsel %vm1056, %v3091, 0.0
    %3093 = vadd.xlane.f32.xlu0 %v3092
    %v3094 = vpop.xlane.xlu0 %3093
    %v3095 = vrcp.pop %v3094
    %v3096 = vmul.f32 %v3091, %v3095
    %3097 = vrot.lane.b32.xlu0 %v2718, 56
    %v3098 = vpop.permute.xlu0 %3097
    %v3101 = vsel %vm1056, %v3096, 0
    %3103 = vmatpush.msra.mxu0 0.0
    %3104 = vmatpush.msra.mxu0 0.0
    %3105 = vmatpush.msra.mxu0 0.0
    %3106 = vmatpush.msra.mxu0 0.0
    %3107 = vmatpush.msra.mxu0 0.0
    %3108 = vmatpush.msra.mxu0 0.0
    %3109 = vmatpush.msra.mxu0 0.0
    %3110 = vmatpush.msra.mxu0 0.0
    %3111 = vmatpush.msra.mxu0 0.0
    %3112 = vmatpush.msra.mxu0 0.0
    %3113 = vmatpush.msra.mxu0 0.0
    %3114 = vmatpush.msra.mxu0 0.0
    %3115 = vmatpush.msra.mxu0 0.0
    %3116 = vmatpush.msra.mxu0 0.0
    %3117 = vmatpush.msra.mxu0 0.0
    %3118 = vmatpush.msra.mxu0 %v3098
    %3119 = vmatmul.f32.gmra.mxu0 %v3101
    %v3120 = vpop.f32.mrf.mxu0
    %v3121 = vadd.f32 0.0, %v3120
    %3122 = vdwg.mxu0
    %3123 = vrot.lane.b32.xlu0 %v2718, 112
    %v3124 = vpop.permute.xlu0 %3123
    %3125 = vrot.lane.b32.xlu0 %v2718, 80
    %v3126 = vpop.permute.xlu0 %3125
    %v3127 = vsel %vm1056, %v3124, 0
    %v3129 = vsel %vm1056, %v3126, 0
    %3131 = vmatpush.xpose.msra.mxu0 0.0
    %3132 = vmatpush.xpose.msra.mxu0 0.0
    %3133 = vmatpush.xpose.msra.mxu0 0.0
    %3134 = vmatpush.xpose.msra.mxu0 0.0
    %3135 = vmatpush.xpose.msra.mxu0 0.0
    %3136 = vmatpush.xpose.msra.mxu0 0.0
    %3137 = vmatpush.xpose.msra.mxu0 0.0
    %3138 = vmatpush.xpose.msra.mxu0 0.0
    %3139 = vmatpush.xpose.msra.mxu0 0.0
    %3140 = vmatpush.xpose.msra.mxu0 0.0
    %3141 = vmatpush.xpose.msra.mxu0 0.0
    %3142 = vmatpush.xpose.msra.mxu0 0.0
    %3143 = vmatpush.xpose.msra.mxu0 0.0
    %3144 = vmatpush.xpose.msra.mxu0 0.0
    %3145 = vmatpush.xpose.msra.mxu0 0.0
    %3146 = vmatpush.xpose.msra.mxu0 %v3129
    %3147 = vmatmul.f32.gmra.mxu0 %v3127
    %v3148 = vpop.f32.mrf.mxu0
    %v3149 = vadd.f32 %v1333, %v3148
    %3150 = vdwg.mxu0
    %v3151 = vsel %vm1056, %v3149, -inf
    %3152 = vmax.xlane.f32.xlu0 %v3151
    %v3153 = vpop.xlane.xlu0 %3152
    %v3154 = vsub.f32 %v3149, %v3153
    %v3155 = vmul.f32 %v3154, 1.442695
    %v3156 = vpow.pop %v3155
    %v3157 = vsel %vm1056, %v3156, 0.0
    %3158 = vadd.xlane.f32.xlu0 %v3157
    %v3159 = vpop.xlane.xlu0 %3158
    %v3160 = vrcp.pop %v3159
    %v3161 = vmul.f32 %v3156, %v3160
    %3162 = vrot.lane.b32.xlu0 %v2718, 48
    %v3163 = vpop.permute.xlu0 %3162
    %v3166 = vsel %vm1056, %v3161, 0
    %3168 = vmatpush.msra.mxu0 0.0
    %3169 = vmatpush.msra.mxu0 0.0
    %3170 = vmatpush.msra.mxu0 0.0
    %3171 = vmatpush.msra.mxu0 0.0
    %3172 = vmatpush.msra.mxu0 0.0
    %3173 = vmatpush.msra.mxu0 0.0
    %3174 = vmatpush.msra.mxu0 0.0
    %3175 = vmatpush.msra.mxu0 0.0
    %3176 = vmatpush.msra.mxu0 0.0
    %3177 = vmatpush.msra.mxu0 0.0
    %3178 = vmatpush.msra.mxu0 0.0
    %3179 = vmatpush.msra.mxu0 0.0
    %3180 = vmatpush.msra.mxu0 0.0
    %3181 = vmatpush.msra.mxu0 0.0
    %3182 = vmatpush.msra.mxu0 0.0
    %3183 = vmatpush.msra.mxu0 %v3163
    %3184 = vmatmul.f32.gmra.mxu0 %v3166
    %v3185 = vpop.f32.mrf.mxu0
    %v3186 = vadd.f32 0.0, %v3185
    %3187 = vdwg.mxu0
    %3188 = vrot.lane.b32.xlu0 %v2718, 104
    %v3189 = vpop.permute.xlu0 %3188
    %3190 = vrot.lane.b32.xlu0 %v2718, 72
    %v3191 = vpop.permute.xlu0 %3190
    %v3192 = vsel %vm1056, %v3189, 0
    %v3194 = vsel %vm1056, %v3191, 0
    %3196 = vmatpush.xpose.msra.mxu0 0.0
    %3197 = vmatpush.xpose.msra.mxu0 0.0
    %3198 = vmatpush.xpose.msra.mxu0 0.0
    %3199 = vmatpush.xpose.msra.mxu0 0.0
    %3200 = vmatpush.xpose.msra.mxu0 0.0
    %3201 = vmatpush.xpose.msra.mxu0 0.0
    %3202 = vmatpush.xpose.msra.mxu0 0.0
    %3203 = vmatpush.xpose.msra.mxu0 0.0
    %3204 = vmatpush.xpose.msra.mxu0 0.0
    %3205 = vmatpush.xpose.msra.mxu0 0.0
    %3206 = vmatpush.xpose.msra.mxu0 0.0
    %3207 = vmatpush.xpose.msra.mxu0 0.0
    %3208 = vmatpush.xpose.msra.mxu0 0.0
    %3209 = vmatpush.xpose.msra.mxu0 0.0
    %3210 = vmatpush.xpose.msra.mxu0 0.0
    %3211 = vmatpush.xpose.msra.mxu0 %v3194
    %3212 = vmatmul.f32.gmra.mxu0 %v3192
    %v3213 = vpop.f32.mrf.mxu0
    %v3214 = vadd.f32 %v1333, %v3213
    %3215 = vdwg.mxu0
    %v3216 = vsel %vm1056, %v3214, -inf
    %3217 = vmax.xlane.f32.xlu0 %v3216
    %v3218 = vpop.xlane.xlu0 %3217
    %v3219 = vsub.f32 %v3214, %v3218
    %v3220 = vmul.f32 %v3219, 1.442695
    %v3221 = vpow.pop %v3220
    %v3222 = vsel %vm1056, %v3221, 0.0
    %3223 = vadd.xlane.f32.xlu0 %v3222
    %v3224 = vpop.xlane.xlu0 %3223
    %v3225 = vrcp.pop %v3224
    %v3226 = vmul.f32 %v3221, %v3225
    %3227 = vrot.lane.b32.xlu0 %v2718, 40
    %v3228 = vpop.permute.xlu0 %3227
    %v3231 = vsel %vm1056, %v3226, 0
    %3233 = vmatpush.msra.mxu0 0.0
    %3234 = vmatpush.msra.mxu0 0.0
    %3235 = vmatpush.msra.mxu0 0.0
    %3236 = vmatpush.msra.mxu0 0.0
    %3237 = vmatpush.msra.mxu0 0.0
    %3238 = vmatpush.msra.mxu0 0.0
    %3239 = vmatpush.msra.mxu0 0.0
    %3240 = vmatpush.msra.mxu0 0.0
    %3241 = vmatpush.msra.mxu0 0.0
    %3242 = vmatpush.msra.mxu0 0.0
    %3243 = vmatpush.msra.mxu0 0.0
    %3244 = vmatpush.msra.mxu0 0.0
    %3245 = vmatpush.msra.mxu0 0.0
    %3246 = vmatpush.msra.mxu0 0.0
    %3247 = vmatpush.msra.mxu0 0.0
    %3248 = vmatpush.msra.mxu0 %v3228
    %3249 = vmatmul.f32.gmra.mxu0 %v3231
    %v3250 = vpop.f32.mrf.mxu0
    %v3251 = vadd.f32 0.0, %v3250
    %3252 = vdwg.mxu0
    %3254 = vrot.lane.b32.xlu0 %v3121, 8
    %v3255 = vpop.permute.xlu0 %3254
    %3258 = vrot.lane.b32.xlu0 %v3186, 16
    %v3259 = vpop.permute.xlu0 %3258
    %3262 = vrot.lane.b32.xlu0 %v3251, 24
    %v3263 = vpop.permute.xlu0 %3262
    %v3265 = vsel %vm1056, %v3056, %v3255
    %v3266 = vsel %vm124, %v3265, %v3259
    %v3267 = vsel %vm1327, %v3266, %v3263
    %s3268 = scalar_lea.vmem %s7, 32
    %v3269 = vld [vmem:[%s3268] sm:$0xff]
    %v3270 = vld [vmem:[%s3268 + $0x8] sm:$0xff]
    %v3271 = vld [vmem:[%s3268 + $0x10] sm:$0xff]
    %v3272 = vld [vmem:[%s3268 + $0x18] sm:$0xff]
    %v3274 = vsel %vm63, %v2993, 0
    %v3277 = vsel %vm63, %v3267, 0
    %3279 = vmatpush.msra.mxu0 0.0
    %3280 = vmatpush.msra.mxu0 0.0
    %3281 = vmatpush.msra.mxu0 0.0
    %3282 = vmatpush.msra.mxu0 0.0
    %3283 = vmatpush.msra.mxu0 0.0
    %3284 = vmatpush.msra.mxu0 0.0
    %3285 = vmatpush.msra.mxu0 0.0
    %3286 = vmatpush.msra.mxu0 0.0
    %3287 = vmatpush.msra.mxu0 0.0
    %3288 = vmatpush.msra.mxu0 0.0
    %3289 = vmatpush.msra.mxu0 0.0
    %3290 = vmatpush.msra.mxu0 0.0
    %3291 = vmatpush.msra.mxu0 %v3272
    %3292 = vmatpush.msra.mxu0 %v3271
    %3293 = vmatpush.msra.mxu0 %v3270
    %3294 = vmatpush.msra.mxu0 %v3269
    %3295 = vmatmul.f32.gmra.mxu0 %v3274
    %v3296 = vpop.f32.mrf.mxu0
    %v3297 = vadd.f32 0.0, %v3296
    %3298 = vmatmul.f32.gmra.mxu0 %v3277
    %v3299 = vpop.f32.mrf.mxu0
    %v3300 = vadd.f32 0.0, %v3299
    %3301 = vdwg.mxu0
    %v3302 = vadd.f32 %v2679, %v3297
    %v3303 = vadd.f32 %v2680, %v3300
    %v3304 = vperm.slane %v1815, 0
    %v3305 = vadd.f32 %v3302, %v3304
    %v3306 = vadd.f32 %v3303, %v3304
    %v3307 = vsel %vm63, %v3305, 0.0
    %3308 = vadd.xlane.f32.xlu0 %v3307
    %v3309 = vpop.xlane.xlu0 %3308
    %v3310 = vsel %vm63, %v3306, 0.0
    %3311 = vadd.xlane.f32.xlu0 %v3310
    %v3312 = vpop.xlane.xlu0 %3311
    %v3313 = vmul.f32 %v3309, %v76
    %v3314 = vmul.f32 %v3312, %v76
    %v3315 = vsub.f32 %v3305, %v3313
    %v3316 = vsub.f32 %v3306, %v3314
    %v3317 = vmul.f32 %v3315, %v3315
    %v3318 = vmul.f32 %v3316, %v3316
    %v3319 = vsel %vm63, %v3317, 0.0
    %3320 = vadd.xlane.f32.xlu0 %v3319
    %v3321 = vpop.xlane.xlu0 %3320
    %v3322 = vsel %vm63, %v3318, 0.0
    %3323 = vadd.xlane.f32.xlu0 %v3322
    %v3324 = vpop.xlane.xlu0 %3323
    %v3325 = vmul.f32 %v3321, %v76
    %v3326 = vmul.f32 %v3324, %v76
    %v3327 = vadd.f32 %v3325, 1e-05
    %v3328 = vadd.f32 %v3326, 1e-05
    %v3329 = vrsqrt.pop %v3327
    %v3330 = vmul.f32 %v3329, %v3327
    %v3331 = vmul.f32 %v3330, %v3329
    %v3332 = vmul.f32 0.5, %v3331
    %v3333 = vsub.f32 1.5, %v3332
    %v3334 = vmul.f32 %v3329, %v3333
    %vm3335 = vweird.f32 %v3327
    %vm3336 = vweird.f32 %v3329
    %vm3337 = vmor %vm3335, %vm3336
    %v3338 = vsel %vm3337, %v3329, %v3334
    %v3339 = vrsqrt.pop %v3328
    %v3340 = vmul.f32 %v3339, %v3328
    %v3341 = vmul.f32 %v3340, %v3339
    %v3342 = vmul.f32 0.5, %v3341
    %v3343 = vsub.f32 1.5, %v3342
    %v3344 = vmul.f32 %v3339, %v3343
    %vm3345 = vweird.f32 %v3328
    %vm3346 = vweird.f32 %v3339
    %vm3347 = vmor %vm3345, %vm3346
    %v3348 = vsel %vm3347, %v3339, %v3344
    %v3349 = vmul.f32 %v3315, %v3338
    %v3350 = vmul.f32 %v3316, %v3348
    %v3351 = vperm.slane %v1814, 6
    %v3352 = vmul.f32 %v3349, %v3351
    %v3353 = vmul.f32 %v3350, %v3351
    %v3354 = vperm.slane %v1814, 7
    %v3355 = vadd.f32 %v3352, %v3354
    %v3356 = vadd.f32 %v3353, %v3354
    %s3357 = scalar_lea.vmem [#allocation2], 480
    %v3358 = vld [vmem:[%s3357] sm:$0xff]
    %v3359 = vld [vmem:[%s3357 + $0x8] sm:$0xff]
    %v3360 = vld [vmem:[%s3357 + $0x10] sm:$0xff]
    %v3361 = vld [vmem:[%s3357 + $0x18] sm:$0xff]
    %v3362 = vperm.slane %v1817, 6
    %v3364 = vsel %vm63, %v3355, 0
    %v3367 = vsel %vm63, %v3356, 0
    %3369 = vmatpush.msra.mxu0 0.0
    %3370 = vmatpush.msra.mxu0 0.0
    %3371 = vmatpush.msra.mxu0 0.0
    %3372 = vmatpush.msra.mxu0 0.0
    %3373 = vmatpush.msra.mxu0 0.0
    %3374 = vmatpush.msra.mxu0 0.0
    %3375 = vmatpush.msra.mxu0 0.0
    %3376 = vmatpush.msra.mxu0 0.0
    %3377 = vmatpush.msra.mxu0 0.0
    %3378 = vmatpush.msra.mxu0 0.0
    %3379 = vmatpush.msra.mxu0 0.0
    %3380 = vmatpush.msra.mxu0 0.0
    %3381 = vmatpush.msra.mxu0 %v3361
    %3382 = vmatpush.msra.mxu0 %v3360
    %3383 = vmatpush.msra.mxu0 %v3359
    %3384 = vmatpush.msra.mxu0 %v3358
    %3385 = vmatmul.f32.gmra.mxu0 %v3364
    %v3386 = vpop.f32.mrf.mxu0
    %v3387 = vadd.f32 %v3362, %v3386
    %3388 = vmatmul.f32.gmra.mxu0 %v3367
    %v3389 = vpop.f32.mrf.mxu0
    %v3390 = vadd.f32 %v3362, %v3389
    %3391 = vdwg.mxu0
    %v3392 = vxor.u32 %v3387, 2147483648
    %v3393 = vxor.u32 %v3390, 2147483648
    %v3394 = vmul.f32 %v3392, 1.442695
    %v3395 = vpow.pop %v3394
    %v3396 = vmul.f32 %v3393, 1.442695
    %v3397 = vpow.pop %v3396
    %v3398 = vadd.f32 %v3395, 1.0
    %v3399 = vadd.f32 %v3397, 1.0
    %v3400 = vrcp.pop %v3398
    %v3401 = vmul.f32 %v3398, %v3400
    %v3402 = vsub.f32 1.0, %v3401
    %v3403 = vmul.f32 %v3400, %v3402
    %v3404 = vadd.f32 %v3400, %v3403
    %vm3405 = vweird.f32 %v3398
    %vm3406 = vweird.f32 %v3400
    %vm3407 = vmor %vm3405, %vm3406
    %v3408 = vsel %vm3407, %v3400, %v3404
    %v3409 = vand.u32 2147483647, %v3398
    %vm3410 = vcmp.eq.f32.partialorder %v3409, 8.507059e+37
    %v3411 = vand.u32 %v3398, 2147483648
    %v3412 = vor.u32 1.1754944e-38, %v3411
    %v3413 = vsel %vm3410, %v3412, %v3408
    %v3414 = vmul.f32 1.0, %v3413
    %v3415 = vrcp.pop %v3399
    %v3416 = vmul.f32 %v3399, %v3415
    %v3417 = vsub.f32 1.0, %v3416
    %v3418 = vmul.f32 %v3415, %v3417
    %v3419 = vadd.f32 %v3415, %v3418
    %vm3420 = vweird.f32 %v3399
    %vm3421 = vweird.f32 %v3415
    %vm3422 = vmor %vm3420, %vm3421
    %v3423 = vsel %vm3422, %v3415, %v3419
    %v3424 = vand.u32 2147483647, %v3399
    %vm3425 = vcmp.eq.f32.partialorder %v3424, 8.507059e+37
    %v3426 = vand.u32 %v3399, 2147483648
    %v3427 = vor.u32 1.1754944e-38, %v3426
    %v3428 = vsel %vm3425, %v3427, %v3423
    %v3429 = vmul.f32 1.0, %v3428
    %v3430 = vmul.f32 %v3387, %v3414
    %v3431 = vmul.f32 %v3390, %v3429
    %s3432 = scalar_lea.vmem %s5, 192
    %v3433 = vld [vmem:[%s3432] sm:$0xff]
    %v3434 = vld [vmem:[%s3432 + $0x8] sm:$0xff]
    %v3435 = vld [vmem:[%s3432 + $0x10] sm:$0xff]
    %v3436 = vld [vmem:[%s3432 + $0x18] sm:$0xff]
    %v3437 = vld [vmem:[%s3432 + $0x20] sm:$0xff]
    %v3438 = vld [vmem:[%s3432 + $0x28] sm:$0xff]
    %v3439 = vld [vmem:[%s3432 + $0x30] sm:$0xff]
    %v3440 = vld [vmem:[%s3432 + $0x38] sm:$0xff]
    %v3441 = vperm.slane %v1815, 2
    %v3443 = vsel %vm578, %v3430, 0
    %v3446 = vsel %vm578, %v3431, 0
    %3448 = vmatpush.msra.mxu0 0.0
    %3449 = vmatpush.msra.mxu0 0.0
    %3450 = vmatpush.msra.mxu0 0.0
    %3451 = vmatpush.msra.mxu0 0.0
    %3452 = vmatpush.msra.mxu0 0.0
    %3453 = vmatpush.msra.mxu0 0.0
    %3454 = vmatpush.msra.mxu0 0.0
    %3455 = vmatpush.msra.mxu0 0.0
    %3456 = vmatpush.msra.mxu0 %v3440
    %3457 = vmatpush.msra.mxu0 %v3439
    %3458 = vmatpush.msra.mxu0 %v3438
    %3459 = vmatpush.msra.mxu0 %v3437
    %3460 = vmatpush.msra.mxu0 %v3436
    %3461 = vmatpush.msra.mxu0 %v3435
    %3462 = vmatpush.msra.mxu0 %v3434
    %3463 = vmatpush.msra.mxu0 %v3433
    %3464 = vmatmul.f32.gmra.mxu0 %v3443
    %v3465 = vpop.f32.mrf.mxu0
    %v3466 = vadd.f32 %v3441, %v3465
    %3467 = vmatmul.f32.gmra.mxu0 %v3446
    %v3468 = vpop.f32.mrf.mxu0
    %v3469 = vadd.f32 %v3441, %v3468
    %3470 = vdwg.mxu0
    %v3471 = vadd.f32 %v3466, %v3305
    %v3472 = vadd.f32 %v3469, %v3306
    %3473 = vst.msk [vmem:[#allocation5] sm:$0xff] %vm63, %v3471
    %3474 = vst.msk [vmem:[#allocation5 + $0x8] sm:$0xff] %vm63, %v3472
    // Predicated region
    $region54: #{tpu_custom_call.1} parent=1 // pred_check
      _
    $region55: #{tpu_custom_call.1} parent=1 // pred_check_branch
      %3476 = sbr.rel (0) target = $region57
    $region56: #{tpu_custom_call.1} parent=1 // pred_region
      %3478 = vsyncadd [#allocation4], 0
      %s3479 = sshll.u32 [#allocation5], 4
      %s3480 = int_to_ptr.vmem [resolvable:$true] %s3479
      %s3481 = sshll.u32 %s12, 4
      %s3482 = int_to_ptr.hbm [resolvable:$true] %s3481
      %3487 = dma.vmem_to_hbm [thread:$0]  %s3480, 256, %s3482, [#allocation4], 128, 128, 8
    $region57: #{tpu_custom_call.1} parent=1 // pred_fallthru
      _
    // Predicated region
    $region58: #{tpu_custom_call.1} parent=1 // pred_check
      _
    $region59: #{tpu_custom_call.1} parent=1 // pred_check_branch
      %3489 = sbr.rel (0) target = $region61
    $region60: #{tpu_custom_call.1} parent=1 // pred_region
      %3491 = dma.done [#allocation4], 256
    $region61: #{tpu_custom_call.1} parent=1 // pred_fallthru
      _
    %3492 = vsyncpa [#allocation3], 1
    %3493 = vsyncpa [#allocation4], 1

</llo_original>
